<compile_context>
chip_gen: v7x
topology: tpu7x:2x2x1
jax: 0.10.0
libtpu: 0.0.40
codegen_flags: <defaults>
</compile_context>

<pallas_src>
import functools

import jax
import jax.numpy as jnp
from jax.experimental import pallas as pl
from jax.experimental.pallas import tpu as pltpu


# ----------------------------------------------------------------------------
# Fused  (X @ W_folded) + shift [+ residual] [ReLU]  kernel
# ----------------------------------------------------------------------------

def _matmul_bn_act_kernel(*refs, relu, add_res):
    if add_res:
        x_ref, w_ref, shift_ref, res_ref, o_ref, acc_ref = refs
    else:
        x_ref, w_ref, shift_ref, o_ref, acc_ref = refs

    k = pl.program_id(2)

    @pl.when(k == 0)
    def _init():
        acc_ref[...] = jnp.zeros_like(acc_ref)

    # bf16 x bf16 -> f32 accumulate on the MXU.
    acc_ref[...] += jnp.dot(
        x_ref[...], w_ref[...], preferred_element_type=jnp.float32
    )

    @pl.when(k == pl.num_programs(2) - 1)
    def _finish():
        r = acc_ref[...] + shift_ref[...]
        if add_res:
            r = r + res_ref[...].astype(jnp.float32)
        if relu:
            r = jnp.maximum(r, 0.0)
        o_ref[...] = r.astype(o_ref.dtype)


def _round_up(a, b):
    return pl.cdiv(a, b) * b


@functools.lru_cache(maxsize=None)
def _vmem_limit_bytes():
    """Per-generation VMEM budget with headroom (v7x: ~48MiB, v5e/v6e: ~96MiB)."""
    cap = 64 * 1024 * 1024
    try:
        cap = int(pltpu.get_tpu_info().vmem_capacity_bytes)
    except Exception:
        pass
    return max(32 * 1024 * 1024, min(int(cap * 3 // 4), 96 * 1024 * 1024))


def _choose_tn(N, tm, budget):
    if N <= 1024:
        return N
    for cand in (1024, 512, 256, 128):
        if N % cand == 0:
            return cand
    return N


def _choose_tk(K, tm, tn, budget):
    """Prefer full-K (weight resident, single reduction step); never pad K."""
    def vmem_use(tk):
        x_t = tm * tk * 2          # bf16 activation tile
        w_t = tk * tn * 2          # bf16 weight tile
        o_t = tm * tn * 4          # output tile (<= f32)
        r_t = tm * tn * 4          # optional f32 residual tile
        acc = tm * tn * 4          # accumulator scratch
        return 2 * (x_t + w_t + o_t + r_t) + acc   # double-buffered pipeline

    if vmem_use(K) <= budget:
        return K
    for tk in (512, 256, 128):
        if K % tk == 0 and vmem_use(tk) <= budget:
            return tk
    return K


def fused_matmul_bn_act(x, w_folded, shift, *, relu, residual=None,
                        out_dtype=jnp.float32):
    """out = act((x @ w_folded) + shift [+ residual]).

    x: (M, K), w_folded: (K, N) (BN scale already folded in), shift: (N,) f32,
    residual: optional (M, N) f32. Matmul runs in bf16 with an f32 accumulator.
    """
    M, K = x.shape
    Kw, N = w_folded.shape
    assert K == Kw and shift.shape == (N,)

    x = x.astype(jnp.bfloat16)
    w = w_folded.astype(jnp.bfloat16)
    shift2 = shift.reshape(1, N).astype(jnp.float32)

    vmem_limit = _vmem_limit_bytes()
    budget = vmem_limit // 2

    # --- M tiling (parallel axis, >= 2 tiles so both TCs get work on v7x) ---
    tm = min(256, _round_up(pl.cdiv(M, 2), 8))
    m_steps = pl.cdiv(M, tm)

    # --- N tiling (parallel axis; full N for typical ResNet channel counts) ---
    tn = _choose_tn(N, tm, budget)
    n_steps = pl.cdiv(N, tn)

    # --- K tiling (reduction, last grid axis).  tk divides K: no K padding. ---
    tk = _choose_tk(K, tm, tn, budget)
    k_steps = K // tk

    add_res = residual is not None
    operands = [x, w, shift2]
    in_specs = [
        pl.BlockSpec((tm, tk), lambda i, j, k: (i, k)),   # activations (bf16)
        pl.BlockSpec((tk, tn), lambda i, j, k: (k, j)),   # folded weights (bf16)
        pl.BlockSpec((1, tn), lambda i, j, k: (0, j)),    # folded BN shift (f32)
    ]
    if add_res:
        operands.append(residual.astype(jnp.float32))
        in_specs.append(pl.BlockSpec((tm, tn), lambda i, j, k: (i, j)))

    out = pl.pallas_call(
        functools.partial(_matmul_bn_act_kernel, relu=relu, add_res=add_res),
        out_shape=jax.ShapeDtypeStruct((M, N), out_dtype),
        grid_spec=pltpu.PrefetchScalarGridSpec(
            num_scalar_prefetch=0,
            grid=(m_steps, n_steps, k_steps),
            in_specs=in_specs,
            out_specs=pl.BlockSpec((tm, tn), lambda i, j, k: (i, j)),
            scratch_shapes=[pltpu.VMEM((tm, tn), jnp.float32)],
        ),
        compiler_params=pltpu.CompilerParams(
            dimension_semantics=("parallel", "parallel", "arbitrary"),
            vmem_limit_bytes=vmem_limit,
        ),
    )(*operands)
    return out


# ----------------------------------------------------------------------------
# Bottleneck forward (Pallas)
# ----------------------------------------------------------------------------

_BN_EPS = 1e-5


def _fold_bn(bn, eps=_BN_EPS):
    gamma, beta, mean, var = bn
    inv = gamma * jax.lax.rsqrt(var + eps)
    return inv, beta - mean * inv


def _im2col_3x3(x_nhwc, stride):
    """3x3, padding=1, stride=s patch extraction -> (B*Ho*Wo, 9*C) (dtype-preserving)."""
    B, H, W, C = x_nhwc.shape
    Ho = (H - 1) // stride + 1
    Wo = (W - 1) // stride + 1
    xp = jnp.pad(x_nhwc, ((0, 0), (1, 1), (1, 1), (0, 0)))
    taps = []
    for ky in range(3):
        for kx in range(3):
            taps.append(
                xp[:,
                   ky: ky + stride * (Ho - 1) + 1: stride,
                   kx: kx + stride * (Wo - 1) + 1: stride,
                   :])
    patches = jnp.concatenate(taps, axis=-1)          # (B, Ho, Wo, 9*C)
    return patches.reshape(B * Ho * Wo, 9 * C), Ho, Wo


@functools.partial(jax.jit, static_argnames=("stride",))
def bottleneck_forward(x_nchw, params, *, stride=1):
    """Pallas implementation of Bottleneck.forward (inference-mode BN)."""
    B, Cin, H, W = x_nchw.shape
    planes = params["w1"].shape[0]
    expansion = 4

    x_nhwc = jnp.transpose(x_nchw, (0, 2, 3, 1))
    x2d = x_nhwc.reshape(B * H * W, Cin)

    # conv_1 (1x1) + bn_1 + relu   -- one fused kernel (BN scale folded into W)
    s1, t1 = _fold_bn(params["bn1"])
    w1 = jnp.transpose(params["w1"][:, :, 0, 0]) * s1[None, :]    # (Cin, planes)
    h = fused_matmul_bn_act(x2d, w1, t1, relu=True, out_dtype=jnp.bfloat16)

    # conv_2 (3x3, stride, padding=1) + bn_2 + relu   -- bf16 im2col + fused kernel
    patches, Ho, Wo = _im2col_3x3(h.reshape(B, H, W, planes), stride)
    s2, t2 = _fold_bn(params["bn2"])
    w2 = (jnp.transpose(params["w2"], (2, 3, 1, 0)).reshape(9 * planes, planes)
          * s2[None, :])
    h = fused_matmul_bn_act(patches, w2, t2, relu=True, out_dtype=jnp.bfloat16)

    # residual branch
    if "wd" in params:   # downsample = 1x1 stride-s conv + BN (same fused kernel)
        xd = x_nhwc[:, ::stride, ::stride, :].reshape(B * Ho * Wo, Cin)
        sd, td = _fold_bn(params["bnd"])
        wd = jnp.transpose(params["wd"][:, :, 0, 0]) * sd[None, :]
        residual = fused_matmul_bn_act(xd, wd, td, relu=False,
                                       out_dtype=jnp.float32)
    else:
        assert stride == 1 and Cin == planes * expansion
        residual = x2d

    # conv_3 (1x1) + bn_3 + residual add + relu, all fused in the epilogue
    s3, t3 = _fold_bn(params["bn3"])
    w3 = jnp.transpose(params["w3"][:, :, 0, 0]) * s3[None, :]
    out2d = fused_matmul_bn_act(h, w3, t3, relu=True, residual=residual,
                                out_dtype=jnp.float32)

    out = out2d.reshape(B, Ho, Wo, planes * expansion)
    return jnp.transpose(out, (0, 3, 1, 2))                       # back to NCHW


# ----------------------------------------------------------------------------
# Pure-JAX reference (XLA convs, inference-mode BN, f32)
# ----------------------------------------------------------------------------

def _ref_bottleneck(x, params, *, stride):
    hp = jax.lax.Precision.HIGHEST

    def conv(v, w, s, pad):
        return jax.lax.conv_general_dilated(
            v, w, window_strides=(s, s), padding=[(pad, pad), (pad, pad)],
            dimension_numbers=("NCHW", "OIHW", "NCHW"), precision=hp)

    def bn(v, p):
        g, b, m, var = (a.reshape(1, -1, 1, 1) for a in p)
        return (v - m) / jnp.sqrt(var + _BN_EPS) * g + b

    out = jax.nn.relu(bn(conv(x, params["w1"], 1, 0), params["bn1"]))
    out = jax.nn.relu(bn(conv(out, params["w2"], stride, 1), params["bn2"]))
    out = bn(conv(out, params["w3"], 1, 0), params["bn3"])
    if "wd" in params:
        residual = bn(conv(x, params["wd"], stride, 0), params["bnd"])
    else:
        residual = x
    return jax.nn.relu(out + residual)


# ----------------------------------------------------------------------------
# Parameter construction + test
# ----------------------------------------------------------------------------

def _make_bn(key, c):
    k1, k2, k3, k4 = jax.random.split(key, 4)
    gamma = jax.random.uniform(k1, (c,), jnp.float32, 0.5, 1.5)
    beta = jax.random.uniform(k2, (c,), jnp.float32, -0.5, 0.5)
    mean = 0.1 * jax.random.normal(k3, (c,), jnp.float32)
    var = jax.random.uniform(k4, (c,), jnp.float32, 0.5, 1.5)
    return (gamma, beta, mean, var)


def _conv_w(key, cout, cin, kh, kw):
    bound = 1.0 / (cin * kh * kw) ** 0.5
    return jax.random.uniform(key, (cout, cin, kh, kw), jnp.float32, -bound, bound)


def make_bottleneck_params(key, inplanes, planes, *, downsample):
    ks = jax.random.split(key, 8)
    p = {
        "w1": _conv_w(ks[0], planes, inplanes, 1, 1), "bn1": _make_bn(ks[1], planes),
        "w2": _conv_w(ks[2], planes, planes, 3, 3),   "bn2": _make_bn(ks[3], planes),
        "w3": _conv_w(ks[4], planes * 4, planes, 1, 1), "bn3": _make_bn(ks[5], planes * 4),
    }
    if downsample:
        p["wd"] = _conv_w(ks[6], planes * 4, inplanes, 1, 1)
        p["bnd"] = _make_bn(ks[7], planes * 4)
    return p


if __name__ == "__main__":
    key = jax.random.PRNGKey(0)
    kx, kp1, kp2 = jax.random.split(key, 3)

    # Realistic (lane-dense) channel counts, small spatial extent.
    B, inplanes, H, W = 2, 256, 16, 16
    planes = 64                                  # expansion 4 -> output channels 256
    x = jax.random.normal(kx, (B, inplanes, H, W), dtype=jnp.float32)

    # bf16-matmul tolerance (accumulation in f32).
    TOL = 1e-1

    # Case 1: stride=1, identity residual (inplanes == planes * expansion)
    params1 = make_bottleneck_params(kp1, inplanes, planes, downsample=False)
    out1 = jax.block_until_ready(bottleneck_forward(x, params1, stride=1))
    ref1 = _ref_bottleneck(x, params1, stride=1)
    assert out1.shape == (B, planes * 4, H, W), out1.shape
    err1 = float(jnp.max(jnp.abs(out1 - ref1)))
    assert err1 < TOL, f"stride=1 mismatch, max abs err {err1}"

    # Case 2: stride=2 with downsample branch
    params2 = make_bottleneck_params(kp2, inplanes, planes, downsample=True)
    out2 = jax.block_until_ready(bottleneck_forward(x, params2, stride=2))
    ref2 = _ref_bottleneck(x, params2, stride=2)
    assert out2.shape == (B, planes * 4, H // 2, W // 2), out2.shape
    err2 = float(jnp.max(jnp.abs(out2 - ref2)))
    assert err2 < TOL, f"stride=2 mismatch, max abs err {err2}"

    print("KERNEL_OK")
</pallas_src>

<mosaic_0001>
module attributes {stable_mosaic.version = 11 : i64} {
  func.func @_matmul_bn_act_kernel(%arg0: i32, %arg1: i32, %arg2: i32, %arg3: memref<256x256xbf16, #tpu.memory_space<vmem>>, %arg4: memref<256x64xbf16, #tpu.memory_space<vmem>>, %arg5: memref<1x64xf32, #tpu.memory_space<vmem>>, %arg6: memref<256x64xbf16, #tpu.memory_space<vmem>>, %arg7: memref<256x64xf32, #tpu.memory_space<vmem>>) attributes {dimension_semantics = [#tpu.dimension_semantics<parallel>, #tpu.dimension_semantics<parallel>, #tpu.dimension_semantics<arbitrary>], iteration_bounds = array<i64: 2, 1, 1>, scalar_prefetch = 0 : i64, scratch_operands = 1 : i64, tpu.core_type = #tpu.core_type<tc>, window_params = [{transform_indices = @transform_0, window_bounds = array<i64: 256, 256>}, {transform_indices = @transform_1, window_bounds = array<i64: 256, 64>}, {transform_indices = @transform_2, window_bounds = array<i64: 1, 64>}, {transform_indices = @transform_3, window_bounds = array<i64: 256, 64>}]} {
    %c0_i32 = arith.constant 0 : i32
    %0 = arith.cmpi eq, %arg2, %c0_i32 : i32
    %1 = arith.extui %0 : i1 to i32
    %c0_i32_0 = arith.constant 0 : i32
    %2 = arith.cmpi ne, %1, %c0_i32_0 : i32
    scf.if %2 {
      %cst_10 = arith.constant 0.000000e+00 : f32
      %12 = vector.broadcast %cst_10 : f32 to vector<256x64xf32>
      %c0_11 = arith.constant 0 : index
      %c0_12 = arith.constant 0 : index
      %13 = vector.load %arg7[%c0_11, %c0_12] : memref<256x64xf32, #tpu.memory_space<vmem>>, vector<256x64xf32>
      tpu.vector_store %arg7[%c0_11, %c0_12], %12 {strides = array<i32>} : memref<256x64xf32, #tpu.memory_space<vmem>>, vector<256x64xf32>,
    } else {
    }
    %c0 = arith.constant 0 : index
    %c0_1 = arith.constant 0 : index
    %3 = vector.load %arg7[%c0, %c0_1] : memref<256x64xf32, #tpu.memory_space<vmem>>, vector<256x64xf32>
    %c0_2 = arith.constant 0 : index
    %c0_3 = arith.constant 0 : index
    %4 = vector.load %arg3[%c0_2, %c0_3] : memref<256x256xbf16, #tpu.memory_space<vmem>>, vector<256x256xbf16>
    %c0_4 = arith.constant 0 : index
    %c0_5 = arith.constant 0 : index
    %5 = vector.load %arg4[%c0_4, %c0_5] : memref<256x64xbf16, #tpu.memory_space<vmem>>, vector<256x64xbf16>
    %cst = arith.constant dense<0.000000e+00> : vector<256x64xf32>
    %6 = tpu.matmul %4, %5, %cst {dimension_numbers = #tpu.dot_dimension_numbers<[1], [0], [0], [1], [0, 0, 1, 1], [], []>} : vector<256x256xbf16>, vector<256x64xbf16>, vector<256x64xf32> -> vector<256x64xf32>
    %7 = arith.addf %3, %6 : vector<256x64xf32>
    %c0_6 = arith.constant 0 : index
    %c0_7 = arith.constant 0 : index
    %8 = vector.load %arg7[%c0_6, %c0_7] : memref<256x64xf32, #tpu.memory_space<vmem>>, vector<256x64xf32>
    tpu.vector_store %arg7[%c0_6, %c0_7], %7 {strides = array<i32>} : memref<256x64xf32, #tpu.memory_space<vmem>>, vector<256x64xf32>,
    %c0_i32_8 = arith.constant 0 : i32
    %9 = arith.cmpi eq, %arg2, %c0_i32_8 : i32
    %10 = arith.extui %9 : i1 to i32
    %c0_i32_9 = arith.constant 0 : i32
    %11 = arith.cmpi ne, %10, %c0_i32_9 : i32
    scf.if %11 {
      %c0_10 = arith.constant 0 : index
      %c0_11 = arith.constant 0 : index
      %12 = vector.load %arg7[%c0_10, %c0_11] : memref<256x64xf32, #tpu.memory_space<vmem>>, vector<256x64xf32>
      %c0_12 = arith.constant 0 : index
      %c0_13 = arith.constant 0 : index
      %13 = vector.load %arg5[%c0_12, %c0_13] : memref<1x64xf32, #tpu.memory_space<vmem>>, vector<1x64xf32>
      %14 = vector.broadcast %13 : vector<1x64xf32> to vector<256x64xf32>
      %15 = arith.addf %12, %14 : vector<256x64xf32>
      %cst_14 = arith.constant 0.000000e+00 : f32
      %16 = vector.broadcast %cst_14 : f32 to vector<256x64xf32>
      %17 = arith.maximumf %15, %16 : vector<256x64xf32>
      %18 = arith.truncf %17 : vector<256x64xf32> to vector<256x64xbf16>
      %c0_15 = arith.constant 0 : index
      %c0_16 = arith.constant 0 : index
      %19 = vector.load %arg6[%c0_15, %c0_16] : memref<256x64xbf16, #tpu.memory_space<vmem>>, vector<256x64xbf16>
      tpu.vector_store %arg6[%c0_15, %c0_16], %18 {strides = array<i32>} : memref<256x64xbf16, #tpu.memory_space<vmem>>, vector<256x64xbf16>,
    } else {
    }
    return
  }
  func.func @transform_0(%arg0: i32, %arg1: i32, %arg2: i32) -> (i32, i32) {
    %c0_i32 = arith.constant 0 : i32
    return %arg0, %arg2 : i32, i32
  }
  func.func @transform_1(%arg0: i32, %arg1: i32, %arg2: i32) -> (i32, i32) {
    %c0_i32 = arith.constant 0 : i32
    return %arg2, %arg1 : i32, i32
  }
  func.func @transform_2(%arg0: i32, %arg1: i32, %arg2: i32) -> (i32, i32) {
    %c0_i32 = arith.constant 0 : i32
    %c0_i32_0 = arith.constant 0 : i32
    return %c0_i32, %arg1 : i32, i32
  }
  func.func @transform_3(%arg0: i32, %arg1: i32, %arg2: i32) -> (i32, i32) {
    %c0_i32 = arith.constant 0 : i32
    return %arg0, %arg1 : i32, i32
  }
}

module attributes {stable_mosaic.version = 11 : i64} {
  func.func @_matmul_bn_act_kernel(%arg0: i32, %arg1: i32, %arg2: i32, %arg3: memref<256x576xbf16, #tpu.memory_space<vmem>>, %arg4: memref<576x64xbf16, #tpu.memory_space<vmem>>, %arg5: memref<1x64xf32, #tpu.memory_space<vmem>>, %arg6: memref<256x64xbf16, #tpu.memory_space<vmem>>, %arg7: memref<256x64xf32, #tpu.memory_space<vmem>>) attributes {dimension_semantics = [#tpu.dimension_semantics<parallel>, #tpu.dimension_semantics<parallel>, #tpu.dimension_semantics<arbitrary>], iteration_bounds = array<i64: 2, 1, 1>, scalar_prefetch = 0 : i64, scratch_operands = 1 : i64, tpu.core_type = #tpu.core_type<tc>, window_params = [{transform_indices = @transform_0, window_bounds = array<i64: 256, 576>}, {transform_indices = @transform_1, window_bounds = array<i64: 576, 64>}, {transform_indices = @transform_2, window_bounds = array<i64: 1, 64>}, {transform_indices = @transform_3, window_bounds = array<i64: 256, 64>}]} {
    %c0_i32 = arith.constant 0 : i32
    %0 = arith.cmpi eq, %arg2, %c0_i32 : i32
    %1 = arith.extui %0 : i1 to i32
    %c0_i32_0 = arith.constant 0 : i32
    %2 = arith.cmpi ne, %1, %c0_i32_0 : i32
    scf.if %2 {
      %cst_10 = arith.constant 0.000000e+00 : f32
      %12 = vector.broadcast %cst_10 : f32 to vector<256x64xf32>
      %c0_11 = arith.constant 0 : index
      %c0_12 = arith.constant 0 : index
      %13 = vector.load %arg7[%c0_11, %c0_12] : memref<256x64xf32, #tpu.memory_space<vmem>>, vector<256x64xf32>
      tpu.vector_store %arg7[%c0_11, %c0_12], %12 {strides = array<i32>} : memref<256x64xf32, #tpu.memory_space<vmem>>, vector<256x64xf32>,
    } else {
    }
    %c0 = arith.constant 0 : index
    %c0_1 = arith.constant 0 : index
    %3 = vector.load %arg7[%c0, %c0_1] : memref<256x64xf32, #tpu.memory_space<vmem>>, vector<256x64xf32>
    %c0_2 = arith.constant 0 : index
    %c0_3 = arith.constant 0 : index
    %4 = vector.load %arg3[%c0_2, %c0_3] : memref<256x576xbf16, #tpu.memory_space<vmem>>, vector<256x576xbf16>
    %c0_4 = arith.constant 0 : index
    %c0_5 = arith.constant 0 : index
    %5 = vector.load %arg4[%c0_4, %c0_5] : memref<576x64xbf16, #tpu.memory_space<vmem>>, vector<576x64xbf16>
    %cst = arith.constant dense<0.000000e+00> : vector<256x64xf32>
    %6 = tpu.matmul %4, %5, %cst {dimension_numbers = #tpu.dot_dimension_numbers<[1], [0], [0], [1], [0, 0, 1, 1], [], []>} : vector<256x576xbf16>, vector<576x64xbf16>, vector<256x64xf32> -> vector<256x64xf32>
    %7 = arith.addf %3, %6 : vector<256x64xf32>
    %c0_6 = arith.constant 0 : index
    %c0_7 = arith.constant 0 : index
    %8 = vector.load %arg7[%c0_6, %c0_7] : memref<256x64xf32, #tpu.memory_space<vmem>>, vector<256x64xf32>
    tpu.vector_store %arg7[%c0_6, %c0_7], %7 {strides = array<i32>} : memref<256x64xf32, #tpu.memory_space<vmem>>, vector<256x64xf32>,
    %c0_i32_8 = arith.constant 0 : i32
    %9 = arith.cmpi eq, %arg2, %c0_i32_8 : i32
    %10 = arith.extui %9 : i1 to i32
    %c0_i32_9 = arith.constant 0 : i32
    %11 = arith.cmpi ne, %10, %c0_i32_9 : i32
    scf.if %11 {
      %c0_10 = arith.constant 0 : index
      %c0_11 = arith.constant 0 : index
      %12 = vector.load %arg7[%c0_10, %c0_11] : memref<256x64xf32, #tpu.memory_space<vmem>>, vector<256x64xf32>
      %c0_12 = arith.constant 0 : index
      %c0_13 = arith.constant 0 : index
      %13 = vector.load %arg5[%c0_12, %c0_13] : memref<1x64xf32, #tpu.memory_space<vmem>>, vector<1x64xf32>
      %14 = vector.broadcast %13 : vector<1x64xf32> to vector<256x64xf32>
      %15 = arith.addf %12, %14 : vector<256x64xf32>
      %cst_14 = arith.constant 0.000000e+00 : f32
      %16 = vector.broadcast %cst_14 : f32 to vector<256x64xf32>
      %17 = arith.maximumf %15, %16 : vector<256x64xf32>
      %18 = arith.truncf %17 : vector<256x64xf32> to vector<256x64xbf16>
      %c0_15 = arith.constant 0 : index
      %c0_16 = arith.constant 0 : index
      %19 = vector.load %arg6[%c0_15, %c0_16] : memref<256x64xbf16, #tpu.memory_space<vmem>>, vector<256x64xbf16>
      tpu.vector_store %arg6[%c0_15, %c0_16], %18 {strides = array<i32>} : memref<256x64xbf16, #tpu.memory_space<vmem>>, vector<256x64xbf16>,
    } else {
    }
    return
  }
  func.func @transform_0(%arg0: i32, %arg1: i32, %arg2: i32) -> (i32, i32) {
    %c0_i32 = arith.constant 0 : i32
    return %arg0, %arg2 : i32, i32
  }
  func.func @transform_1(%arg0: i32, %arg1: i32, %arg2: i32) -> (i32, i32) {
    %c0_i32 = arith.constant 0 : i32
    return %arg2, %arg1 : i32, i32
  }
  func.func @transform_2(%arg0: i32, %arg1: i32, %arg2: i32) -> (i32, i32) {
    %c0_i32 = arith.constant 0 : i32
    %c0_i32_0 = arith.constant 0 : i32
    return %c0_i32, %arg1 : i32, i32
  }
  func.func @transform_3(%arg0: i32, %arg1: i32, %arg2: i32) -> (i32, i32) {
    %c0_i32 = arith.constant 0 : i32
    return %arg0, %arg1 : i32, i32
  }
}

module attributes {stable_mosaic.version = 11 : i64} {
  func.func @_matmul_bn_act_kernel(%arg0: i32, %arg1: i32, %arg2: i32, %arg3: memref<256x64xbf16, #tpu.memory_space<vmem>>, %arg4: memref<64x256xbf16, #tpu.memory_space<vmem>>, %arg5: memref<1x256xf32, #tpu.memory_space<vmem>>, %arg6: memref<256x256xf32, #tpu.memory_space<vmem>>, %arg7: memref<256x256xf32, #tpu.memory_space<vmem>>, %arg8: memref<256x256xf32, #tpu.memory_space<vmem>>) attributes {dimension_semantics = [#tpu.dimension_semantics<parallel>, #tpu.dimension_semantics<parallel>, #tpu.dimension_semantics<arbitrary>], iteration_bounds = array<i64: 2, 1, 1>, scalar_prefetch = 0 : i64, scratch_operands = 1 : i64, tpu.core_type = #tpu.core_type<tc>, window_params = [{transform_indices = @transform_0, window_bounds = array<i64: 256, 64>}, {transform_indices = @transform_1, window_bounds = array<i64: 64, 256>}, {transform_indices = @transform_2, window_bounds = array<i64: 1, 256>}, {transform_indices = @transform_3, window_bounds = array<i64: 256, 256>}, {transform_indices = @transform_4, window_bounds = array<i64: 256, 256>}]} {
    %c0_i32 = arith.constant 0 : i32
    %0 = arith.cmpi eq, %arg2, %c0_i32 : i32
    %1 = arith.extui %0 : i1 to i32
    %c0_i32_0 = arith.constant 0 : i32
    %2 = arith.cmpi ne, %1, %c0_i32_0 : i32
    scf.if %2 {
      %cst_10 = arith.constant 0.000000e+00 : f32
      %12 = vector.broadcast %cst_10 : f32 to vector<256x256xf32>
      %c0_11 = arith.constant 0 : index
      %c0_12 = arith.constant 0 : index
      %13 = vector.load %arg8[%c0_11, %c0_12] : memref<256x256xf32, #tpu.memory_space<vmem>>, vector<256x256xf32>
      tpu.vector_store %arg8[%c0_11, %c0_12], %12 {strides = array<i32>} : memref<256x256xf32, #tpu.memory_space<vmem>>, vector<256x256xf32>,
    } else {
    }
    %c0 = arith.constant 0 : index
    %c0_1 = arith.constant 0 : index
    %3 = vector.load %arg8[%c0, %c0_1] : memref<256x256xf32, #tpu.memory_space<vmem>>, vector<256x256xf32>
    %c0_2 = arith.constant 0 : index
    %c0_3 = arith.constant 0 : index
    %4 = vector.load %arg3[%c0_2, %c0_3] : memref<256x64xbf16, #tpu.memory_space<vmem>>, vector<256x64xbf16>
    %c0_4 = arith.constant 0 : index
    %c0_5 = arith.constant 0 : index
    %5 = vector.load %arg4[%c0_4, %c0_5] : memref<64x256xbf16, #tpu.memory_space<vmem>>, vector<64x256xbf16>
    %cst = arith.constant dense<0.000000e+00> : vector<256x256xf32>
    %6 = tpu.matmul %4, %5, %cst {dimension_numbers = #tpu.dot_dimension_numbers<[1], [0], [0], [1], [0, 0, 1, 1], [], []>} : vector<256x64xbf16>, vector<64x256xbf16>, vector<256x256xf32> -> vector<256x256xf32>
    %7 = arith.addf %3, %6 : vector<256x256xf32>
    %c0_6 = arith.constant 0 : index
    %c0_7 = arith.constant 0 : index
    %8 = vector.load %arg8[%c0_6, %c0_7] : memref<256x256xf32, #tpu.memory_space<vmem>>, vector<256x256xf32>
    tpu.vector_store %arg8[%c0_6, %c0_7], %7 {strides = array<i32>} : memref<256x256xf32, #tpu.memory_space<vmem>>, vector<256x256xf32>,
    %c0_i32_8 = arith.constant 0 : i32
    %9 = arith.cmpi eq, %arg2, %c0_i32_8 : i32
    %10 = arith.extui %9 : i1 to i32
    %c0_i32_9 = arith.constant 0 : i32
    %11 = arith.cmpi ne, %10, %c0_i32_9 : i32
    scf.if %11 {
      %c0_10 = arith.constant 0 : index
      %c0_11 = arith.constant 0 : index
      %12 = vector.load %arg8[%c0_10, %c0_11] : memref<256x256xf32, #tpu.memory_space<vmem>>, vector<256x256xf32>
      %c0_12 = arith.constant 0 : index
      %c0_13 = arith.constant 0 : index
      %13 = vector.load %arg5[%c0_12, %c0_13] : memref<1x256xf32, #tpu.memory_space<vmem>>, vector<1x256xf32>
      %14 = vector.broadcast %13 : vector<1x256xf32> to vector<256x256xf32>
      %15 = arith.addf %12, %14 : vector<256x256xf32>
      %c0_14 = arith.constant 0 : index
      %c0_15 = arith.constant 0 : index
      %16 = vector.load %arg6[%c0_14, %c0_15] : memref<256x256xf32, #tpu.memory_space<vmem>>, vector<256x256xf32>
      %17 = arith.addf %15, %16 : vector<256x256xf32>
      %cst_16 = arith.constant 0.000000e+00 : f32
      %18 = vector.broadcast %cst_16 : f32 to vector<256x256xf32>
      %19 = arith.maximumf %17, %18 : vector<256x256xf32>
      %c0_17 = arith.constant 0 : index
      %c0_18 = arith.constant 0 : index
      %20 = vector.load %arg7[%c0_17, %c0_18] : memref<256x256xf32, #tpu.memory_space<vmem>>, vector<256x256xf32>
      tpu.vector_store %arg7[%c0_17, %c0_18], %19 {strides = array<i32>} : memref<256x256xf32, #tpu.memory_space<vmem>>, vector<256x256xf32>,
    } else {
    }
    return
  }
  func.func @transform_0(%arg0: i32, %arg1: i32, %arg2: i32) -> (i32, i32) {
    %c0_i32 = arith.constant 0 : i32
    return %arg0, %arg2 : i32, i32
  }
  func.func @transform_1(%arg0: i32, %arg1: i32, %arg2: i32) -> (i32, i32) {
    %c0_i32 = arith.constant 0 : i32
    return %arg2, %arg1 : i32, i32
  }
  func.func @transform_2(%arg0: i32, %arg1: i32, %arg2: i32) -> (i32, i32) {
    %c0_i32 = arith.constant 0 : i32
    %c0_i32_0 = arith.constant 0 : i32
    return %c0_i32, %arg1 : i32, i32
  }
  func.func @transform_3(%arg0: i32, %arg1: i32, %arg2: i32) -> (i32, i32) {
    %c0_i32 = arith.constant 0 : i32
    return %arg0, %arg1 : i32, i32
  }
  func.func @transform_4(%arg0: i32, %arg1: i32, %arg2: i32) -> (i32, i32) {
    %c0_i32 = arith.constant 0 : i32
    return %arg0, %arg1 : i32, i32
  }
}

</mosaic_0001>

<llo_original>
// kernel: bottleneck_forward.3
$region0: #{bottleneck_forward.3}
  #allocation0 [shape = 'u32[]', space=smem, size = 0x4, offset = 0x4, fixed_abs, tag = 'smem constant byte address 0x4 - core index']
  #allocation1 [shape = 'u32[144,128]{1,0:T(1,128)}', space=vmem, size = 0x12000, scoped, tag = 'internal scratch']
  #allocation2 [shape = 'f32[256,64]{1,0:T(8,128)}', space=vmem, size = 0x20000, scoped, tag = 'scratch operand']
  %s0 = inlined_call_operand.vmem [shape: bf16[512,256], index: 0, kind: input, shape index: {}]
  %s1 = inlined_call_operand.vmem [shape: bf16[256,64], index: 1, kind: input, shape index: {}]
  %s2 = inlined_call_operand.vmem [shape: f32[1,64], index: 2, kind: input, shape index: {}]
  %s3 = inlined_call_operand.vmem [shape: bf16[512,64], index: 3, kind: output, shape index: {}]
  %s4 = sld [smem:[#allocation0]]
  $region53: #{bottleneck_forward.3} parent=0
    _
  %s6 = ssub.s32 1, %s4
  %s7 = scalar_select 0, %s6, %s4
  loop: start=0, step=1, limit=4
  $region2: #{bottleneck_forward.3} parent=0 // loop_pre_header
    _
  $region3: #{bottleneck_forward.3} parent=0 // loop_header
    %s9 = sphi 0, %s13
    %p10 = scmp.ge.s32.totalorder %s9, 4
    %s16 = sphi 0, %s35
    %s17 = sphi 0, %s31
    %s18 = sphi 0, %s27
    %s19 = sphi 0, %s16
    %s20 = sphi 0, %s17
    %s21 = sphi 0, %s18
    %s22 = sphi 0, %s19
    %s23 = sphi 0, %s20
    %s24 = sphi 0, %s21
    %s40 = sphi 0, %s42
    %s43 = sphi 0, %s40
    %s44 = sphi 0, %s43
    %s60 = sphi 0, %s44
    %s68 = sphi 0, %s70
    %s71 = sphi 0, %s68
    %s72 = sphi 0, %s71
    %s88 = sphi 0, %s72
    %s94 = sphi 0, %s96
    %s97 = sphi 0, %s94
    %s98 = sphi 0, %s97
    %s114 = sphi 0, %s98
    %s122 = sphi 0, %s124
    %s125 = sphi 0, %s122
    %s126 = sphi 0, %s125
    %s142 = sphi 0, %s126
  $region4: #{bottleneck_forward.3} parent=0 // loop_header_branch
    %12 = sbr.rel (%p10) target = $region8
  $region5: #{bottleneck_forward.3} parent=0 // loop_body
    %s14 = ssub.s32 %s9, 1
    %s15 = ssub.s32 %s9, 2
    %s25 = sadd.s32 1, %s18
    %p26 = scmp.ge.s32.totalorder %s25, 1
    %s27 = scalar_select %p26, 0, %s25
    %s28 = sadd.s32 1, %s17
    %s29 = scalar_select %p26, %s28, %s17
    %p30 = scmp.ge.s32.totalorder %s29, 1
    %s31 = scalar_select %p30, 0, %s29
    %s32 = sadd.s32 1, %s16
    %s33 = scalar_select %p30, %s32, %s16
    %p34 = scmp.ge.s32.totalorder %s33, 2
    %s35 = scalar_select %p34, 0, %s33
    %s36 = ssub.s32 %s16, %s35
    %s37 = ssub.s32 %s18, %s27
    %s38 = sor.u32 %s36, %s37
    %p39 = scmp.eq.s32.totalorder %s38, 0
    %s41 = sadd.s32 %s40, 1
    %s42 = scalar_select %p39, %s40, %s41
    %p45 = pneg %p39
    %p46 = scmp.eq.s32.totalorder %s9, 1
    %p47 = por %p45, %p46
    %p48 = scmp.ne.s32.totalorder %s40, %s43
    %p49 = scmp.eq.s32.totalorder %s9, 0
    %p50 = por %p48, %p49
    %p51 = scmp.ne.s32.totalorder %s40, %s43
    %p52 = scmp.eq.s32.totalorder %s14, 1
    %p53 = por %p51, %p52
    %p54 = scmp.ne.s32.totalorder %s43, %s44
    %p55 = scmp.eq.s32.totalorder %s14, 0
    %p56 = por %p54, %p55
    %p57 = scmp.ne.s32.totalorder %s43, %s44
    %p58 = scmp.eq.s32.totalorder %s15, 1
    %p59 = por %p57, %p58
    %p61 = scmp.ne.s32.totalorder %s44, %s60
    %p62 = scmp.eq.s32.totalorder %s15, 0
    %p63 = por %p61, %p62
    %s64 = ssub.s32 %s18, %s27
    %s65 = ssub.s32 %s17, %s31
    %s66 = sor.u32 %s64, %s65
    %p67 = scmp.eq.s32.totalorder %s66, 0
    %s69 = sadd.s32 %s68, 1
    %s70 = scalar_select %p67, %s68, %s69
    %p73 = pneg %p67
    %p74 = scmp.eq.s32.totalorder %s9, 1
    %p75 = por %p73, %p74
    %p76 = scmp.ne.s32.totalorder %s68, %s71
    %p77 = scmp.eq.s32.totalorder %s9, 0
    %p78 = por %p76, %p77
    %p79 = scmp.ne.s32.totalorder %s68, %s71
    %p80 = scmp.eq.s32.totalorder %s14, 1
    %p81 = por %p79, %p80
    %p82 = scmp.ne.s32.totalorder %s71, %s72
    %p83 = scmp.eq.s32.totalorder %s14, 0
    %p84 = por %p82, %p83
    %p85 = scmp.ne.s32.totalorder %s71, %s72
    %p86 = scmp.eq.s32.totalorder %s15, 1
    %p87 = por %p85, %p86
    %p89 = scmp.ne.s32.totalorder %s72, %s88
    %p90 = scmp.eq.s32.totalorder %s15, 0
    %p91 = por %p89, %p90
    %s92 = ssub.s32 %s17, %s31
    %p93 = scmp.eq.s32.totalorder %s92, 0
    %s95 = sadd.s32 %s94, 1
    %s96 = scalar_select %p93, %s94, %s95
    %p99 = pneg %p93
    %p100 = scmp.eq.s32.totalorder %s9, 1
    %p101 = por %p99, %p100
    %p102 = scmp.ne.s32.totalorder %s94, %s97
    %p103 = scmp.eq.s32.totalorder %s9, 0
    %p104 = por %p102, %p103
    %p105 = scmp.ne.s32.totalorder %s94, %s97
    %p106 = scmp.eq.s32.totalorder %s14, 1
    %p107 = por %p105, %p106
    %p108 = scmp.ne.s32.totalorder %s97, %s98
    %p109 = scmp.eq.s32.totalorder %s14, 0
    %p110 = por %p108, %p109
    %p111 = scmp.ne.s32.totalorder %s97, %s98
    %p112 = scmp.eq.s32.totalorder %s15, 1
    %p113 = por %p111, %p112
    %p115 = scmp.ne.s32.totalorder %s98, %s114
    %p116 = scmp.eq.s32.totalorder %s15, 0
    %p117 = por %p115, %p116
    %s118 = ssub.s32 %s16, %s35
    %s119 = ssub.s32 %s17, %s31
    %s120 = sor.u32 %s118, %s119
    %p121 = scmp.eq.s32.totalorder %s120, 0
    %s123 = sadd.s32 %s122, 1
    %s124 = scalar_select %p121, %s122, %s123
    %p127 = pneg %p121
    %p128 = scmp.eq.s32.totalorder %s9, 1
    %p129 = por %p127, %p128
    %p130 = scmp.ne.s32.totalorder %s122, %s125
    %p131 = scmp.eq.s32.totalorder %s9, 0
    %p132 = por %p130, %p131
    %p133 = scmp.ne.s32.totalorder %s122, %s125
    %p134 = scmp.eq.s32.totalorder %s14, 1
    %p135 = por %p133, %p134
    %p136 = scmp.ne.s32.totalorder %s125, %s126
    %p137 = scmp.eq.s32.totalorder %s14, 0
    %p138 = por %p136, %p137
    %p139 = scmp.ne.s32.totalorder %s125, %s126
    %p140 = scmp.eq.s32.totalorder %s15, 1
    %p141 = por %p139, %p140
    %p143 = scmp.ne.s32.totalorder %s126, %s142
    %p144 = scmp.eq.s32.totalorder %s15, 0
    %p145 = por %p143, %p144
    %p146 = scmp.le.s32.totalorder 1, %s9
    %p147 = scmp.lt.s32.totalorder %s9, 3
    %p148 = pnand %p146, %p147
    %p149 = pneg %p148
    // Predicated region
    $region9: #{bottleneck_forward.3} parent=5 // pred_check
      _
    $region10: #{bottleneck_forward.3} parent=5 // pred_check_branch
      %151 = sbr.rel (%p148) target = $region12
    $region11: #{bottleneck_forward.3} parent=5 // pred_region
      %s152 = ssub.s32 %s9, 1
      // Predicated region
      $region13: #{bottleneck_forward.3} parent=11 // pred_check
        %p153 = pneg %p84
      $region14: #{bottleneck_forward.3} parent=11 // pred_check_branch
        %155 = sbr.rel (%p153) target = $region16
      $region15: #{bottleneck_forward.3} parent=11 // pred_region
        %s156 = smul.u32 32, %s21
        %p157 = scmp.lt.s32.totalorder %s156, 31
        %s158 = scalar_select %p157, %s156, 31
        %p159 = scmp.lt.s32.totalorder %s20, 0
        %s160 = scalar_select %p159, %s20, 0
        %s161 = sadd.s32 %s160, %s158
        %s162 = smul.addr %s161, 4
        %s163 = scalar_lea.vmem %s1, %s162
        %s164 = smul.u32 32, %s21
      $region16: #{bottleneck_forward.3} parent=11 // pred_fallthru
        _
      // Predicated region
      $region17: #{bottleneck_forward.3} parent=11 // pred_check
        %p165 = pneg %p110
      $region18: #{bottleneck_forward.3} parent=11 // pred_check_branch
        %167 = sbr.rel (%p165) target = $region20
      $region19: #{bottleneck_forward.3} parent=11 // pred_region
        %p168 = scmp.lt.s32.totalorder %s20, 0
        %s169 = scalar_select %p168, %s20, 0
        %s170 = scalar_lea.vmem %s2, %s169
      $region20: #{bottleneck_forward.3} parent=11 // pred_fallthru
        _
    $region12: #{bottleneck_forward.3} parent=5 // pred_fallthru
      _
    %p171 = scmp.lt.s32.totalorder %s9, 2
    // Predicated region
    $region21: #{bottleneck_forward.3} parent=5 // pred_check
      %p172 = pneg %p171
    $region22: #{bottleneck_forward.3} parent=5 // pred_check_branch
      %174 = sbr.rel (%p172) target = $region24
    $region23: #{bottleneck_forward.3} parent=5 // pred_region
      // Predicated region
      $region25: #{bottleneck_forward.3} parent=23 // pred_check
        %p175 = pneg %p50
      $region26: #{bottleneck_forward.3} parent=23 // pred_check_branch
        %177 = sbr.rel (%p175) target = $region28
      $region27: #{bottleneck_forward.3} parent=23 // pred_region
        %s178 = smul.u32 32, %s16
        %s179 = smul.u32 2, %s18
        %p180 = scmp.lt.s32.totalorder %s178, 63
        %s181 = scalar_select %p180, %s178, 63
        %p182 = scmp.lt.s32.totalorder %s179, 1
        %s183 = scalar_select %p182, %s179, 1
        %s184 = smul.addr %s181, 2
        %s185 = sadd.s32 %s183, %s184
        %s186 = smul.addr %s185, 4
        %s187 = scalar_lea.vmem %s0, %s186
        %s188 = smul.u32 32, %s16
        %s189 = smul.u32 2, %s18
      $region28: #{bottleneck_forward.3} parent=23 // pred_fallthru
        _
    $region24: #{bottleneck_forward.3} parent=5 // pred_fallthru
      _
    %p190 = scmp.le.s32.totalorder 1, %s9
    %p191 = scmp.lt.s32.totalorder %s9, 3
    %p192 = pnand %p190, %p191
    %p193 = pneg %p192
    // Predicated region
    $region29: #{bottleneck_forward.3} parent=5 // pred_check
      _
    $region30: #{bottleneck_forward.3} parent=5 // pred_check_branch
      %195 = sbr.rel (%p192) target = $region32
    $region31: #{bottleneck_forward.3} parent=5 // pred_region
      %s196 = ssub.s32 %s9, 1
      %s197 = smul.u32 32, %s19
      %s198 = smul.u32 2, %s21
      %p199 = scmp.lt.s32.totalorder %s197, 63
      %s200 = scalar_select %p199, %s197, 63
      %p201 = scmp.lt.s32.totalorder %s198, 1
      %s202 = scalar_select %p201, %s198, 1
      %s203 = smul.addr %s200, 2
      %s204 = sadd.s32 %s202, %s203
      %s205 = smul.addr %s204, 4
      %s206 = scalar_lea.vmem %s0, %s205
      %p207 = pneg %p56
      %p208 = pneg %p53
      %s209 = smul.u32 32, %s21
      %p210 = scmp.lt.s32.totalorder %s209, 31
      %s211 = scalar_select %p210, %s209, 31
      %p212 = scmp.lt.s32.totalorder %s20, 0
      %s213 = scalar_select %p212, %s20, 0
      %s214 = sadd.s32 %s213, %s211
      %s215 = smul.addr %s214, 4
      %s216 = scalar_lea.vmem %s1, %s215
      %p217 = pneg %p84
      %p218 = pneg %p81
      %p219 = scmp.lt.s32.totalorder %s20, 0
      %s220 = scalar_select %p219, %s20, 0
      %s221 = scalar_lea.vmem %s2, %s220
      %p222 = pneg %p110
      %p223 = pneg %p107
      %p224 = pneg %p138
      %p225 = pneg %p135
      %s226 = smul.u32 32, %s19
      %p227 = scmp.lt.s32.totalorder %s226, 63
      %s228 = scalar_select %p227, %s226, 63
      %p229 = scmp.lt.s32.totalorder %s20, 0
      %s230 = scalar_select %p229, %s20, 0
      %s231 = sadd.s32 %s230, %s228
      %s232 = smul.addr %s231, 4
      %s233 = scalar_lea.vmem %s3, %s232
      %s234 = smul.u32 32, %s19
      %s235 = smul.u32 2, %s21
      %p236 = scmp.lt.s32.totalorder %s234, 63
      %s237 = scalar_select %p236, %s234, 63
      %p238 = scmp.lt.s32.totalorder %s235, 1
      %s239 = scalar_select %p238, %s235, 1
      %s240 = smul.addr %s237, 2
      %s241 = sadd.s32 %s239, %s240
      %s242 = smul.addr %s241, 4
      %s243 = scalar_lea.vmem %s0, %s242
      %s244 = smul.u32 32, %s19
      %s245 = smul.u32 2, %s21
      %s246 = smul.u32 32, %s21
      %p247 = scmp.lt.s32.totalorder %s246, 31
      %s248 = scalar_select %p247, %s246, 31
      %p249 = scmp.lt.s32.totalorder %s20, 0
      %s250 = scalar_select %p249, %s20, 0
      %s251 = sadd.s32 %s250, %s248
      %s252 = smul.addr %s251, 4
      %s253 = scalar_lea.vmem %s1, %s252
      %s254 = smul.u32 32, %s21
      %p255 = scmp.lt.s32.totalorder %s20, 0
      %s256 = scalar_select %p255, %s20, 0
      %s257 = scalar_lea.vmem %s2, %s256
      %s258 = smul.u32 32, %s19
      %p259 = scmp.lt.s32.totalorder %s258, 63
      %s260 = scalar_select %p259, %s258, 63
      %p261 = scmp.lt.s32.totalorder %s20, 0
      %s262 = scalar_select %p261, %s20, 0
      %s263 = sadd.s32 %s262, %s260
      %s264 = smul.addr %s263, 4
      %s265 = scalar_lea.vmem %s3, %s264
      %s266 = smul.u32 32, %s19
      %p268 = scmp.eq.s32.totalorder %s21, 0
      // Predicated region
      $region33: #{bottleneck_forward.3} parent=31 // pred_check
        %p269 = pneg %p268
      $region34: #{bottleneck_forward.3} parent=31 // pred_check_branch
        %271 = sbr.rel (%p269) target = $region36
      $region35: #{bottleneck_forward.3} parent=31 // pred_region
        %vm272 = vcmask 523264
        %273 = vst.msk [vmem:[#allocation2] sm:$0xff] %vm272, 0.0
        %274 = vst.msk [vmem:[#allocation2 + $0x8] sm:$0xff] %vm272, 0.0
        %275 = vst.msk [vmem:[#allocation2 + $0x10] sm:$0xff] %vm272, 0.0
        %276 = vst.msk [vmem:[#allocation2 + $0x18] sm:$0xff] %vm272, 0.0
        %277 = vst.msk [vmem:[#allocation2 + $0x20] sm:$0xff] %vm272, 0.0
        %278 = vst.msk [vmem:[#allocation2 + $0x28] sm:$0xff] %vm272, 0.0
        %279 = vst.msk [vmem:[#allocation2 + $0x30] sm:$0xff] %vm272, 0.0
        %280 = vst.msk [vmem:[#allocation2 + $0x38] sm:$0xff] %vm272, 0.0
        %281 = vst.msk [vmem:[#allocation2 + $0x40] sm:$0xff] %vm272, 0.0
        %282 = vst.msk [vmem:[#allocation2 + $0x48] sm:$0xff] %vm272, 0.0
        %283 = vst.msk [vmem:[#allocation2 + $0x50] sm:$0xff] %vm272, 0.0
        %284 = vst.msk [vmem:[#allocation2 + $0x58] sm:$0xff] %vm272, 0.0
        %285 = vst.msk [vmem:[#allocation2 + $0x60] sm:$0xff] %vm272, 0.0
        %286 = vst.msk [vmem:[#allocation2 + $0x68] sm:$0xff] %vm272, 0.0
        %287 = vst.msk [vmem:[#allocation2 + $0x70] sm:$0xff] %vm272, 0.0
        %288 = vst.msk [vmem:[#allocation2 + $0x78] sm:$0xff] %vm272, 0.0
        %289 = vst.msk [vmem:[#allocation2 + $0x80] sm:$0xff] %vm272, 0.0
        %290 = vst.msk [vmem:[#allocation2 + $0x88] sm:$0xff] %vm272, 0.0
        %291 = vst.msk [vmem:[#allocation2 + $0x90] sm:$0xff] %vm272, 0.0
        %292 = vst.msk [vmem:[#allocation2 + $0x98] sm:$0xff] %vm272, 0.0
        %293 = vst.msk [vmem:[#allocation2 + $0xa0] sm:$0xff] %vm272, 0.0
        %294 = vst.msk [vmem:[#allocation2 + $0xa8] sm:$0xff] %vm272, 0.0
        %295 = vst.msk [vmem:[#allocation2 + $0xb0] sm:$0xff] %vm272, 0.0
        %296 = vst.msk [vmem:[#allocation2 + $0xb8] sm:$0xff] %vm272, 0.0
        %297 = vst.msk [vmem:[#allocation2 + $0xc0] sm:$0xff] %vm272, 0.0
        %298 = vst.msk [vmem:[#allocation2 + $0xc8] sm:$0xff] %vm272, 0.0
        %299 = vst.msk [vmem:[#allocation2 + $0xd0] sm:$0xff] %vm272, 0.0
        %300 = vst.msk [vmem:[#allocation2 + $0xd8] sm:$0xff] %vm272, 0.0
        %301 = vst.msk [vmem:[#allocation2 + $0xe0] sm:$0xff] %vm272, 0.0
        %302 = vst.msk [vmem:[#allocation2 + $0xe8] sm:$0xff] %vm272, 0.0
        %303 = vst.msk [vmem:[#allocation2 + $0xf0] sm:$0xff] %vm272, 0.0
        %304 = vst.msk [vmem:[#allocation2 + $0xf8] sm:$0xff] %vm272, 0.0
      $region36: #{bottleneck_forward.3} parent=31 // pred_fallthru
        _
      %v305 = vld [vmem:[#allocation2] sm:$0xff]
      %v306 = vld [vmem:[#allocation2 + $0x8] sm:$0xff]
      %v307 = vld [vmem:[#allocation2 + $0x10] sm:$0xff]
      %v308 = vld [vmem:[#allocation2 + $0x18] sm:$0xff]
      %v309 = vld [vmem:[#allocation2 + $0x20] sm:$0xff]
      %v310 = vld [vmem:[#allocation2 + $0x28] sm:$0xff]
      %v311 = vld [vmem:[#allocation2 + $0x30] sm:$0xff]
      %v312 = vld [vmem:[#allocation2 + $0x38] sm:$0xff]
      %v313 = vld [vmem:[#allocation2 + $0x40] sm:$0xff]
      %v314 = vld [vmem:[#allocation2 + $0x48] sm:$0xff]
      %v315 = vld [vmem:[#allocation2 + $0x50] sm:$0xff]
      %v316 = vld [vmem:[#allocation2 + $0x58] sm:$0xff]
      %v317 = vld [vmem:[#allocation2 + $0x60] sm:$0xff]
      %v318 = vld [vmem:[#allocation2 + $0x68] sm:$0xff]
      %v319 = vld [vmem:[#allocation2 + $0x70] sm:$0xff]
      %v320 = vld [vmem:[#allocation2 + $0x78] sm:$0xff]
      %v321 = vld [vmem:[#allocation2 + $0x80] sm:$0xff]
      %v322 = vld [vmem:[#allocation2 + $0x88] sm:$0xff]
      %v323 = vld [vmem:[#allocation2 + $0x90] sm:$0xff]
      %v324 = vld [vmem:[#allocation2 + $0x98] sm:$0xff]
      %v325 = vld [vmem:[#allocation2 + $0xa0] sm:$0xff]
      %v326 = vld [vmem:[#allocation2 + $0xa8] sm:$0xff]
      %v327 = vld [vmem:[#allocation2 + $0xb0] sm:$0xff]
      %v328 = vld [vmem:[#allocation2 + $0xb8] sm:$0xff]
      %v329 = vld [vmem:[#allocation2 + $0xc0] sm:$0xff]
      %v330 = vld [vmem:[#allocation2 + $0xc8] sm:$0xff]
      %v331 = vld [vmem:[#allocation2 + $0xd0] sm:$0xff]
      %v332 = vld [vmem:[#allocation2 + $0xd8] sm:$0xff]
      %v333 = vld [vmem:[#allocation2 + $0xe0] sm:$0xff]
      %v334 = vld [vmem:[#allocation2 + $0xe8] sm:$0xff]
      %v335 = vld [vmem:[#allocation2 + $0xf0] sm:$0xff]
      %v336 = vld [vmem:[#allocation2 + $0xf8] sm:$0xff]
      %v337 = vld [vmem:[%s243] sm:$0xff]
      %v338 = vld [vmem:[%s243 + $0x8] sm:$0xff]
      %v339 = vld [vmem:[%s243 + $0x10] sm:$0xff]
      %v340 = vld [vmem:[%s243 + $0x18] sm:$0xff]
      %v341 = vld [vmem:[%s243 + $0x20] sm:$0xff]
      %v342 = vld [vmem:[%s243 + $0x28] sm:$0xff]
      %v343 = vld [vmem:[%s243 + $0x30] sm:$0xff]
      %v344 = vld [vmem:[%s243 + $0x38] sm:$0xff]
      %v345 = vld [vmem:[%s243 + $0x40] sm:$0xff]
      %v346 = vld [vmem:[%s243 + $0x48] sm:$0xff]
      %v347 = vld [vmem:[%s243 + $0x50] sm:$0xff]
      %v348 = vld [vmem:[%s243 + $0x58] sm:$0xff]
      %v349 = vld [vmem:[%s243 + $0x60] sm:$0xff]
      %v350 = vld [vmem:[%s243 + $0x68] sm:$0xff]
      %v351 = vld [vmem:[%s243 + $0x70] sm:$0xff]
      %v352 = vld [vmem:[%s243 + $0x78] sm:$0xff]
      %v353 = vld [vmem:[%s243 + $0x80] sm:$0xff]
      %v354 = vld [vmem:[%s243 + $0x88] sm:$0xff]
      %v355 = vld [vmem:[%s243 + $0x90] sm:$0xff]
      %v356 = vld [vmem:[%s243 + $0x98] sm:$0xff]
      %v357 = vld [vmem:[%s243 + $0xa0] sm:$0xff]
      %v358 = vld [vmem:[%s243 + $0xa8] sm:$0xff]
      %v359 = vld [vmem:[%s243 + $0xb0] sm:$0xff]
      %v360 = vld [vmem:[%s243 + $0xb8] sm:$0xff]
      %v361 = vld [vmem:[%s243 + $0xc0] sm:$0xff]
      %v362 = vld [vmem:[%s243 + $0xc8] sm:$0xff]
      %v363 = vld [vmem:[%s243 + $0xd0] sm:$0xff]
      %v364 = vld [vmem:[%s243 + $0xd8] sm:$0xff]
      %v365 = vld [vmem:[%s243 + $0xe0] sm:$0xff]
      %v366 = vld [vmem:[%s243 + $0xe8] sm:$0xff]
      %v367 = vld [vmem:[%s243 + $0xf0] sm:$0xff]
      %v368 = vld [vmem:[%s243 + $0xf8] sm:$0xff]
      %v369 = vld [vmem:[%s253] sm:$0xf]
      %v370 = vld [vmem:[%s253 + $0x4] sm:$0xf]
      %v371 = vld [vmem:[%s253 + $0x8] sm:$0xf]
      %v372 = vld [vmem:[%s253 + $0xc] sm:$0xf]
      %v373 = vld [vmem:[%s253 + $0x10] sm:$0xf]
      %v374 = vld [vmem:[%s253 + $0x14] sm:$0xf]
      %v375 = vld [vmem:[%s253 + $0x18] sm:$0xf]
      %v376 = vld [vmem:[%s253 + $0x1c] sm:$0xf]
      %v377 = vld [vmem:[%s253 + $0x20] sm:$0xf]
      %v378 = vld [vmem:[%s253 + $0x24] sm:$0xf]
      %v379 = vld [vmem:[%s253 + $0x28] sm:$0xf]
      %v380 = vld [vmem:[%s253 + $0x2c] sm:$0xf]
      %v381 = vld [vmem:[%s253 + $0x30] sm:$0xf]
      %v382 = vld [vmem:[%s253 + $0x34] sm:$0xf]
      %v383 = vld [vmem:[%s253 + $0x38] sm:$0xf]
      %v384 = vld [vmem:[%s253 + $0x3c] sm:$0xf]
      %v385 = vld [vmem:[%s253 + $0x40] sm:$0xf]
      %v386 = vld [vmem:[%s253 + $0x44] sm:$0xf]
      %v387 = vld [vmem:[%s253 + $0x48] sm:$0xf]
      %v388 = vld [vmem:[%s253 + $0x4c] sm:$0xf]
      %v389 = vld [vmem:[%s253 + $0x50] sm:$0xf]
      %v390 = vld [vmem:[%s253 + $0x54] sm:$0xf]
      %v391 = vld [vmem:[%s253 + $0x58] sm:$0xf]
      %v392 = vld [vmem:[%s253 + $0x5c] sm:$0xf]
      %v393 = vld [vmem:[%s253 + $0x60] sm:$0xf]
      %v394 = vld [vmem:[%s253 + $0x64] sm:$0xf]
      %v395 = vld [vmem:[%s253 + $0x68] sm:$0xf]
      %v396 = vld [vmem:[%s253 + $0x6c] sm:$0xf]
      %v397 = vld [vmem:[%s253 + $0x70] sm:$0xf]
      %v398 = vld [vmem:[%s253 + $0x74] sm:$0xf]
      %v399 = vld [vmem:[%s253 + $0x78] sm:$0xf]
      %v400 = vld [vmem:[%s253 + $0x7c] sm:$0xf]
      %v433 = vunpack.c.l.b16 %v337
      %v434 = vunpack.c.h.b16 %v337
      %v435 = vunpack.c.l.b16 %v338
      %v436 = vunpack.c.h.b16 %v338
      %v437 = vunpack.c.l.b16 %v339
      %v438 = vunpack.c.h.b16 %v339
      %v439 = vunpack.c.l.b16 %v340
      %v440 = vunpack.c.h.b16 %v340
      %v441 = vunpack.c.l.b16 %v341
      %v442 = vunpack.c.h.b16 %v341
      %v443 = vunpack.c.l.b16 %v342
      %v444 = vunpack.c.h.b16 %v342
      %v445 = vunpack.c.l.b16 %v343
      %v446 = vunpack.c.h.b16 %v343
      %v447 = vunpack.c.l.b16 %v344
      %v448 = vunpack.c.h.b16 %v344
      %v449 = vunpack.c.l.b16 %v345
      %v450 = vunpack.c.h.b16 %v345
      %v451 = vunpack.c.l.b16 %v346
      %v452 = vunpack.c.h.b16 %v346
      %v453 = vunpack.c.l.b16 %v347
      %v454 = vunpack.c.h.b16 %v347
      %v455 = vunpack.c.l.b16 %v348
      %v456 = vunpack.c.h.b16 %v348
      %v457 = vunpack.c.l.b16 %v349
      %v458 = vunpack.c.h.b16 %v349
      %v459 = vunpack.c.l.b16 %v350
      %v460 = vunpack.c.h.b16 %v350
      %v461 = vunpack.c.l.b16 %v351
      %v462 = vunpack.c.h.b16 %v351
      %v463 = vunpack.c.l.b16 %v352
      %v464 = vunpack.c.h.b16 %v352
      %v465 = vunpack.c.l.b16 %v353
      %v466 = vunpack.c.h.b16 %v353
      %v467 = vunpack.c.l.b16 %v354
      %v468 = vunpack.c.h.b16 %v354
      %v469 = vunpack.c.l.b16 %v355
      %v470 = vunpack.c.h.b16 %v355
      %v471 = vunpack.c.l.b16 %v356
      %v472 = vunpack.c.h.b16 %v356
      %v473 = vunpack.c.l.b16 %v357
      %v474 = vunpack.c.h.b16 %v357
      %v475 = vunpack.c.l.b16 %v358
      %v476 = vunpack.c.h.b16 %v358
      %v477 = vunpack.c.l.b16 %v359
      %v478 = vunpack.c.h.b16 %v359
      %v479 = vunpack.c.l.b16 %v360
      %v480 = vunpack.c.h.b16 %v360
      %v481 = vunpack.c.l.b16 %v361
      %v482 = vunpack.c.h.b16 %v361
      %v483 = vunpack.c.l.b16 %v362
      %v484 = vunpack.c.h.b16 %v362
      %v485 = vunpack.c.l.b16 %v363
      %v486 = vunpack.c.h.b16 %v363
      %v487 = vunpack.c.l.b16 %v364
      %v488 = vunpack.c.h.b16 %v364
      %v489 = vunpack.c.l.b16 %v365
      %v490 = vunpack.c.h.b16 %v365
      %v491 = vunpack.c.l.b16 %v366
      %v492 = vunpack.c.h.b16 %v366
      %v493 = vunpack.c.l.b16 %v367
      %v494 = vunpack.c.h.b16 %v367
      %v495 = vunpack.c.l.b16 %v368
      %v496 = vunpack.c.h.b16 %v368
      %v497 = vpack.c.b16 %v435, %v433
      %v498 = vpack.c.b16 %v436, %v434
      %v499 = vpack.c.b16 %v439, %v437
      %v500 = vpack.c.b16 %v440, %v438
      %v501 = vpack.c.b16 %v443, %v441
      %v502 = vpack.c.b16 %v444, %v442
      %v503 = vpack.c.b16 %v447, %v445
      %v504 = vpack.c.b16 %v448, %v446
      %v505 = vpack.c.b16 %v451, %v449
      %v506 = vpack.c.b16 %v452, %v450
      %v507 = vpack.c.b16 %v455, %v453
      %v508 = vpack.c.b16 %v456, %v454
      %v509 = vpack.c.b16 %v459, %v457
      %v510 = vpack.c.b16 %v460, %v458
      %v511 = vpack.c.b16 %v463, %v461
      %v512 = vpack.c.b16 %v464, %v462
      %v513 = vpack.c.b16 %v467, %v465
      %v514 = vpack.c.b16 %v468, %v466
      %v515 = vpack.c.b16 %v471, %v469
      %v516 = vpack.c.b16 %v472, %v470
      %v517 = vpack.c.b16 %v475, %v473
      %v518 = vpack.c.b16 %v476, %v474
      %v519 = vpack.c.b16 %v479, %v477
      %v520 = vpack.c.b16 %v480, %v478
      %v521 = vpack.c.b16 %v483, %v481
      %v522 = vpack.c.b16 %v484, %v482
      %v523 = vpack.c.b16 %v487, %v485
      %v524 = vpack.c.b16 %v488, %v486
      %v525 = vpack.c.b16 %v491, %v489
      %v526 = vpack.c.b16 %v492, %v490
      %v527 = vpack.c.b16 %v495, %v493
      %v528 = vpack.c.b16 %v496, %v494
      %v593 = vunpack.c.l.b16 %v369
      %v594 = vunpack.c.l.b16 %v370
      %v595 = vunpack.c.l.b16 %v371
      %v596 = vunpack.c.l.b16 %v372
      %v597 = vunpack.c.l.b16 %v373
      %v598 = vunpack.c.l.b16 %v374
      %v599 = vunpack.c.l.b16 %v375
      %v600 = vunpack.c.l.b16 %v376
      %v601 = vunpack.c.l.b16 %v377
      %v602 = vunpack.c.l.b16 %v378
      %v603 = vunpack.c.l.b16 %v379
      %v604 = vunpack.c.l.b16 %v380
      %v605 = vunpack.c.l.b16 %v381
      %v606 = vunpack.c.l.b16 %v382
      %v607 = vunpack.c.l.b16 %v383
      %v608 = vunpack.c.l.b16 %v384
      %v609 = vunpack.c.l.b16 %v385
      %v610 = vunpack.c.l.b16 %v386
      %v611 = vunpack.c.l.b16 %v387
      %v612 = vunpack.c.l.b16 %v388
      %v613 = vunpack.c.l.b16 %v389
      %v614 = vunpack.c.l.b16 %v390
      %v615 = vunpack.c.l.b16 %v391
      %v616 = vunpack.c.l.b16 %v392
      %v617 = vunpack.c.l.b16 %v393
      %v618 = vunpack.c.l.b16 %v394
      %v619 = vunpack.c.l.b16 %v395
      %v620 = vunpack.c.l.b16 %v396
      %v621 = vunpack.c.l.b16 %v397
      %v622 = vunpack.c.l.b16 %v398
      %v623 = vunpack.c.l.b16 %v399
      %v624 = vunpack.c.l.b16 %v400
      %v625 = vpack.c.b16 %v594, %v593
      %v626 = vpack.c.b16 %v596, %v595
      %v627 = vpack.c.b16 %v598, %v597
      %v628 = vpack.c.b16 %v600, %v599
      %v629 = vpack.c.b16 %v602, %v601
      %v630 = vpack.c.b16 %v604, %v603
      %v631 = vpack.c.b16 %v606, %v605
      %v632 = vpack.c.b16 %v608, %v607
      %v633 = vpack.c.b16 %v610, %v609
      %v634 = vpack.c.b16 %v612, %v611
      %v635 = vpack.c.b16 %v614, %v613
      %v636 = vpack.c.b16 %v616, %v615
      %v637 = vpack.c.b16 %v618, %v617
      %v638 = vpack.c.b16 %v620, %v619
      %v639 = vpack.c.b16 %v622, %v621
      %v640 = vpack.c.b16 %v624, %v623
      %657 = vmatprep.subr.bf16.mxu0 0
      %658 = vmatpush1.bf16.msra.mxu0 %v625
      %659 = vmatprep.subr.bf16.mxu0 0
      %660 = vmatpush1.bf16.msra.mxu0 %v626
      %661 = vmatprep.subr.bf16.mxu0 0
      %662 = vmatpush1.bf16.msra.mxu0 %v627
      %663 = vmatprep.subr.bf16.mxu0 0
      %664 = vmatpush1.bf16.msra.mxu0 %v628
      %665 = vmatprep.subr.bf16.mxu0 0
      %666 = vmatpush1.bf16.msra.mxu0 %v629
      %667 = vmatprep.subr.bf16.mxu0 0
      %668 = vmatpush1.bf16.msra.mxu0 %v630
      %669 = vmatprep.subr.bf16.mxu0 0
      %670 = vmatpush1.bf16.msra.mxu0 %v631
      %671 = vmatprep.subr.bf16.mxu0 0
      %672 = vmatpush1.bf16.msra.mxu0 %v632
      %673 = vmatprep.subr.bf16.mxu0 0
      %674 = vmatpush1.bf16.msra.mxu0 %v633
      %675 = vmatprep.subr.bf16.mxu0 0
      %676 = vmatpush1.bf16.msra.mxu0 %v634
      %677 = vmatprep.subr.bf16.mxu0 0
      %678 = vmatpush1.bf16.msra.mxu0 %v635
      %679 = vmatprep.subr.bf16.mxu0 0
      %680 = vmatpush1.bf16.msra.mxu0 %v636
      %681 = vmatprep.subr.bf16.mxu0 0
      %682 = vmatpush1.bf16.msra.mxu0 %v637
      %683 = vmatprep.subr.bf16.mxu0 0
      %684 = vmatpush1.bf16.msra.mxu0 %v638
      %685 = vmatprep.subr.bf16.mxu0 0
      %686 = vmatpush1.bf16.msra.mxu0 %v639
      %687 = vmatprep.subr.bf16.mxu0 0
      %688 = vmatpush1.bf16.msra.mxu0 %v640
      %689 = vmatprep.mubr.bf16.mxu0 %v498
      %690 = vmatmul.mubr.bf16.gmra.mrb[0].mxu0 %v497
      %v691 = vpop.f32.mrb[0].mxu0
      %v692 = vadd.f32 0.0, %v691
      %v693 = vpop.f32.mrb[0].mxu0
      %v694 = vpop.f32.mrb[0].mxu0
      %v695 = vadd.f32 0.0, %v694
      %v696 = vpop.f32.mrb[0].mxu0
      %697 = vmatprep.mubr.bf16.mxu0 %v500
      %698 = vmatmul.mubr.bf16.gmra.mrb[0].mxu0 %v499
      %v699 = vpop.f32.mrb[0].mxu0
      %v700 = vadd.f32 0.0, %v699
      %v701 = vpop.f32.mrb[0].mxu0
      %v702 = vpop.f32.mrb[0].mxu0
      %v703 = vadd.f32 0.0, %v702
      %v704 = vpop.f32.mrb[0].mxu0
      %705 = vmatprep.mubr.bf16.mxu0 %v502
      %706 = vmatmul.mubr.bf16.gmra.mrb[0].mxu0 %v501
      %v707 = vpop.f32.mrb[0].mxu0
      %v708 = vadd.f32 0.0, %v707
      %v709 = vpop.f32.mrb[0].mxu0
      %v710 = vpop.f32.mrb[0].mxu0
      %v711 = vadd.f32 0.0, %v710
      %v712 = vpop.f32.mrb[0].mxu0
      %713 = vmatprep.mubr.bf16.mxu0 %v504
      %714 = vmatmul.mubr.bf16.gmra.mrb[0].mxu0 %v503
      %v715 = vpop.f32.mrb[0].mxu0
      %v716 = vadd.f32 0.0, %v715
      %v717 = vpop.f32.mrb[0].mxu0
      %v718 = vpop.f32.mrb[0].mxu0
      %v719 = vadd.f32 0.0, %v718
      %v720 = vpop.f32.mrb[0].mxu0
      %721 = vmatprep.mubr.bf16.mxu0 %v506
      %722 = vmatmul.mubr.bf16.gmra.mrb[0].mxu0 %v505
      %v723 = vpop.f32.mrb[0].mxu0
      %v724 = vadd.f32 0.0, %v723
      %v725 = vpop.f32.mrb[0].mxu0
      %v726 = vpop.f32.mrb[0].mxu0
      %v727 = vadd.f32 0.0, %v726
      %v728 = vpop.f32.mrb[0].mxu0
      %729 = vmatprep.mubr.bf16.mxu0 %v508
      %730 = vmatmul.mubr.bf16.gmra.mrb[0].mxu0 %v507
      %v731 = vpop.f32.mrb[0].mxu0
      %v732 = vadd.f32 0.0, %v731
      %v733 = vpop.f32.mrb[0].mxu0
      %v734 = vpop.f32.mrb[0].mxu0
      %v735 = vadd.f32 0.0, %v734
      %v736 = vpop.f32.mrb[0].mxu0
      %737 = vmatprep.mubr.bf16.mxu0 %v510
      %738 = vmatmul.mubr.bf16.gmra.mrb[0].mxu0 %v509
      %v739 = vpop.f32.mrb[0].mxu0
      %v740 = vadd.f32 0.0, %v739
      %v741 = vpop.f32.mrb[0].mxu0
      %v742 = vpop.f32.mrb[0].mxu0
      %v743 = vadd.f32 0.0, %v742
      %v744 = vpop.f32.mrb[0].mxu0
      %745 = vmatprep.mubr.bf16.mxu0 %v512
      %746 = vmatmul.mubr.bf16.gmra.mrb[0].mxu0 %v511
      %v747 = vpop.f32.mrb[0].mxu0
      %v748 = vadd.f32 0.0, %v747
      %v749 = vpop.f32.mrb[0].mxu0
      %v750 = vpop.f32.mrb[0].mxu0
      %v751 = vadd.f32 0.0, %v750
      %v752 = vpop.f32.mrb[0].mxu0
      %753 = vmatprep.mubr.bf16.mxu0 %v514
      %754 = vmatmul.mubr.bf16.gmra.mrb[0].mxu0 %v513
      %v755 = vpop.f32.mrb[0].mxu0
      %v756 = vadd.f32 0.0, %v755
      %v757 = vpop.f32.mrb[0].mxu0
      %v758 = vpop.f32.mrb[0].mxu0
      %v759 = vadd.f32 0.0, %v758
      %v760 = vpop.f32.mrb[0].mxu0
      %761 = vmatprep.mubr.bf16.mxu0 %v516
      %762 = vmatmul.mubr.bf16.gmra.mrb[0].mxu0 %v515
      %v763 = vpop.f32.mrb[0].mxu0
      %v764 = vadd.f32 0.0, %v763
      %v765 = vpop.f32.mrb[0].mxu0
      %v766 = vpop.f32.mrb[0].mxu0
      %v767 = vadd.f32 0.0, %v766
      %v768 = vpop.f32.mrb[0].mxu0
      %769 = vmatprep.mubr.bf16.mxu0 %v518
      %770 = vmatmul.mubr.bf16.gmra.mrb[0].mxu0 %v517
      %v771 = vpop.f32.mrb[0].mxu0
      %v772 = vadd.f32 0.0, %v771
      %v773 = vpop.f32.mrb[0].mxu0
      %v774 = vpop.f32.mrb[0].mxu0
      %v775 = vadd.f32 0.0, %v774
      %v776 = vpop.f32.mrb[0].mxu0
      %777 = vmatprep.mubr.bf16.mxu0 %v520
      %778 = vmatmul.mubr.bf16.gmra.mrb[0].mxu0 %v519
      %v779 = vpop.f32.mrb[0].mxu0
      %v780 = vadd.f32 0.0, %v779
      %v781 = vpop.f32.mrb[0].mxu0
      %v782 = vpop.f32.mrb[0].mxu0
      %v783 = vadd.f32 0.0, %v782
      %v784 = vpop.f32.mrb[0].mxu0
      %785 = vmatprep.mubr.bf16.mxu0 %v522
      %786 = vmatmul.mubr.bf16.gmra.mrb[0].mxu0 %v521
      %v787 = vpop.f32.mrb[0].mxu0
      %v788 = vadd.f32 0.0, %v787
      %v789 = vpop.f32.mrb[0].mxu0
      %v790 = vpop.f32.mrb[0].mxu0
      %v791 = vadd.f32 0.0, %v790
      %v792 = vpop.f32.mrb[0].mxu0
      %793 = vmatprep.mubr.bf16.mxu0 %v524
      %794 = vmatmul.mubr.bf16.gmra.mrb[0].mxu0 %v523
      %v795 = vpop.f32.mrb[0].mxu0
      %v796 = vadd.f32 0.0, %v795
      %v797 = vpop.f32.mrb[0].mxu0
      %v798 = vpop.f32.mrb[0].mxu0
      %v799 = vadd.f32 0.0, %v798
      %v800 = vpop.f32.mrb[0].mxu0
      %801 = vmatprep.mubr.bf16.mxu0 %v526
      %802 = vmatmul.mubr.bf16.gmra.mrb[0].mxu0 %v525
      %v803 = vpop.f32.mrb[0].mxu0
      %v804 = vadd.f32 0.0, %v803
      %v805 = vpop.f32.mrb[0].mxu0
      %v806 = vpop.f32.mrb[0].mxu0
      %v807 = vadd.f32 0.0, %v806
      %v808 = vpop.f32.mrb[0].mxu0
      %809 = vmatprep.mubr.bf16.mxu0 %v528
      %810 = vmatmul.mubr.bf16.gmra.mrb[0].mxu0 %v527
      %v811 = vpop.f32.mrb[0].mxu0
      %v812 = vadd.f32 0.0, %v811
      %v813 = vpop.f32.mrb[0].mxu0
      %v814 = vpop.f32.mrb[0].mxu0
      %v815 = vadd.f32 0.0, %v814
      %v816 = vpop.f32.mrb[0].mxu0
      %817 = vdwg.mxu0
      %v818 = vadd.f32 %v305, %v692
      %v819 = vadd.f32 %v306, %v695
      %v820 = vadd.f32 %v307, %v700
      %v821 = vadd.f32 %v308, %v703
      %v822 = vadd.f32 %v309, %v708
      %v823 = vadd.f32 %v310, %v711
      %v824 = vadd.f32 %v311, %v716
      %v825 = vadd.f32 %v312, %v719
      %v826 = vadd.f32 %v313, %v724
      %v827 = vadd.f32 %v314, %v727
      %v828 = vadd.f32 %v315, %v732
      %v829 = vadd.f32 %v316, %v735
      %v830 = vadd.f32 %v317, %v740
      %v831 = vadd.f32 %v318, %v743
      %v832 = vadd.f32 %v319, %v748
      %v833 = vadd.f32 %v320, %v751
      %v834 = vadd.f32 %v321, %v756
      %v835 = vadd.f32 %v322, %v759
      %v836 = vadd.f32 %v323, %v764
      %v837 = vadd.f32 %v324, %v767
      %v838 = vadd.f32 %v325, %v772
      %v839 = vadd.f32 %v326, %v775
      %v840 = vadd.f32 %v327, %v780
      %v841 = vadd.f32 %v328, %v783
      %v842 = vadd.f32 %v329, %v788
      %v843 = vadd.f32 %v330, %v791
      %v844 = vadd.f32 %v331, %v796
      %v845 = vadd.f32 %v332, %v799
      %v846 = vadd.f32 %v333, %v804
      %v847 = vadd.f32 %v334, %v807
      %v848 = vadd.f32 %v335, %v812
      %v849 = vadd.f32 %v336, %v815
      %vm850 = vcmask 523264
      %851 = vst.msk [vmem:[#allocation2] sm:$0xff] %vm850, %v818
      %852 = vst.msk [vmem:[#allocation2 + $0x8] sm:$0xff] %vm850, %v819
      %853 = vst.msk [vmem:[#allocation2 + $0x10] sm:$0xff] %vm850, %v820
      %854 = vst.msk [vmem:[#allocation2 + $0x18] sm:$0xff] %vm850, %v821
      %855 = vst.msk [vmem:[#allocation2 + $0x20] sm:$0xff] %vm850, %v822
      %856 = vst.msk [vmem:[#allocation2 + $0x28] sm:$0xff] %vm850, %v823
      %857 = vst.msk [vmem:[#allocation2 + $0x30] sm:$0xff] %vm850, %v824
      %858 = vst.msk [vmem:[#allocation2 + $0x38] sm:$0xff] %vm850, %v825
      %859 = vst.msk [vmem:[#allocation2 + $0x40] sm:$0xff] %vm850, %v826
      %860 = vst.msk [vmem:[#allocation2 + $0x48] sm:$0xff] %vm850, %v827
      %861 = vst.msk [vmem:[#allocation2 + $0x50] sm:$0xff] %vm850, %v828
      %862 = vst.msk [vmem:[#allocation2 + $0x58] sm:$0xff] %vm850, %v829
      %863 = vst.msk [vmem:[#allocation2 + $0x60] sm:$0xff] %vm850, %v830
      %864 = vst.msk [vmem:[#allocation2 + $0x68] sm:$0xff] %vm850, %v831
      %865 = vst.msk [vmem:[#allocation2 + $0x70] sm:$0xff] %vm850, %v832
      %866 = vst.msk [vmem:[#allocation2 + $0x78] sm:$0xff] %vm850, %v833
      %867 = vst.msk [vmem:[#allocation2 + $0x80] sm:$0xff] %vm850, %v834
      %868 = vst.msk [vmem:[#allocation2 + $0x88] sm:$0xff] %vm850, %v835
      %869 = vst.msk [vmem:[#allocation2 + $0x90] sm:$0xff] %vm850, %v836
      %870 = vst.msk [vmem:[#allocation2 + $0x98] sm:$0xff] %vm850, %v837
      %871 = vst.msk [vmem:[#allocation2 + $0xa0] sm:$0xff] %vm850, %v838
      %872 = vst.msk [vmem:[#allocation2 + $0xa8] sm:$0xff] %vm850, %v839
      %873 = vst.msk [vmem:[#allocation2 + $0xb0] sm:$0xff] %vm850, %v840
      %874 = vst.msk [vmem:[#allocation2 + $0xb8] sm:$0xff] %vm850, %v841
      %875 = vst.msk [vmem:[#allocation2 + $0xc0] sm:$0xff] %vm850, %v842
      %876 = vst.msk [vmem:[#allocation2 + $0xc8] sm:$0xff] %vm850, %v843
      %877 = vst.msk [vmem:[#allocation2 + $0xd0] sm:$0xff] %vm850, %v844
      %878 = vst.msk [vmem:[#allocation2 + $0xd8] sm:$0xff] %vm850, %v845
      %879 = vst.msk [vmem:[#allocation2 + $0xe0] sm:$0xff] %vm850, %v846
      %880 = vst.msk [vmem:[#allocation2 + $0xe8] sm:$0xff] %vm850, %v847
      %881 = vst.msk [vmem:[#allocation2 + $0xf0] sm:$0xff] %vm850, %v848
      %882 = vst.msk [vmem:[#allocation2 + $0xf8] sm:$0xff] %vm850, %v849
      // Predicated region
      $region37: #{bottleneck_forward.3} parent=31 // pred_check
        %p883 = pneg %p268
      $region38: #{bottleneck_forward.3} parent=31 // pred_check_branch
        %885 = sbr.rel (%p883) target = $region40
      $region39: #{bottleneck_forward.3} parent=31 // pred_region
        %v886 = vld [vmem:[#allocation2] sm:$0xff]
        %v887 = vld [vmem:[#allocation2 + $0x8] sm:$0xff]
        %v888 = vld [vmem:[#allocation2 + $0x10] sm:$0xff]
        %v889 = vld [vmem:[#allocation2 + $0x18] sm:$0xff]
        %v890 = vld [vmem:[#allocation2 + $0x20] sm:$0xff]
        %v891 = vld [vmem:[#allocation2 + $0x28] sm:$0xff]
        %v892 = vld [vmem:[#allocation2 + $0x30] sm:$0xff]
        %v893 = vld [vmem:[#allocation2 + $0x38] sm:$0xff]
        %v894 = vld [vmem:[#allocation2 + $0x40] sm:$0xff]
        %v895 = vld [vmem:[#allocation2 + $0x48] sm:$0xff]
        %v896 = vld [vmem:[#allocation2 + $0x50] sm:$0xff]
        %v897 = vld [vmem:[#allocation2 + $0x58] sm:$0xff]
        %v898 = vld [vmem:[#allocation2 + $0x60] sm:$0xff]
        %v899 = vld [vmem:[#allocation2 + $0x68] sm:$0xff]
        %v900 = vld [vmem:[#allocation2 + $0x70] sm:$0xff]
        %v901 = vld [vmem:[#allocation2 + $0x78] sm:$0xff]
        %v902 = vld [vmem:[#allocation2 + $0x80] sm:$0xff]
        %v903 = vld [vmem:[#allocation2 + $0x88] sm:$0xff]
        %v904 = vld [vmem:[#allocation2 + $0x90] sm:$0xff]
        %v905 = vld [vmem:[#allocation2 + $0x98] sm:$0xff]
        %v906 = vld [vmem:[#allocation2 + $0xa0] sm:$0xff]
        %v907 = vld [vmem:[#allocation2 + $0xa8] sm:$0xff]
        %v908 = vld [vmem:[#allocation2 + $0xb0] sm:$0xff]
        %v909 = vld [vmem:[#allocation2 + $0xb8] sm:$0xff]
        %v910 = vld [vmem:[#allocation2 + $0xc0] sm:$0xff]
        %v911 = vld [vmem:[#allocation2 + $0xc8] sm:$0xff]
        %v912 = vld [vmem:[#allocation2 + $0xd0] sm:$0xff]
        %v913 = vld [vmem:[#allocation2 + $0xd8] sm:$0xff]
        %v914 = vld [vmem:[#allocation2 + $0xe0] sm:$0xff]
        %v915 = vld [vmem:[#allocation2 + $0xe8] sm:$0xff]
        %v916 = vld [vmem:[#allocation2 + $0xf0] sm:$0xff]
        %v917 = vld [vmem:[#allocation2 + $0xf8] sm:$0xff]
        %v918 = vld [vmem:[%s257] sm:$0x1]
        %v920 = vlaneseq
        %v921 = vshrl.u32 %v920, 7
        %v922 = vsub.s32 0, %v921
        %v923 = vrot.slane %v918, %v922
        %v925 = vadd.f32 %v886, %v923
        %v926 = vadd.f32 %v887, %v923
        %v927 = vadd.f32 %v888, %v923
        %v928 = vadd.f32 %v889, %v923
        %v929 = vadd.f32 %v890, %v923
        %v930 = vadd.f32 %v891, %v923
        %v931 = vadd.f32 %v892, %v923
        %v932 = vadd.f32 %v893, %v923
        %v933 = vadd.f32 %v894, %v923
        %v934 = vadd.f32 %v895, %v923
        %v935 = vadd.f32 %v896, %v923
        %v936 = vadd.f32 %v897, %v923
        %v937 = vadd.f32 %v898, %v923
        %v938 = vadd.f32 %v899, %v923
        %v939 = vadd.f32 %v900, %v923
        %v940 = vadd.f32 %v901, %v923
        %v941 = vadd.f32 %v902, %v923
        %v942 = vadd.f32 %v903, %v923
        %v943 = vadd.f32 %v904, %v923
        %v944 = vadd.f32 %v905, %v923
        %v945 = vadd.f32 %v906, %v923
        %v946 = vadd.f32 %v907, %v923
        %v947 = vadd.f32 %v908, %v923
        %v948 = vadd.f32 %v909, %v923
        %v949 = vadd.f32 %v910, %v923
        %v950 = vadd.f32 %v911, %v923
        %v951 = vadd.f32 %v912, %v923
        %v952 = vadd.f32 %v913, %v923
        %v953 = vadd.f32 %v914, %v923
        %v954 = vadd.f32 %v915, %v923
        %v955 = vadd.f32 %v916, %v923
        %v956 = vadd.f32 %v917, %v923
        %v957 = vmax.f32 %v925, 0.0
        %v958 = vmax.f32 %v926, 0.0
        %v959 = vmax.f32 %v927, 0.0
        %v960 = vmax.f32 %v928, 0.0
        %v961 = vmax.f32 %v929, 0.0
        %v962 = vmax.f32 %v930, 0.0
        %v963 = vmax.f32 %v931, 0.0
        %v964 = vmax.f32 %v932, 0.0
        %v965 = vmax.f32 %v933, 0.0
        %v966 = vmax.f32 %v934, 0.0
        %v967 = vmax.f32 %v935, 0.0
        %v968 = vmax.f32 %v936, 0.0
        %v969 = vmax.f32 %v937, 0.0
        %v970 = vmax.f32 %v938, 0.0
        %v971 = vmax.f32 %v939, 0.0
        %v972 = vmax.f32 %v940, 0.0
        %v973 = vmax.f32 %v941, 0.0
        %v974 = vmax.f32 %v942, 0.0
        %v975 = vmax.f32 %v943, 0.0
        %v976 = vmax.f32 %v944, 0.0
        %v977 = vmax.f32 %v945, 0.0
        %v978 = vmax.f32 %v946, 0.0
        %v979 = vmax.f32 %v947, 0.0
        %v980 = vmax.f32 %v948, 0.0
        %v981 = vmax.f32 %v949, 0.0
        %v982 = vmax.f32 %v950, 0.0
        %v983 = vmax.f32 %v951, 0.0
        %v984 = vmax.f32 %v952, 0.0
        %v985 = vmax.f32 %v953, 0.0
        %v986 = vmax.f32 %v954, 0.0
        %v987 = vmax.f32 %v955, 0.0
        %v988 = vmax.f32 %v956, 0.0
        %v989 = vpack.c.bf16 %v958, %v957
        %v990 = vpack.c.bf16 %v960, %v959
        %v991 = vpack.c.bf16 %v962, %v961
        %v992 = vpack.c.bf16 %v964, %v963
        %v993 = vpack.c.bf16 %v966, %v965
        %v994 = vpack.c.bf16 %v968, %v967
        %v995 = vpack.c.bf16 %v970, %v969
        %v996 = vpack.c.bf16 %v972, %v971
        %v997 = vpack.c.bf16 %v974, %v973
        %v998 = vpack.c.bf16 %v976, %v975
        %v999 = vpack.c.bf16 %v978, %v977
        %v1000 = vpack.c.bf16 %v980, %v979
        %v1001 = vpack.c.bf16 %v982, %v981
        %v1002 = vpack.c.bf16 %v984, %v983
        %v1003 = vpack.c.bf16 %v986, %v985
        %v1004 = vpack.c.bf16 %v988, %v987
        %v1021 = vunpack.c.l.b16 %v989
        %v1022 = vunpack.c.h.b16 %v989
        %v1023 = vunpack.c.l.b16 %v990
        %v1024 = vunpack.c.h.b16 %v990
        %v1025 = vunpack.c.l.b16 %v991
        %v1026 = vunpack.c.h.b16 %v991
        %v1027 = vunpack.c.l.b16 %v992
        %v1028 = vunpack.c.h.b16 %v992
        %v1029 = vunpack.c.l.b16 %v993
        %v1030 = vunpack.c.h.b16 %v993
        %v1031 = vunpack.c.l.b16 %v994
        %v1032 = vunpack.c.h.b16 %v994
        %v1033 = vunpack.c.l.b16 %v995
        %v1034 = vunpack.c.h.b16 %v995
        %v1035 = vunpack.c.l.b16 %v996
        %v1036 = vunpack.c.h.b16 %v996
        %v1037 = vunpack.c.l.b16 %v997
        %v1038 = vunpack.c.h.b16 %v997
        %v1039 = vunpack.c.l.b16 %v998
        %v1040 = vunpack.c.h.b16 %v998
        %v1041 = vunpack.c.l.b16 %v999
        %v1042 = vunpack.c.h.b16 %v999
        %v1043 = vunpack.c.l.b16 %v1000
        %v1044 = vunpack.c.h.b16 %v1000
        %v1045 = vunpack.c.l.b16 %v1001
        %v1046 = vunpack.c.h.b16 %v1001
        %v1047 = vunpack.c.l.b16 %v1002
        %v1048 = vunpack.c.h.b16 %v1002
        %v1049 = vunpack.c.l.b16 %v1003
        %v1050 = vunpack.c.h.b16 %v1003
        %v1051 = vunpack.c.l.b16 %v1004
        %v1052 = vunpack.c.h.b16 %v1004
        %v1053 = vpack.c.b16 %v1021, %v1021
        %v1054 = vpack.c.b16 %v1022, %v1022
        %v1055 = vpack.c.b16 %v1023, %v1023
        %v1056 = vpack.c.b16 %v1024, %v1024
        %v1057 = vpack.c.b16 %v1025, %v1025
        %v1058 = vpack.c.b16 %v1026, %v1026
        %v1059 = vpack.c.b16 %v1027, %v1027
        %v1060 = vpack.c.b16 %v1028, %v1028
        %v1061 = vpack.c.b16 %v1029, %v1029
        %v1062 = vpack.c.b16 %v1030, %v1030
        %v1063 = vpack.c.b16 %v1031, %v1031
        %v1064 = vpack.c.b16 %v1032, %v1032
        %v1065 = vpack.c.b16 %v1033, %v1033
        %v1066 = vpack.c.b16 %v1034, %v1034
        %v1067 = vpack.c.b16 %v1035, %v1035
        %v1068 = vpack.c.b16 %v1036, %v1036
        %v1069 = vpack.c.b16 %v1037, %v1037
        %v1070 = vpack.c.b16 %v1038, %v1038
        %v1071 = vpack.c.b16 %v1039, %v1039
        %v1072 = vpack.c.b16 %v1040, %v1040
        %v1073 = vpack.c.b16 %v1041, %v1041
        %v1074 = vpack.c.b16 %v1042, %v1042
        %v1075 = vpack.c.b16 %v1043, %v1043
        %v1076 = vpack.c.b16 %v1044, %v1044
        %v1077 = vpack.c.b16 %v1045, %v1045
        %v1078 = vpack.c.b16 %v1046, %v1046
        %v1079 = vpack.c.b16 %v1047, %v1047
        %v1080 = vpack.c.b16 %v1048, %v1048
        %v1081 = vpack.c.b16 %v1049, %v1049
        %v1082 = vpack.c.b16 %v1050, %v1050
        %v1083 = vpack.c.b16 %v1051, %v1051
        %v1084 = vpack.c.b16 %v1052, %v1052
        %vm1117 = vcmask 519168
        %1118 = vst.msk [vmem:[%s265] sm:$0xf] %vm1117, %v1053
        %1119 = vst.msk [vmem:[%s265 + $0x4] sm:$0xf] %vm1117, %v1054
        %1120 = vst.msk [vmem:[%s265 + $0x8] sm:$0xf] %vm1117, %v1055
        %1121 = vst.msk [vmem:[%s265 + $0xc] sm:$0xf] %vm1117, %v1056
        %1122 = vst.msk [vmem:[%s265 + $0x10] sm:$0xf] %vm1117, %v1057
        %1123 = vst.msk [vmem:[%s265 + $0x14] sm:$0xf] %vm1117, %v1058
        %1124 = vst.msk [vmem:[%s265 + $0x18] sm:$0xf] %vm1117, %v1059
        %1125 = vst.msk [vmem:[%s265 + $0x1c] sm:$0xf] %vm1117, %v1060
        %1126 = vst.msk [vmem:[%s265 + $0x20] sm:$0xf] %vm1117, %v1061
        %1127 = vst.msk [vmem:[%s265 + $0x24] sm:$0xf] %vm1117, %v1062
        %1128 = vst.msk [vmem:[%s265 + $0x28] sm:$0xf] %vm1117, %v1063
        %1129 = vst.msk [vmem:[%s265 + $0x2c] sm:$0xf] %vm1117, %v1064
        %1130 = vst.msk [vmem:[%s265 + $0x30] sm:$0xf] %vm1117, %v1065
        %1131 = vst.msk [vmem:[%s265 + $0x34] sm:$0xf] %vm1117, %v1066
        %1132 = vst.msk [vmem:[%s265 + $0x38] sm:$0xf] %vm1117, %v1067
        %1133 = vst.msk [vmem:[%s265 + $0x3c] sm:$0xf] %vm1117, %v1068
        %1134 = vst.msk [vmem:[%s265 + $0x40] sm:$0xf] %vm1117, %v1069
        %1135 = vst.msk [vmem:[%s265 + $0x44] sm:$0xf] %vm1117, %v1070
        %1136 = vst.msk [vmem:[%s265 + $0x48] sm:$0xf] %vm1117, %v1071
        %1137 = vst.msk [vmem:[%s265 + $0x4c] sm:$0xf] %vm1117, %v1072
        %1138 = vst.msk [vmem:[%s265 + $0x50] sm:$0xf] %vm1117, %v1073
        %1139 = vst.msk [vmem:[%s265 + $0x54] sm:$0xf] %vm1117, %v1074
        %1140 = vst.msk [vmem:[%s265 + $0x58] sm:$0xf] %vm1117, %v1075
        %1141 = vst.msk [vmem:[%s265 + $0x5c] sm:$0xf] %vm1117, %v1076
        %1142 = vst.msk [vmem:[%s265 + $0x60] sm:$0xf] %vm1117, %v1077
        %1143 = vst.msk [vmem:[%s265 + $0x64] sm:$0xf] %vm1117, %v1078
        %1144 = vst.msk [vmem:[%s265 + $0x68] sm:$0xf] %vm1117, %v1079
        %1145 = vst.msk [vmem:[%s265 + $0x6c] sm:$0xf] %vm1117, %v1080
        %1146 = vst.msk [vmem:[%s265 + $0x70] sm:$0xf] %vm1117, %v1081
        %1147 = vst.msk [vmem:[%s265 + $0x74] sm:$0xf] %vm1117, %v1082
        %1148 = vst.msk [vmem:[%s265 + $0x78] sm:$0xf] %vm1117, %v1083
        %1149 = vst.msk [vmem:[%s265 + $0x7c] sm:$0xf] %vm1117, %v1084
      $region40: #{bottleneck_forward.3} parent=31 // pred_fallthru
        _
      %s1150 = smul.u32 32, %s19
      %p1151 = scmp.lt.s32.totalorder %s1150, 63
      %s1152 = scalar_select %p1151, %s1150, 63
      %p1153 = scmp.lt.s32.totalorder %s20, 0
      %s1154 = scalar_select %p1153, %s20, 0
      %s1155 = sadd.s32 %s1154, %s1152
      %s1156 = smul.addr %s1155, 4
      %s1157 = scalar_lea.vmem %s3, %s1156
      // Predicated region
      $region41: #{bottleneck_forward.3} parent=31 // pred_check
        %p1158 = pneg %p135
      $region42: #{bottleneck_forward.3} parent=31 // pred_check_branch
        %1160 = sbr.rel (%p1158) target = $region44
      $region43: #{bottleneck_forward.3} parent=31 // pred_region
        %s1161 = smul.u32 32, %s19
      $region44: #{bottleneck_forward.3} parent=31 // pred_fallthru
        _
    $region32: #{bottleneck_forward.3} parent=5 // pred_fallthru
      _
    %p1162 = scmp.le.s32.totalorder 2, %s9
    // Predicated region
    $region45: #{bottleneck_forward.3} parent=5 // pred_check
      %p1163 = pneg %p1162
    $region46: #{bottleneck_forward.3} parent=5 // pred_check_branch
      %1165 = sbr.rel (%p1163) target = $region48
    $region47: #{bottleneck_forward.3} parent=5 // pred_region
      %s1166 = ssub.s32 %s9, 2
      // Predicated region
      $region49: #{bottleneck_forward.3} parent=47 // pred_check
        %p1167 = pneg %p141
      $region50: #{bottleneck_forward.3} parent=47 // pred_check_branch
        %1169 = sbr.rel (%p1167) target = $region52
      $region51: #{bottleneck_forward.3} parent=47 // pred_region
        %s1170 = smul.u32 32, %s22
        %p1171 = scmp.lt.s32.totalorder %s1170, 63
        %s1172 = scalar_select %p1171, %s1170, 63
        %p1173 = scmp.lt.s32.totalorder %s23, 0
        %s1174 = scalar_select %p1173, %s23, 0
        %s1175 = sadd.s32 %s1174, %s1172
        %s1176 = smul.addr %s1175, 4
        %s1177 = scalar_lea.vmem %s3, %s1176
      $region52: #{bottleneck_forward.3} parent=47 // pred_fallthru
        _
    $region48: #{bottleneck_forward.3} parent=5 // pred_fallthru
      _
  $region6: #{bottleneck_forward.3} parent=0 // loop_footer
    %s13 = sadd.s32 1, %s9
  $region7: #{bottleneck_forward.3} parent=0 // loop_footer_branch
    %8 = sbr.rel target = $region3
  $region8: #{bottleneck_forward.3} parent=0 // loop_exit
    _

// kernel: bottleneck_forward.4
$region0: #{bottleneck_forward.4}
  #allocation0 [shape = 'u32[]', space=smem, size = 0x4, offset = 0x4, fixed_abs, tag = 'smem constant byte address 0x4 - core index']
  #allocation1 [shape = 'u32[144,128]{1,0:T(1,128)}', space=vmem, size = 0x12000, scoped, tag = 'internal scratch']
  #allocation2 [shape = 'f32[256,64]{1,0:T(8,128)}', space=vmem, size = 0x20000, scoped, tag = 'scratch operand']
  %s0 = inlined_call_operand.vmem [shape: bf16[512,576], index: 0, kind: input, shape index: {}]
  %s1 = inlined_call_operand.vmem [shape: bf16[576,64], index: 1, kind: input, shape index: {}]
  %s2 = inlined_call_operand.vmem [shape: f32[1,64], index: 2, kind: input, shape index: {}]
  %s3 = inlined_call_operand.vmem [shape: bf16[512,64], index: 3, kind: output, shape index: {}]
  %s4 = sld [smem:[#allocation0]]
  $region53: #{bottleneck_forward.4} parent=0
    _
  %s6 = ssub.s32 1, %s4
  %s7 = scalar_select 0, %s6, %s4
  loop: start=0, step=1, limit=4
  $region2: #{bottleneck_forward.4} parent=0 // loop_pre_header
    _
  $region3: #{bottleneck_forward.4} parent=0 // loop_header
    %s9 = sphi 0, %s13
    %p10 = scmp.ge.s32.totalorder %s9, 4
    %s16 = sphi 0, %s35
    %s17 = sphi 0, %s31
    %s18 = sphi 0, %s27
    %s19 = sphi 0, %s16
    %s20 = sphi 0, %s17
    %s21 = sphi 0, %s18
    %s22 = sphi 0, %s19
    %s23 = sphi 0, %s20
    %s24 = sphi 0, %s21
    %s40 = sphi 0, %s42
    %s43 = sphi 0, %s40
    %s44 = sphi 0, %s43
    %s60 = sphi 0, %s44
    %s68 = sphi 0, %s70
    %s71 = sphi 0, %s68
    %s72 = sphi 0, %s71
    %s88 = sphi 0, %s72
    %s94 = sphi 0, %s96
    %s97 = sphi 0, %s94
    %s98 = sphi 0, %s97
    %s114 = sphi 0, %s98
    %s122 = sphi 0, %s124
    %s125 = sphi 0, %s122
    %s126 = sphi 0, %s125
    %s142 = sphi 0, %s126
  $region4: #{bottleneck_forward.4} parent=0 // loop_header_branch
    %12 = sbr.rel (%p10) target = $region8
  $region5: #{bottleneck_forward.4} parent=0 // loop_body
    %s14 = ssub.s32 %s9, 1
    %s15 = ssub.s32 %s9, 2
    %s25 = sadd.s32 1, %s18
    %p26 = scmp.ge.s32.totalorder %s25, 1
    %s27 = scalar_select %p26, 0, %s25
    %s28 = sadd.s32 1, %s17
    %s29 = scalar_select %p26, %s28, %s17
    %p30 = scmp.ge.s32.totalorder %s29, 1
    %s31 = scalar_select %p30, 0, %s29
    %s32 = sadd.s32 1, %s16
    %s33 = scalar_select %p30, %s32, %s16
    %p34 = scmp.ge.s32.totalorder %s33, 2
    %s35 = scalar_select %p34, 0, %s33
    %s36 = ssub.s32 %s16, %s35
    %s37 = ssub.s32 %s18, %s27
    %s38 = sor.u32 %s36, %s37
    %p39 = scmp.eq.s32.totalorder %s38, 0
    %s41 = sadd.s32 %s40, 1
    %s42 = scalar_select %p39, %s40, %s41
    %p45 = pneg %p39
    %p46 = scmp.eq.s32.totalorder %s9, 1
    %p47 = por %p45, %p46
    %p48 = scmp.ne.s32.totalorder %s40, %s43
    %p49 = scmp.eq.s32.totalorder %s9, 0
    %p50 = por %p48, %p49
    %p51 = scmp.ne.s32.totalorder %s40, %s43
    %p52 = scmp.eq.s32.totalorder %s14, 1
    %p53 = por %p51, %p52
    %p54 = scmp.ne.s32.totalorder %s43, %s44
    %p55 = scmp.eq.s32.totalorder %s14, 0
    %p56 = por %p54, %p55
    %p57 = scmp.ne.s32.totalorder %s43, %s44
    %p58 = scmp.eq.s32.totalorder %s15, 1
    %p59 = por %p57, %p58
    %p61 = scmp.ne.s32.totalorder %s44, %s60
    %p62 = scmp.eq.s32.totalorder %s15, 0
    %p63 = por %p61, %p62
    %s64 = ssub.s32 %s18, %s27
    %s65 = ssub.s32 %s17, %s31
    %s66 = sor.u32 %s64, %s65
    %p67 = scmp.eq.s32.totalorder %s66, 0
    %s69 = sadd.s32 %s68, 1
    %s70 = scalar_select %p67, %s68, %s69
    %p73 = pneg %p67
    %p74 = scmp.eq.s32.totalorder %s9, 1
    %p75 = por %p73, %p74
    %p76 = scmp.ne.s32.totalorder %s68, %s71
    %p77 = scmp.eq.s32.totalorder %s9, 0
    %p78 = por %p76, %p77
    %p79 = scmp.ne.s32.totalorder %s68, %s71
    %p80 = scmp.eq.s32.totalorder %s14, 1
    %p81 = por %p79, %p80
    %p82 = scmp.ne.s32.totalorder %s71, %s72
    %p83 = scmp.eq.s32.totalorder %s14, 0
    %p84 = por %p82, %p83
    %p85 = scmp.ne.s32.totalorder %s71, %s72
    %p86 = scmp.eq.s32.totalorder %s15, 1
    %p87 = por %p85, %p86
    %p89 = scmp.ne.s32.totalorder %s72, %s88
    %p90 = scmp.eq.s32.totalorder %s15, 0
    %p91 = por %p89, %p90
    %s92 = ssub.s32 %s17, %s31
    %p93 = scmp.eq.s32.totalorder %s92, 0
    %s95 = sadd.s32 %s94, 1
    %s96 = scalar_select %p93, %s94, %s95
    %p99 = pneg %p93
    %p100 = scmp.eq.s32.totalorder %s9, 1
    %p101 = por %p99, %p100
    %p102 = scmp.ne.s32.totalorder %s94, %s97
    %p103 = scmp.eq.s32.totalorder %s9, 0
    %p104 = por %p102, %p103
    %p105 = scmp.ne.s32.totalorder %s94, %s97
    %p106 = scmp.eq.s32.totalorder %s14, 1
    %p107 = por %p105, %p106
    %p108 = scmp.ne.s32.totalorder %s97, %s98
    %p109 = scmp.eq.s32.totalorder %s14, 0
    %p110 = por %p108, %p109
    %p111 = scmp.ne.s32.totalorder %s97, %s98
    %p112 = scmp.eq.s32.totalorder %s15, 1
    %p113 = por %p111, %p112
    %p115 = scmp.ne.s32.totalorder %s98, %s114
    %p116 = scmp.eq.s32.totalorder %s15, 0
    %p117 = por %p115, %p116
    %s118 = ssub.s32 %s16, %s35
    %s119 = ssub.s32 %s17, %s31
    %s120 = sor.u32 %s118, %s119
    %p121 = scmp.eq.s32.totalorder %s120, 0
    %s123 = sadd.s32 %s122, 1
    %s124 = scalar_select %p121, %s122, %s123
    %p127 = pneg %p121
    %p128 = scmp.eq.s32.totalorder %s9, 1
    %p129 = por %p127, %p128
    %p130 = scmp.ne.s32.totalorder %s122, %s125
    %p131 = scmp.eq.s32.totalorder %s9, 0
    %p132 = por %p130, %p131
    %p133 = scmp.ne.s32.totalorder %s122, %s125
    %p134 = scmp.eq.s32.totalorder %s14, 1
    %p135 = por %p133, %p134
    %p136 = scmp.ne.s32.totalorder %s125, %s126
    %p137 = scmp.eq.s32.totalorder %s14, 0
    %p138 = por %p136, %p137
    %p139 = scmp.ne.s32.totalorder %s125, %s126
    %p140 = scmp.eq.s32.totalorder %s15, 1
    %p141 = por %p139, %p140
    %p143 = scmp.ne.s32.totalorder %s126, %s142
    %p144 = scmp.eq.s32.totalorder %s15, 0
    %p145 = por %p143, %p144
    %p146 = scmp.le.s32.totalorder 1, %s9
    %p147 = scmp.lt.s32.totalorder %s9, 3
    %p148 = pnand %p146, %p147
    %p149 = pneg %p148
    // Predicated region
    $region9: #{bottleneck_forward.4} parent=5 // pred_check
      _
    $region10: #{bottleneck_forward.4} parent=5 // pred_check_branch
      %151 = sbr.rel (%p148) target = $region12
    $region11: #{bottleneck_forward.4} parent=5 // pred_region
      %s152 = ssub.s32 %s9, 1
      // Predicated region
      $region13: #{bottleneck_forward.4} parent=11 // pred_check
        %p153 = pneg %p84
      $region14: #{bottleneck_forward.4} parent=11 // pred_check_branch
        %155 = sbr.rel (%p153) target = $region16
      $region15: #{bottleneck_forward.4} parent=11 // pred_region
        %s156 = smul.u32 72, %s21
        %p157 = scmp.lt.s32.totalorder %s156, 71
        %s158 = scalar_select %p157, %s156, 71
        %p159 = scmp.lt.s32.totalorder %s20, 0
        %s160 = scalar_select %p159, %s20, 0
        %s161 = sadd.s32 %s160, %s158
        %s162 = smul.addr %s161, 4
        %s163 = scalar_lea.vmem %s1, %s162
        %s164 = smul.u32 72, %s21
      $region16: #{bottleneck_forward.4} parent=11 // pred_fallthru
        _
      // Predicated region
      $region17: #{bottleneck_forward.4} parent=11 // pred_check
        %p165 = pneg %p110
      $region18: #{bottleneck_forward.4} parent=11 // pred_check_branch
        %167 = sbr.rel (%p165) target = $region20
      $region19: #{bottleneck_forward.4} parent=11 // pred_region
        %p168 = scmp.lt.s32.totalorder %s20, 0
        %s169 = scalar_select %p168, %s20, 0
        %s170 = scalar_lea.vmem %s2, %s169
      $region20: #{bottleneck_forward.4} parent=11 // pred_fallthru
        _
    $region12: #{bottleneck_forward.4} parent=5 // pred_fallthru
      _
    %p171 = scmp.lt.s32.totalorder %s9, 2
    // Predicated region
    $region21: #{bottleneck_forward.4} parent=5 // pred_check
      %p172 = pneg %p171
    $region22: #{bottleneck_forward.4} parent=5 // pred_check_branch
      %174 = sbr.rel (%p172) target = $region24
    $region23: #{bottleneck_forward.4} parent=5 // pred_region
      // Predicated region
      $region25: #{bottleneck_forward.4} parent=23 // pred_check
        %p175 = pneg %p50
      $region26: #{bottleneck_forward.4} parent=23 // pred_check_branch
        %177 = sbr.rel (%p175) target = $region28
      $region27: #{bottleneck_forward.4} parent=23 // pred_region
        %s178 = smul.u32 32, %s16
        %s179 = smul.u32 5, %s18
        %p180 = scmp.lt.s32.totalorder %s178, 63
        %s181 = scalar_select %p180, %s178, 63
        %p182 = scmp.lt.s32.totalorder %s179, 4
        %s183 = scalar_select %p182, %s179, 4
        %s184 = smul.addr %s181, 5
        %s185 = sadd.s32 %s183, %s184
        %s186 = smul.addr %s185, 4
        %s187 = scalar_lea.vmem %s0, %s186
        %s188 = smul.u32 32, %s16
        %s189 = smul.u32 5, %s18
      $region28: #{bottleneck_forward.4} parent=23 // pred_fallthru
        _
    $region24: #{bottleneck_forward.4} parent=5 // pred_fallthru
      _
    %p190 = scmp.le.s32.totalorder 1, %s9
    %p191 = scmp.lt.s32.totalorder %s9, 3
    %p192 = pnand %p190, %p191
    %p193 = pneg %p192
    // Predicated region
    $region29: #{bottleneck_forward.4} parent=5 // pred_check
      _
    $region30: #{bottleneck_forward.4} parent=5 // pred_check_branch
      %195 = sbr.rel (%p192) target = $region32
    $region31: #{bottleneck_forward.4} parent=5 // pred_region
      %s196 = ssub.s32 %s9, 1
      %s197 = smul.u32 32, %s19
      %s198 = smul.u32 5, %s21
      %p199 = scmp.lt.s32.totalorder %s197, 63
      %s200 = scalar_select %p199, %s197, 63
      %p201 = scmp.lt.s32.totalorder %s198, 4
      %s202 = scalar_select %p201, %s198, 4
      %s203 = smul.addr %s200, 5
      %s204 = sadd.s32 %s202, %s203
      %s205 = smul.addr %s204, 4
      %s206 = scalar_lea.vmem %s0, %s205
      %p207 = pneg %p56
      %p208 = pneg %p53
      %s209 = smul.u32 72, %s21
      %p210 = scmp.lt.s32.totalorder %s209, 71
      %s211 = scalar_select %p210, %s209, 71
      %p212 = scmp.lt.s32.totalorder %s20, 0
      %s213 = scalar_select %p212, %s20, 0
      %s214 = sadd.s32 %s213, %s211
      %s215 = smul.addr %s214, 4
      %s216 = scalar_lea.vmem %s1, %s215
      %p217 = pneg %p84
      %p218 = pneg %p81
      %p219 = scmp.lt.s32.totalorder %s20, 0
      %s220 = scalar_select %p219, %s20, 0
      %s221 = scalar_lea.vmem %s2, %s220
      %p222 = pneg %p110
      %p223 = pneg %p107
      %p224 = pneg %p138
      %p225 = pneg %p135
      %s226 = smul.u32 32, %s19
      %p227 = scmp.lt.s32.totalorder %s226, 63
      %s228 = scalar_select %p227, %s226, 63
      %p229 = scmp.lt.s32.totalorder %s20, 0
      %s230 = scalar_select %p229, %s20, 0
      %s231 = sadd.s32 %s230, %s228
      %s232 = smul.addr %s231, 4
      %s233 = scalar_lea.vmem %s3, %s232
      %s234 = smul.u32 32, %s19
      %s235 = smul.u32 5, %s21
      %p236 = scmp.lt.s32.totalorder %s234, 63
      %s237 = scalar_select %p236, %s234, 63
      %p238 = scmp.lt.s32.totalorder %s235, 4
      %s239 = scalar_select %p238, %s235, 4
      %s240 = smul.addr %s237, 5
      %s241 = sadd.s32 %s239, %s240
      %s242 = smul.addr %s241, 4
      %s243 = scalar_lea.vmem %s0, %s242
      %s244 = smul.u32 32, %s19
      %s245 = smul.u32 5, %s21
      %s246 = smul.u32 72, %s21
      %p247 = scmp.lt.s32.totalorder %s246, 71
      %s248 = scalar_select %p247, %s246, 71
      %p249 = scmp.lt.s32.totalorder %s20, 0
      %s250 = scalar_select %p249, %s20, 0
      %s251 = sadd.s32 %s250, %s248
      %s252 = smul.addr %s251, 4
      %s253 = scalar_lea.vmem %s1, %s252
      %s254 = smul.u32 72, %s21
      %p255 = scmp.lt.s32.totalorder %s20, 0
      %s256 = scalar_select %p255, %s20, 0
      %s257 = scalar_lea.vmem %s2, %s256
      %s258 = smul.u32 32, %s19
      %p259 = scmp.lt.s32.totalorder %s258, 63
      %s260 = scalar_select %p259, %s258, 63
      %p261 = scmp.lt.s32.totalorder %s20, 0
      %s262 = scalar_select %p261, %s20, 0
      %s263 = sadd.s32 %s262, %s260
      %s264 = smul.addr %s263, 4
      %s265 = scalar_lea.vmem %s3, %s264
      %s266 = smul.u32 32, %s19
      %p268 = scmp.eq.s32.totalorder %s21, 0
      // Predicated region
      $region33: #{bottleneck_forward.4} parent=31 // pred_check
        %p269 = pneg %p268
      $region34: #{bottleneck_forward.4} parent=31 // pred_check_branch
        %271 = sbr.rel (%p269) target = $region36
      $region35: #{bottleneck_forward.4} parent=31 // pred_region
        %vm272 = vcmask 523264
        %273 = vst.msk [vmem:[#allocation2] sm:$0xff] %vm272, 0.0
        %274 = vst.msk [vmem:[#allocation2 + $0x8] sm:$0xff] %vm272, 0.0
        %275 = vst.msk [vmem:[#allocation2 + $0x10] sm:$0xff] %vm272, 0.0
        %276 = vst.msk [vmem:[#allocation2 + $0x18] sm:$0xff] %vm272, 0.0
        %277 = vst.msk [vmem:[#allocation2 + $0x20] sm:$0xff] %vm272, 0.0
        %278 = vst.msk [vmem:[#allocation2 + $0x28] sm:$0xff] %vm272, 0.0
        %279 = vst.msk [vmem:[#allocation2 + $0x30] sm:$0xff] %vm272, 0.0
        %280 = vst.msk [vmem:[#allocation2 + $0x38] sm:$0xff] %vm272, 0.0
        %281 = vst.msk [vmem:[#allocation2 + $0x40] sm:$0xff] %vm272, 0.0
        %282 = vst.msk [vmem:[#allocation2 + $0x48] sm:$0xff] %vm272, 0.0
        %283 = vst.msk [vmem:[#allocation2 + $0x50] sm:$0xff] %vm272, 0.0
        %284 = vst.msk [vmem:[#allocation2 + $0x58] sm:$0xff] %vm272, 0.0
        %285 = vst.msk [vmem:[#allocation2 + $0x60] sm:$0xff] %vm272, 0.0
        %286 = vst.msk [vmem:[#allocation2 + $0x68] sm:$0xff] %vm272, 0.0
        %287 = vst.msk [vmem:[#allocation2 + $0x70] sm:$0xff] %vm272, 0.0
        %288 = vst.msk [vmem:[#allocation2 + $0x78] sm:$0xff] %vm272, 0.0
        %289 = vst.msk [vmem:[#allocation2 + $0x80] sm:$0xff] %vm272, 0.0
        %290 = vst.msk [vmem:[#allocation2 + $0x88] sm:$0xff] %vm272, 0.0
        %291 = vst.msk [vmem:[#allocation2 + $0x90] sm:$0xff] %vm272, 0.0
        %292 = vst.msk [vmem:[#allocation2 + $0x98] sm:$0xff] %vm272, 0.0
        %293 = vst.msk [vmem:[#allocation2 + $0xa0] sm:$0xff] %vm272, 0.0
        %294 = vst.msk [vmem:[#allocation2 + $0xa8] sm:$0xff] %vm272, 0.0
        %295 = vst.msk [vmem:[#allocation2 + $0xb0] sm:$0xff] %vm272, 0.0
        %296 = vst.msk [vmem:[#allocation2 + $0xb8] sm:$0xff] %vm272, 0.0
        %297 = vst.msk [vmem:[#allocation2 + $0xc0] sm:$0xff] %vm272, 0.0
        %298 = vst.msk [vmem:[#allocation2 + $0xc8] sm:$0xff] %vm272, 0.0
        %299 = vst.msk [vmem:[#allocation2 + $0xd0] sm:$0xff] %vm272, 0.0
        %300 = vst.msk [vmem:[#allocation2 + $0xd8] sm:$0xff] %vm272, 0.0
        %301 = vst.msk [vmem:[#allocation2 + $0xe0] sm:$0xff] %vm272, 0.0
        %302 = vst.msk [vmem:[#allocation2 + $0xe8] sm:$0xff] %vm272, 0.0
        %303 = vst.msk [vmem:[#allocation2 + $0xf0] sm:$0xff] %vm272, 0.0
        %304 = vst.msk [vmem:[#allocation2 + $0xf8] sm:$0xff] %vm272, 0.0
      $region36: #{bottleneck_forward.4} parent=31 // pred_fallthru
        _
      %v305 = vld [vmem:[#allocation2] sm:$0xff]
      %v306 = vld [vmem:[#allocation2 + $0x8] sm:$0xff]
      %v307 = vld [vmem:[#allocation2 + $0x10] sm:$0xff]
      %v308 = vld [vmem:[#allocation2 + $0x18] sm:$0xff]
      %v309 = vld [vmem:[#allocation2 + $0x20] sm:$0xff]
      %v310 = vld [vmem:[#allocation2 + $0x28] sm:$0xff]
      %v311 = vld [vmem:[#allocation2 + $0x30] sm:$0xff]
      %v312 = vld [vmem:[#allocation2 + $0x38] sm:$0xff]
      %v313 = vld [vmem:[#allocation2 + $0x40] sm:$0xff]
      %v314 = vld [vmem:[#allocation2 + $0x48] sm:$0xff]
      %v315 = vld [vmem:[#allocation2 + $0x50] sm:$0xff]
      %v316 = vld [vmem:[#allocation2 + $0x58] sm:$0xff]
      %v317 = vld [vmem:[#allocation2 + $0x60] sm:$0xff]
      %v318 = vld [vmem:[#allocation2 + $0x68] sm:$0xff]
      %v319 = vld [vmem:[#allocation2 + $0x70] sm:$0xff]
      %v320 = vld [vmem:[#allocation2 + $0x78] sm:$0xff]
      %v321 = vld [vmem:[#allocation2 + $0x80] sm:$0xff]
      %v322 = vld [vmem:[#allocation2 + $0x88] sm:$0xff]
      %v323 = vld [vmem:[#allocation2 + $0x90] sm:$0xff]
      %v324 = vld [vmem:[#allocation2 + $0x98] sm:$0xff]
      %v325 = vld [vmem:[#allocation2 + $0xa0] sm:$0xff]
      %v326 = vld [vmem:[#allocation2 + $0xa8] sm:$0xff]
      %v327 = vld [vmem:[#allocation2 + $0xb0] sm:$0xff]
      %v328 = vld [vmem:[#allocation2 + $0xb8] sm:$0xff]
      %v329 = vld [vmem:[#allocation2 + $0xc0] sm:$0xff]
      %v330 = vld [vmem:[#allocation2 + $0xc8] sm:$0xff]
      %v331 = vld [vmem:[#allocation2 + $0xd0] sm:$0xff]
      %v332 = vld [vmem:[#allocation2 + $0xd8] sm:$0xff]
      %v333 = vld [vmem:[#allocation2 + $0xe0] sm:$0xff]
      %v334 = vld [vmem:[#allocation2 + $0xe8] sm:$0xff]
      %v335 = vld [vmem:[#allocation2 + $0xf0] sm:$0xff]
      %v336 = vld [vmem:[#allocation2 + $0xf8] sm:$0xff]
      %v337 = vld [vmem:[%s243] sm:$0xff]
      %v338 = vld [vmem:[%s243 + $0x8] sm:$0xff]
      %v339 = vld [vmem:[%s243 + $0x10] sm:$0xf]
      %v340 = vld [vmem:[%s243 + $0x14] sm:$0xff]
      %v341 = vld [vmem:[%s243 + $0x1c] sm:$0xff]
      %v342 = vld [vmem:[%s243 + $0x24] sm:$0xf]
      %v343 = vld [vmem:[%s243 + $0x28] sm:$0xff]
      %v344 = vld [vmem:[%s243 + $0x30] sm:$0xff]
      %v345 = vld [vmem:[%s243 + $0x38] sm:$0xf]
      %v346 = vld [vmem:[%s243 + $0x3c] sm:$0xff]
      %v347 = vld [vmem:[%s243 + $0x44] sm:$0xff]
      %v348 = vld [vmem:[%s243 + $0x4c] sm:$0xf]
      %v349 = vld [vmem:[%s243 + $0x50] sm:$0xff]
      %v350 = vld [vmem:[%s243 + $0x58] sm:$0xff]
      %v351 = vld [vmem:[%s243 + $0x60] sm:$0xf]
      %v352 = vld [vmem:[%s243 + $0x64] sm:$0xff]
      %v353 = vld [vmem:[%s243 + $0x6c] sm:$0xff]
      %v354 = vld [vmem:[%s243 + $0x74] sm:$0xf]
      %v355 = vld [vmem:[%s243 + $0x78] sm:$0xff]
      %v356 = vld [vmem:[%s243 + $0x80] sm:$0xff]
      %v357 = vld [vmem:[%s243 + $0x88] sm:$0xf]
      %v358 = vld [vmem:[%s243 + $0x8c] sm:$0xff]
      %v359 = vld [vmem:[%s243 + $0x94] sm:$0xff]
      %v360 = vld [vmem:[%s243 + $0x9c] sm:$0xf]
      %v361 = vld [vmem:[%s243 + $0xa0] sm:$0xff]
      %v362 = vld [vmem:[%s243 + $0xa8] sm:$0xff]
      %v363 = vld [vmem:[%s243 + $0xb0] sm:$0xf]
      %v364 = vld [vmem:[%s243 + $0xb4] sm:$0xff]
      %v365 = vld [vmem:[%s243 + $0xbc] sm:$0xff]
      %v366 = vld [vmem:[%s243 + $0xc4] sm:$0xf]
      %v367 = vld [vmem:[%s243 + $0xc8] sm:$0xff]
      %v368 = vld [vmem:[%s243 + $0xd0] sm:$0xff]
      %v369 = vld [vmem:[%s243 + $0xd8] sm:$0xf]
      %v370 = vld [vmem:[%s243 + $0xdc] sm:$0xff]
      %v371 = vld [vmem:[%s243 + $0xe4] sm:$0xff]
      %v372 = vld [vmem:[%s243 + $0xec] sm:$0xf]
      %v373 = vld [vmem:[%s243 + $0xf0] sm:$0xff]
      %v374 = vld [vmem:[%s243 + $0xf8] sm:$0xff]
      %v375 = vld [vmem:[%s243 + $0x100] sm:$0xf]
      %v376 = vld [vmem:[%s243 + $0x104] sm:$0xff]
      %v377 = vld [vmem:[%s243 + $0x10c] sm:$0xff]
      %v378 = vld [vmem:[%s243 + $0x114] sm:$0xf]
      %v379 = vld [vmem:[%s243 + $0x118] sm:$0xff]
      %v380 = vld [vmem:[%s243 + $0x120] sm:$0xff]
      %v381 = vld [vmem:[%s243 + $0x128] sm:$0xf]
      %v382 = vld [vmem:[%s243 + $0x12c] sm:$0xff]
      %v383 = vld [vmem:[%s243 + $0x134] sm:$0xff]
      %v384 = vld [vmem:[%s243 + $0x13c] sm:$0xf]
      %v385 = vld [vmem:[%s243 + $0x140] sm:$0xff]
      %v386 = vld [vmem:[%s243 + $0x148] sm:$0xff]
      %v387 = vld [vmem:[%s243 + $0x150] sm:$0xf]
      %v388 = vld [vmem:[%s243 + $0x154] sm:$0xff]
      %v389 = vld [vmem:[%s243 + $0x15c] sm:$0xff]
      %v390 = vld [vmem:[%s243 + $0x164] sm:$0xf]
      %v391 = vld [vmem:[%s243 + $0x168] sm:$0xff]
      %v392 = vld [vmem:[%s243 + $0x170] sm:$0xff]
      %v393 = vld [vmem:[%s243 + $0x178] sm:$0xf]
      %v394 = vld [vmem:[%s243 + $0x17c] sm:$0xff]
      %v395 = vld [vmem:[%s243 + $0x184] sm:$0xff]
      %v396 = vld [vmem:[%s243 + $0x18c] sm:$0xf]
      %v397 = vld [vmem:[%s243 + $0x190] sm:$0xff]
      %v398 = vld [vmem:[%s243 + $0x198] sm:$0xff]
      %v399 = vld [vmem:[%s243 + $0x1a0] sm:$0xf]
      %v400 = vld [vmem:[%s243 + $0x1a4] sm:$0xff]
      %v401 = vld [vmem:[%s243 + $0x1ac] sm:$0xff]
      %v402 = vld [vmem:[%s243 + $0x1b4] sm:$0xf]
      %v403 = vld [vmem:[%s243 + $0x1b8] sm:$0xff]
      %v404 = vld [vmem:[%s243 + $0x1c0] sm:$0xff]
      %v405 = vld [vmem:[%s243 + $0x1c8] sm:$0xf]
      %v406 = vld [vmem:[%s243 + $0x1cc] sm:$0xff]
      %v407 = vld [vmem:[%s243 + $0x1d4] sm:$0xff]
      %v408 = vld [vmem:[%s243 + $0x1dc] sm:$0xf]
      %v409 = vld [vmem:[%s243 + $0x1e0] sm:$0xff]
      %v410 = vld [vmem:[%s243 + $0x1e8] sm:$0xff]
      %v411 = vld [vmem:[%s243 + $0x1f0] sm:$0xf]
      %v412 = vld [vmem:[%s243 + $0x1f4] sm:$0xff]
      %v413 = vld [vmem:[%s243 + $0x1fc] sm:$0xff]
      %v414 = vld [vmem:[%s243 + $0x204] sm:$0xf]
      %v415 = vld [vmem:[%s243 + $0x208] sm:$0xff]
      %v416 = vld [vmem:[%s243 + $0x210] sm:$0xff]
      %v417 = vld [vmem:[%s243 + $0x218] sm:$0xf]
      %v418 = vld [vmem:[%s243 + $0x21c] sm:$0xff]
      %v419 = vld [vmem:[%s243 + $0x224] sm:$0xff]
      %v420 = vld [vmem:[%s243 + $0x22c] sm:$0xf]
      %v421 = vld [vmem:[%s243 + $0x230] sm:$0xff]
      %v422 = vld [vmem:[%s243 + $0x238] sm:$0xff]
      %v423 = vld [vmem:[%s243 + $0x240] sm:$0xf]
      %v424 = vld [vmem:[%s243 + $0x244] sm:$0xff]
      %v425 = vld [vmem:[%s243 + $0x24c] sm:$0xff]
      %v426 = vld [vmem:[%s243 + $0x254] sm:$0xf]
      %v427 = vld [vmem:[%s243 + $0x258] sm:$0xff]
      %v428 = vld [vmem:[%s243 + $0x260] sm:$0xff]
      %v429 = vld [vmem:[%s243 + $0x268] sm:$0xf]
      %v430 = vld [vmem:[%s243 + $0x26c] sm:$0xff]
      %v431 = vld [vmem:[%s243 + $0x274] sm:$0xff]
      %v432 = vld [vmem:[%s243 + $0x27c] sm:$0xf]
      %v433 = vld [vmem:[%s253] sm:$0xf]
      %v434 = vld [vmem:[%s253 + $0x4] sm:$0xf]
      %v435 = vld [vmem:[%s253 + $0x8] sm:$0xf]
      %v436 = vld [vmem:[%s253 + $0xc] sm:$0xf]
      %v437 = vld [vmem:[%s253 + $0x10] sm:$0xf]
      %v438 = vld [vmem:[%s253 + $0x14] sm:$0xf]
      %v439 = vld [vmem:[%s253 + $0x18] sm:$0xf]
      %v440 = vld [vmem:[%s253 + $0x1c] sm:$0xf]
      %v441 = vld [vmem:[%s253 + $0x20] sm:$0xf]
      %v442 = vld [vmem:[%s253 + $0x24] sm:$0xf]
      %v443 = vld [vmem:[%s253 + $0x28] sm:$0xf]
      %v444 = vld [vmem:[%s253 + $0x2c] sm:$0xf]
      %v445 = vld [vmem:[%s253 + $0x30] sm:$0xf]
      %v446 = vld [vmem:[%s253 + $0x34] sm:$0xf]
      %v447 = vld [vmem:[%s253 + $0x38] sm:$0xf]
      %v448 = vld [vmem:[%s253 + $0x3c] sm:$0xf]
      %v449 = vld [vmem:[%s253 + $0x40] sm:$0xf]
      %v450 = vld [vmem:[%s253 + $0x44] sm:$0xf]
      %v451 = vld [vmem:[%s253 + $0x48] sm:$0xf]
      %v452 = vld [vmem:[%s253 + $0x4c] sm:$0xf]
      %v453 = vld [vmem:[%s253 + $0x50] sm:$0xf]
      %v454 = vld [vmem:[%s253 + $0x54] sm:$0xf]
      %v455 = vld [vmem:[%s253 + $0x58] sm:$0xf]
      %v456 = vld [vmem:[%s253 + $0x5c] sm:$0xf]
      %v457 = vld [vmem:[%s253 + $0x60] sm:$0xf]
      %v458 = vld [vmem:[%s253 + $0x64] sm:$0xf]
      %v459 = vld [vmem:[%s253 + $0x68] sm:$0xf]
      %v460 = vld [vmem:[%s253 + $0x6c] sm:$0xf]
      %v461 = vld [vmem:[%s253 + $0x70] sm:$0xf]
      %v462 = vld [vmem:[%s253 + $0x74] sm:$0xf]
      %v463 = vld [vmem:[%s253 + $0x78] sm:$0xf]
      %v464 = vld [vmem:[%s253 + $0x7c] sm:$0xf]
      %v465 = vld [vmem:[%s253 + $0x80] sm:$0xf]
      %v466 = vld [vmem:[%s253 + $0x84] sm:$0xf]
      %v467 = vld [vmem:[%s253 + $0x88] sm:$0xf]
      %v468 = vld [vmem:[%s253 + $0x8c] sm:$0xf]
      %v469 = vld [vmem:[%s253 + $0x90] sm:$0xf]
      %v470 = vld [vmem:[%s253 + $0x94] sm:$0xf]
      %v471 = vld [vmem:[%s253 + $0x98] sm:$0xf]
      %v472 = vld [vmem:[%s253 + $0x9c] sm:$0xf]
      %v473 = vld [vmem:[%s253 + $0xa0] sm:$0xf]
      %v474 = vld [vmem:[%s253 + $0xa4] sm:$0xf]
      %v475 = vld [vmem:[%s253 + $0xa8] sm:$0xf]
      %v476 = vld [vmem:[%s253 + $0xac] sm:$0xf]
      %v477 = vld [vmem:[%s253 + $0xb0] sm:$0xf]
      %v478 = vld [vmem:[%s253 + $0xb4] sm:$0xf]
      %v479 = vld [vmem:[%s253 + $0xb8] sm:$0xf]
      %v480 = vld [vmem:[%s253 + $0xbc] sm:$0xf]
      %v481 = vld [vmem:[%s253 + $0xc0] sm:$0xf]
      %v482 = vld [vmem:[%s253 + $0xc4] sm:$0xf]
      %v483 = vld [vmem:[%s253 + $0xc8] sm:$0xf]
      %v484 = vld [vmem:[%s253 + $0xcc] sm:$0xf]
      %v485 = vld [vmem:[%s253 + $0xd0] sm:$0xf]
      %v486 = vld [vmem:[%s253 + $0xd4] sm:$0xf]
      %v487 = vld [vmem:[%s253 + $0xd8] sm:$0xf]
      %v488 = vld [vmem:[%s253 + $0xdc] sm:$0xf]
      %v489 = vld [vmem:[%s253 + $0xe0] sm:$0xf]
      %v490 = vld [vmem:[%s253 + $0xe4] sm:$0xf]
      %v491 = vld [vmem:[%s253 + $0xe8] sm:$0xf]
      %v492 = vld [vmem:[%s253 + $0xec] sm:$0xf]
      %v493 = vld [vmem:[%s253 + $0xf0] sm:$0xf]
      %v494 = vld [vmem:[%s253 + $0xf4] sm:$0xf]
      %v495 = vld [vmem:[%s253 + $0xf8] sm:$0xf]
      %v496 = vld [vmem:[%s253 + $0xfc] sm:$0xf]
      %v497 = vld [vmem:[%s253 + $0x100] sm:$0xf]
      %v498 = vld [vmem:[%s253 + $0x104] sm:$0xf]
      %v499 = vld [vmem:[%s253 + $0x108] sm:$0xf]
      %v500 = vld [vmem:[%s253 + $0x10c] sm:$0xf]
      %v501 = vld [vmem:[%s253 + $0x110] sm:$0xf]
      %v502 = vld [vmem:[%s253 + $0x114] sm:$0xf]
      %v503 = vld [vmem:[%s253 + $0x118] sm:$0xf]
      %v504 = vld [vmem:[%s253 + $0x11c] sm:$0xf]
      %v601 = vunpack.c.l.b16 %v337
      %v602 = vunpack.c.h.b16 %v337
      %v603 = vunpack.c.l.b16 %v338
      %v604 = vunpack.c.h.b16 %v338
      %v605 = vunpack.c.l.b16 %v339
      %v606 = vunpack.c.l.b16 %v340
      %v607 = vunpack.c.h.b16 %v340
      %v608 = vunpack.c.l.b16 %v341
      %v609 = vunpack.c.h.b16 %v341
      %v610 = vunpack.c.l.b16 %v342
      %v611 = vunpack.c.l.b16 %v343
      %v612 = vunpack.c.h.b16 %v343
      %v613 = vunpack.c.l.b16 %v344
      %v614 = vunpack.c.h.b16 %v344
      %v615 = vunpack.c.l.b16 %v345
      %v616 = vunpack.c.l.b16 %v346
      %v617 = vunpack.c.h.b16 %v346
      %v618 = vunpack.c.l.b16 %v347
      %v619 = vunpack.c.h.b16 %v347
      %v620 = vunpack.c.l.b16 %v348
      %v621 = vunpack.c.l.b16 %v349
      %v622 = vunpack.c.h.b16 %v349
      %v623 = vunpack.c.l.b16 %v350
      %v624 = vunpack.c.h.b16 %v350
      %v625 = vunpack.c.l.b16 %v351
      %v626 = vunpack.c.l.b16 %v352
      %v627 = vunpack.c.h.b16 %v352
      %v628 = vunpack.c.l.b16 %v353
      %v629 = vunpack.c.h.b16 %v353
      %v630 = vunpack.c.l.b16 %v354
      %v631 = vunpack.c.l.b16 %v355
      %v632 = vunpack.c.h.b16 %v355
      %v633 = vunpack.c.l.b16 %v356
      %v634 = vunpack.c.h.b16 %v356
      %v635 = vunpack.c.l.b16 %v357
      %v636 = vunpack.c.l.b16 %v358
      %v637 = vunpack.c.h.b16 %v358
      %v638 = vunpack.c.l.b16 %v359
      %v639 = vunpack.c.h.b16 %v359
      %v640 = vunpack.c.l.b16 %v360
      %v641 = vunpack.c.l.b16 %v361
      %v642 = vunpack.c.h.b16 %v361
      %v643 = vunpack.c.l.b16 %v362
      %v644 = vunpack.c.h.b16 %v362
      %v645 = vunpack.c.l.b16 %v363
      %v646 = vunpack.c.l.b16 %v364
      %v647 = vunpack.c.h.b16 %v364
      %v648 = vunpack.c.l.b16 %v365
      %v649 = vunpack.c.h.b16 %v365
      %v650 = vunpack.c.l.b16 %v366
      %v651 = vunpack.c.l.b16 %v367
      %v652 = vunpack.c.h.b16 %v367
      %v653 = vunpack.c.l.b16 %v368
      %v654 = vunpack.c.h.b16 %v368
      %v655 = vunpack.c.l.b16 %v369
      %v656 = vunpack.c.l.b16 %v370
      %v657 = vunpack.c.h.b16 %v370
      %v658 = vunpack.c.l.b16 %v371
      %v659 = vunpack.c.h.b16 %v371
      %v660 = vunpack.c.l.b16 %v372
      %v661 = vunpack.c.l.b16 %v373
      %v662 = vunpack.c.h.b16 %v373
      %v663 = vunpack.c.l.b16 %v374
      %v664 = vunpack.c.h.b16 %v374
      %v665 = vunpack.c.l.b16 %v375
      %v666 = vunpack.c.l.b16 %v376
      %v667 = vunpack.c.h.b16 %v376
      %v668 = vunpack.c.l.b16 %v377
      %v669 = vunpack.c.h.b16 %v377
      %v670 = vunpack.c.l.b16 %v378
      %v671 = vunpack.c.l.b16 %v379
      %v672 = vunpack.c.h.b16 %v379
      %v673 = vunpack.c.l.b16 %v380
      %v674 = vunpack.c.h.b16 %v380
      %v675 = vunpack.c.l.b16 %v381
      %v676 = vunpack.c.l.b16 %v382
      %v677 = vunpack.c.h.b16 %v382
      %v678 = vunpack.c.l.b16 %v383
      %v679 = vunpack.c.h.b16 %v383
      %v680 = vunpack.c.l.b16 %v384
      %v681 = vunpack.c.l.b16 %v385
      %v682 = vunpack.c.h.b16 %v385
      %v683 = vunpack.c.l.b16 %v386
      %v684 = vunpack.c.h.b16 %v386
      %v685 = vunpack.c.l.b16 %v387
      %v686 = vunpack.c.l.b16 %v388
      %v687 = vunpack.c.h.b16 %v388
      %v688 = vunpack.c.l.b16 %v389
      %v689 = vunpack.c.h.b16 %v389
      %v690 = vunpack.c.l.b16 %v390
      %v691 = vunpack.c.l.b16 %v391
      %v692 = vunpack.c.h.b16 %v391
      %v693 = vunpack.c.l.b16 %v392
      %v694 = vunpack.c.h.b16 %v392
      %v695 = vunpack.c.l.b16 %v393
      %v696 = vunpack.c.l.b16 %v394
      %v697 = vunpack.c.h.b16 %v394
      %v698 = vunpack.c.l.b16 %v395
      %v699 = vunpack.c.h.b16 %v395
      %v700 = vunpack.c.l.b16 %v396
      %v701 = vunpack.c.l.b16 %v397
      %v702 = vunpack.c.h.b16 %v397
      %v703 = vunpack.c.l.b16 %v398
      %v704 = vunpack.c.h.b16 %v398
      %v705 = vunpack.c.l.b16 %v399
      %v706 = vunpack.c.l.b16 %v400
      %v707 = vunpack.c.h.b16 %v400
      %v708 = vunpack.c.l.b16 %v401
      %v709 = vunpack.c.h.b16 %v401
      %v710 = vunpack.c.l.b16 %v402
      %v711 = vunpack.c.l.b16 %v403
      %v712 = vunpack.c.h.b16 %v403
      %v713 = vunpack.c.l.b16 %v404
      %v714 = vunpack.c.h.b16 %v404
      %v715 = vunpack.c.l.b16 %v405
      %v716 = vunpack.c.l.b16 %v406
      %v717 = vunpack.c.h.b16 %v406
      %v718 = vunpack.c.l.b16 %v407
      %v719 = vunpack.c.h.b16 %v407
      %v720 = vunpack.c.l.b16 %v408
      %v721 = vunpack.c.l.b16 %v409
      %v722 = vunpack.c.h.b16 %v409
      %v723 = vunpack.c.l.b16 %v410
      %v724 = vunpack.c.h.b16 %v410
      %v725 = vunpack.c.l.b16 %v411
      %v726 = vunpack.c.l.b16 %v412
      %v727 = vunpack.c.h.b16 %v412
      %v728 = vunpack.c.l.b16 %v413
      %v729 = vunpack.c.h.b16 %v413
      %v730 = vunpack.c.l.b16 %v414
      %v731 = vunpack.c.l.b16 %v415
      %v732 = vunpack.c.h.b16 %v415
      %v733 = vunpack.c.l.b16 %v416
      %v734 = vunpack.c.h.b16 %v416
      %v735 = vunpack.c.l.b16 %v417
      %v736 = vunpack.c.l.b16 %v418
      %v737 = vunpack.c.h.b16 %v418
      %v738 = vunpack.c.l.b16 %v419
      %v739 = vunpack.c.h.b16 %v419
      %v740 = vunpack.c.l.b16 %v420
      %v741 = vunpack.c.l.b16 %v421
      %v742 = vunpack.c.h.b16 %v421
      %v743 = vunpack.c.l.b16 %v422
      %v744 = vunpack.c.h.b16 %v422
      %v745 = vunpack.c.l.b16 %v423
      %v746 = vunpack.c.l.b16 %v424
      %v747 = vunpack.c.h.b16 %v424
      %v748 = vunpack.c.l.b16 %v425
      %v749 = vunpack.c.h.b16 %v425
      %v750 = vunpack.c.l.b16 %v426
      %v751 = vunpack.c.l.b16 %v427
      %v752 = vunpack.c.h.b16 %v427
      %v753 = vunpack.c.l.b16 %v428
      %v754 = vunpack.c.h.b16 %v428
      %v755 = vunpack.c.l.b16 %v429
      %v756 = vunpack.c.l.b16 %v430
      %v757 = vunpack.c.h.b16 %v430
      %v758 = vunpack.c.l.b16 %v431
      %v759 = vunpack.c.h.b16 %v431
      %v760 = vunpack.c.l.b16 %v432
      %v761 = vpack.c.b16 %v606, %v601
      %v762 = vpack.c.b16 %v607, %v602
      %v763 = vpack.c.b16 %v608, %v603
      %v764 = vpack.c.b16 %v609, %v604
      %v765 = vpack.c.b16 %v610, %v605
      %v766 = vpack.c.b16 %v616, %v611
      %v767 = vpack.c.b16 %v617, %v612
      %v768 = vpack.c.b16 %v618, %v613
      %v769 = vpack.c.b16 %v619, %v614
      %v770 = vpack.c.b16 %v620, %v615
      %v771 = vpack.c.b16 %v626, %v621
      %v772 = vpack.c.b16 %v627, %v622
      %v773 = vpack.c.b16 %v628, %v623
      %v774 = vpack.c.b16 %v629, %v624
      %v775 = vpack.c.b16 %v630, %v625
      %v776 = vpack.c.b16 %v636, %v631
      %v777 = vpack.c.b16 %v637, %v632
      %v778 = vpack.c.b16 %v638, %v633
      %v779 = vpack.c.b16 %v639, %v634
      %v780 = vpack.c.b16 %v640, %v635
      %v781 = vpack.c.b16 %v646, %v641
      %v782 = vpack.c.b16 %v647, %v642
      %v783 = vpack.c.b16 %v648, %v643
      %v784 = vpack.c.b16 %v649, %v644
      %v785 = vpack.c.b16 %v650, %v645
      %v786 = vpack.c.b16 %v656, %v651
      %v787 = vpack.c.b16 %v657, %v652
      %v788 = vpack.c.b16 %v658, %v653
      %v789 = vpack.c.b16 %v659, %v654
      %v790 = vpack.c.b16 %v660, %v655
      %v791 = vpack.c.b16 %v666, %v661
      %v792 = vpack.c.b16 %v667, %v662
      %v793 = vpack.c.b16 %v668, %v663
      %v794 = vpack.c.b16 %v669, %v664
      %v795 = vpack.c.b16 %v670, %v665
      %v796 = vpack.c.b16 %v676, %v671
      %v797 = vpack.c.b16 %v677, %v672
      %v798 = vpack.c.b16 %v678, %v673
      %v799 = vpack.c.b16 %v679, %v674
      %v800 = vpack.c.b16 %v680, %v675
      %v801 = vpack.c.b16 %v686, %v681
      %v802 = vpack.c.b16 %v687, %v682
      %v803 = vpack.c.b16 %v688, %v683
      %v804 = vpack.c.b16 %v689, %v684
      %v805 = vpack.c.b16 %v690, %v685
      %v806 = vpack.c.b16 %v696, %v691
      %v807 = vpack.c.b16 %v697, %v692
      %v808 = vpack.c.b16 %v698, %v693
      %v809 = vpack.c.b16 %v699, %v694
      %v810 = vpack.c.b16 %v700, %v695
      %v811 = vpack.c.b16 %v706, %v701
      %v812 = vpack.c.b16 %v707, %v702
      %v813 = vpack.c.b16 %v708, %v703
      %v814 = vpack.c.b16 %v709, %v704
      %v815 = vpack.c.b16 %v710, %v705
      %v816 = vpack.c.b16 %v716, %v711
      %v817 = vpack.c.b16 %v717, %v712
      %v818 = vpack.c.b16 %v718, %v713
      %v819 = vpack.c.b16 %v719, %v714
      %v820 = vpack.c.b16 %v720, %v715
      %v821 = vpack.c.b16 %v726, %v721
      %v822 = vpack.c.b16 %v727, %v722
      %v823 = vpack.c.b16 %v728, %v723
      %v824 = vpack.c.b16 %v729, %v724
      %v825 = vpack.c.b16 %v730, %v725
      %v826 = vpack.c.b16 %v736, %v731
      %v827 = vpack.c.b16 %v737, %v732
      %v828 = vpack.c.b16 %v738, %v733
      %v829 = vpack.c.b16 %v739, %v734
      %v830 = vpack.c.b16 %v740, %v735
      %v831 = vpack.c.b16 %v746, %v741
      %v832 = vpack.c.b16 %v747, %v742
      %v833 = vpack.c.b16 %v748, %v743
      %v834 = vpack.c.b16 %v749, %v744
      %v835 = vpack.c.b16 %v750, %v745
      %v836 = vpack.c.b16 %v756, %v751
      %v837 = vpack.c.b16 %v757, %v752
      %v838 = vpack.c.b16 %v758, %v753
      %v839 = vpack.c.b16 %v759, %v754
      %v840 = vpack.c.b16 %v760, %v755
      %v977 = vunpack.c.l.b16 %v433
      %v978 = vunpack.c.l.b16 %v434
      %v979 = vunpack.c.l.b16 %v435
      %v980 = vunpack.c.l.b16 %v436
      %v981 = vunpack.c.l.b16 %v437
      %v982 = vunpack.c.l.b16 %v438
      %v983 = vunpack.c.l.b16 %v439
      %v984 = vunpack.c.l.b16 %v440
      %v985 = vunpack.c.l.b16 %v441
      %v986 = vunpack.c.l.b16 %v442
      %v987 = vunpack.c.l.b16 %v443
      %v988 = vunpack.c.l.b16 %v444
      %v989 = vunpack.c.l.b16 %v445
      %v990 = vunpack.c.l.b16 %v446
      %v991 = vunpack.c.l.b16 %v447
      %v992 = vunpack.c.l.b16 %v448
      %v993 = vunpack.c.l.b16 %v449
      %v994 = vunpack.c.l.b16 %v450
      %v995 = vunpack.c.l.b16 %v451
      %v996 = vunpack.c.l.b16 %v452
      %v997 = vunpack.c.l.b16 %v453
      %v998 = vunpack.c.l.b16 %v454
      %v999 = vunpack.c.l.b16 %v455
      %v1000 = vunpack.c.l.b16 %v456
      %v1001 = vunpack.c.l.b16 %v457
      %v1002 = vunpack.c.l.b16 %v458
      %v1003 = vunpack.c.l.b16 %v459
      %v1004 = vunpack.c.l.b16 %v460
      %v1005 = vunpack.c.l.b16 %v461
      %v1006 = vunpack.c.l.b16 %v462
      %v1007 = vunpack.c.l.b16 %v463
      %v1008 = vunpack.c.l.b16 %v464
      %v1009 = vunpack.c.l.b16 %v465
      %v1010 = vunpack.c.l.b16 %v466
      %v1011 = vunpack.c.l.b16 %v467
      %v1012 = vunpack.c.l.b16 %v468
      %v1013 = vunpack.c.l.b16 %v469
      %v1014 = vunpack.c.l.b16 %v470
      %v1015 = vunpack.c.l.b16 %v471
      %v1016 = vunpack.c.l.b16 %v472
      %v1017 = vunpack.c.l.b16 %v473
      %v1018 = vunpack.c.l.b16 %v474
      %v1019 = vunpack.c.l.b16 %v475
      %v1020 = vunpack.c.l.b16 %v476
      %v1021 = vunpack.c.l.b16 %v477
      %v1022 = vunpack.c.l.b16 %v478
      %v1023 = vunpack.c.l.b16 %v479
      %v1024 = vunpack.c.l.b16 %v480
      %v1025 = vunpack.c.l.b16 %v481
      %v1026 = vunpack.c.l.b16 %v482
      %v1027 = vunpack.c.l.b16 %v483
      %v1028 = vunpack.c.l.b16 %v484
      %v1029 = vunpack.c.l.b16 %v485
      %v1030 = vunpack.c.l.b16 %v486
      %v1031 = vunpack.c.l.b16 %v487
      %v1032 = vunpack.c.l.b16 %v488
      %v1033 = vunpack.c.l.b16 %v489
      %v1034 = vunpack.c.l.b16 %v490
      %v1035 = vunpack.c.l.b16 %v491
      %v1036 = vunpack.c.l.b16 %v492
      %v1037 = vunpack.c.l.b16 %v493
      %v1038 = vunpack.c.l.b16 %v494
      %v1039 = vunpack.c.l.b16 %v495
      %v1040 = vunpack.c.l.b16 %v496
      %v1041 = vunpack.c.l.b16 %v497
      %v1042 = vunpack.c.l.b16 %v498
      %v1043 = vunpack.c.l.b16 %v499
      %v1044 = vunpack.c.l.b16 %v500
      %v1045 = vunpack.c.l.b16 %v501
      %v1046 = vunpack.c.l.b16 %v502
      %v1047 = vunpack.c.l.b16 %v503
      %v1048 = vunpack.c.l.b16 %v504
      %v1049 = vpack.c.b16 %v978, %v977
      %v1050 = vpack.c.b16 %v980, %v979
      %v1051 = vpack.c.b16 %v982, %v981
      %v1052 = vpack.c.b16 %v984, %v983
      %v1053 = vpack.c.b16 %v986, %v985
      %v1054 = vpack.c.b16 %v988, %v987
      %v1055 = vpack.c.b16 %v990, %v989
      %v1056 = vpack.c.b16 %v992, %v991
      %v1057 = vpack.c.b16 %v994, %v993
      %v1058 = vpack.c.b16 %v996, %v995
      %v1059 = vpack.c.b16 %v998, %v997
      %v1060 = vpack.c.b16 %v1000, %v999
      %v1061 = vpack.c.b16 %v1002, %v1001
      %v1062 = vpack.c.b16 %v1004, %v1003
      %v1063 = vpack.c.b16 %v1006, %v1005
      %v1064 = vpack.c.b16 %v1008, %v1007
      %v1065 = vpack.c.b16 %v1010, %v1009
      %v1066 = vpack.c.b16 %v1012, %v1011
      %v1067 = vpack.c.b16 %v1014, %v1013
      %v1068 = vpack.c.b16 %v1016, %v1015
      %v1069 = vpack.c.b16 %v1018, %v1017
      %v1070 = vpack.c.b16 %v1020, %v1019
      %v1071 = vpack.c.b16 %v1022, %v1021
      %v1072 = vpack.c.b16 %v1024, %v1023
      %v1073 = vpack.c.b16 %v1026, %v1025
      %v1074 = vpack.c.b16 %v1028, %v1027
      %v1075 = vpack.c.b16 %v1030, %v1029
      %v1076 = vpack.c.b16 %v1032, %v1031
      %v1077 = vpack.c.b16 %v1034, %v1033
      %v1078 = vpack.c.b16 %v1036, %v1035
      %v1079 = vpack.c.b16 %v1038, %v1037
      %v1080 = vpack.c.b16 %v1040, %v1039
      %v1081 = vpack.c.b16 %v1042, %v1041
      %v1082 = vpack.c.b16 %v1044, %v1043
      %v1083 = vpack.c.b16 %v1046, %v1045
      %v1084 = vpack.c.b16 %v1048, %v1047
      %vm1121 = vcmask 523264
      %v1123 = vsel %vm1121, %v765, 0
      %v1126 = vsel %vm1121, %v770, 0
      %v1129 = vsel %vm1121, %v775, 0
      %v1132 = vsel %vm1121, %v780, 0
      %v1135 = vsel %vm1121, %v785, 0
      %v1138 = vsel %vm1121, %v790, 0
      %v1141 = vsel %vm1121, %v795, 0
      %v1144 = vsel %vm1121, %v800, 0
      %v1147 = vsel %vm1121, %v805, 0
      %v1150 = vsel %vm1121, %v810, 0
      %v1153 = vsel %vm1121, %v815, 0
      %v1156 = vsel %vm1121, %v820, 0
      %v1159 = vsel %vm1121, %v825, 0
      %v1162 = vsel %vm1121, %v830, 0
      %v1165 = vsel %vm1121, %v835, 0
      %v1168 = vsel %vm1121, %v840, 0
      %1170 = vmatprep.subr.bf16.mxu0 0
      %1171 = vmatpush1.bf16.msra.mxu0 %v1049
      %1172 = vmatprep.subr.bf16.mxu0 0
      %1173 = vmatpush1.bf16.msra.mxu0 %v1050
      %1174 = vmatprep.subr.bf16.mxu0 0
      %1175 = vmatpush1.bf16.msra.mxu0 %v1051
      %1176 = vmatprep.subr.bf16.mxu0 0
      %1177 = vmatpush1.bf16.msra.mxu0 %v1052
      %1178 = vmatprep.subr.bf16.mxu0 0
      %1179 = vmatpush1.bf16.msra.mxu0 %v1053
      %1180 = vmatprep.subr.bf16.mxu0 0
      %1181 = vmatpush1.bf16.msra.mxu0 %v1054
      %1182 = vmatprep.subr.bf16.mxu0 0
      %1183 = vmatpush1.bf16.msra.mxu0 %v1055
      %1184 = vmatprep.subr.bf16.mxu0 0
      %1185 = vmatpush1.bf16.msra.mxu0 %v1056
      %1186 = vmatprep.subr.bf16.mxu0 0
      %1187 = vmatpush1.bf16.msra.mxu0 %v1057
      %1188 = vmatprep.subr.bf16.mxu0 0
      %1189 = vmatpush1.bf16.msra.mxu0 %v1058
      %1190 = vmatprep.subr.bf16.mxu0 0
      %1191 = vmatpush1.bf16.msra.mxu0 %v1059
      %1192 = vmatprep.subr.bf16.mxu0 0
      %1193 = vmatpush1.bf16.msra.mxu0 %v1060
      %1194 = vmatprep.subr.bf16.mxu0 0
      %1195 = vmatpush1.bf16.msra.mxu0 %v1061
      %1196 = vmatprep.subr.bf16.mxu0 0
      %1197 = vmatpush1.bf16.msra.mxu0 %v1062
      %1198 = vmatprep.subr.bf16.mxu0 0
      %1199 = vmatpush1.bf16.msra.mxu0 %v1063
      %1200 = vmatprep.subr.bf16.mxu0 0
      %1201 = vmatpush1.bf16.msra.mxu0 %v1064
      %1202 = vmatprep.mubr.bf16.mxu0 %v762
      %1203 = vmatmul.mubr.bf16.gmra.mrb[0].mxu0 %v761
      %v1204 = vpop.f32.mrb[0].mxu0
      %v1205 = vadd.f32 0.0, %v1204
      %v1206 = vpop.f32.mrb[0].mxu0
      %v1207 = vpop.f32.mrb[0].mxu0
      %v1208 = vadd.f32 0.0, %v1207
      %v1209 = vpop.f32.mrb[0].mxu0
      %1210 = vmatprep.mubr.bf16.mxu0 %v767
      %1211 = vmatmul.mubr.bf16.gmra.mrb[0].mxu0 %v766
      %v1212 = vpop.f32.mrb[0].mxu0
      %v1213 = vadd.f32 0.0, %v1212
      %v1214 = vpop.f32.mrb[0].mxu0
      %v1215 = vpop.f32.mrb[0].mxu0
      %v1216 = vadd.f32 0.0, %v1215
      %v1217 = vpop.f32.mrb[0].mxu0
      %1218 = vmatprep.mubr.bf16.mxu0 %v772
      %1219 = vmatmul.mubr.bf16.gmra.mrb[0].mxu0 %v771
      %v1220 = vpop.f32.mrb[0].mxu0
      %v1221 = vadd.f32 0.0, %v1220
      %v1222 = vpop.f32.mrb[0].mxu0
      %v1223 = vpop.f32.mrb[0].mxu0
      %v1224 = vadd.f32 0.0, %v1223
      %v1225 = vpop.f32.mrb[0].mxu0
      %1226 = vmatprep.mubr.bf16.mxu0 %v777
      %1227 = vmatmul.mubr.bf16.gmra.mrb[0].mxu0 %v776
      %v1228 = vpop.f32.mrb[0].mxu0
      %v1229 = vadd.f32 0.0, %v1228
      %v1230 = vpop.f32.mrb[0].mxu0
      %v1231 = vpop.f32.mrb[0].mxu0
      %v1232 = vadd.f32 0.0, %v1231
      %v1233 = vpop.f32.mrb[0].mxu0
      %1234 = vmatprep.mubr.bf16.mxu0 %v782
      %1235 = vmatmul.mubr.bf16.gmra.mrb[0].mxu0 %v781
      %v1236 = vpop.f32.mrb[0].mxu0
      %v1237 = vadd.f32 0.0, %v1236
      %v1238 = vpop.f32.mrb[0].mxu0
      %v1239 = vpop.f32.mrb[0].mxu0
      %v1240 = vadd.f32 0.0, %v1239
      %v1241 = vpop.f32.mrb[0].mxu0
      %1242 = vmatprep.mubr.bf16.mxu0 %v787
      %1243 = vmatmul.mubr.bf16.gmra.mrb[0].mxu0 %v786
      %v1244 = vpop.f32.mrb[0].mxu0
      %v1245 = vadd.f32 0.0, %v1244
      %v1246 = vpop.f32.mrb[0].mxu0
      %v1247 = vpop.f32.mrb[0].mxu0
      %v1248 = vadd.f32 0.0, %v1247
      %v1249 = vpop.f32.mrb[0].mxu0
      %1250 = vmatprep.mubr.bf16.mxu0 %v792
      %1251 = vmatmul.mubr.bf16.gmra.mrb[0].mxu0 %v791
      %v1252 = vpop.f32.mrb[0].mxu0
      %v1253 = vadd.f32 0.0, %v1252
      %v1254 = vpop.f32.mrb[0].mxu0
      %v1255 = vpop.f32.mrb[0].mxu0
      %v1256 = vadd.f32 0.0, %v1255
      %v1257 = vpop.f32.mrb[0].mxu0
      %1258 = vmatprep.mubr.bf16.mxu0 %v797
      %1259 = vmatmul.mubr.bf16.gmra.mrb[0].mxu0 %v796
      %v1260 = vpop.f32.mrb[0].mxu0
      %v1261 = vadd.f32 0.0, %v1260
      %v1262 = vpop.f32.mrb[0].mxu0
      %v1263 = vpop.f32.mrb[0].mxu0
      %v1264 = vadd.f32 0.0, %v1263
      %v1265 = vpop.f32.mrb[0].mxu0
      %1266 = vmatprep.mubr.bf16.mxu0 %v802
      %1267 = vmatmul.mubr.bf16.gmra.mrb[0].mxu0 %v801
      %v1268 = vpop.f32.mrb[0].mxu0
      %v1269 = vadd.f32 0.0, %v1268
      %v1270 = vpop.f32.mrb[0].mxu0
      %v1271 = vpop.f32.mrb[0].mxu0
      %v1272 = vadd.f32 0.0, %v1271
      %v1273 = vpop.f32.mrb[0].mxu0
      %1274 = vmatprep.mubr.bf16.mxu0 %v807
      %1275 = vmatmul.mubr.bf16.gmra.mrb[0].mxu0 %v806
      %v1276 = vpop.f32.mrb[0].mxu0
      %v1277 = vadd.f32 0.0, %v1276
      %v1278 = vpop.f32.mrb[0].mxu0
      %v1279 = vpop.f32.mrb[0].mxu0
      %v1280 = vadd.f32 0.0, %v1279
      %v1281 = vpop.f32.mrb[0].mxu0
      %1282 = vmatprep.mubr.bf16.mxu0 %v812
      %1283 = vmatmul.mubr.bf16.gmra.mrb[0].mxu0 %v811
      %v1284 = vpop.f32.mrb[0].mxu0
      %v1285 = vadd.f32 0.0, %v1284
      %v1286 = vpop.f32.mrb[0].mxu0
      %v1287 = vpop.f32.mrb[0].mxu0
      %v1288 = vadd.f32 0.0, %v1287
      %v1289 = vpop.f32.mrb[0].mxu0
      %1290 = vmatprep.mubr.bf16.mxu0 %v817
      %1291 = vmatmul.mubr.bf16.gmra.mrb[0].mxu0 %v816
      %v1292 = vpop.f32.mrb[0].mxu0
      %v1293 = vadd.f32 0.0, %v1292
      %v1294 = vpop.f32.mrb[0].mxu0
      %v1295 = vpop.f32.mrb[0].mxu0
      %v1296 = vadd.f32 0.0, %v1295
      %v1297 = vpop.f32.mrb[0].mxu0
      %1298 = vmatprep.mubr.bf16.mxu0 %v822
      %1299 = vmatmul.mubr.bf16.gmra.mrb[0].mxu0 %v821
      %v1300 = vpop.f32.mrb[0].mxu0
      %v1301 = vadd.f32 0.0, %v1300
      %v1302 = vpop.f32.mrb[0].mxu0
      %v1303 = vpop.f32.mrb[0].mxu0
      %v1304 = vadd.f32 0.0, %v1303
      %v1305 = vpop.f32.mrb[0].mxu0
      %1306 = vmatprep.mubr.bf16.mxu0 %v827
      %1307 = vmatmul.mubr.bf16.gmra.mrb[0].mxu0 %v826
      %v1308 = vpop.f32.mrb[0].mxu0
      %v1309 = vadd.f32 0.0, %v1308
      %v1310 = vpop.f32.mrb[0].mxu0
      %v1311 = vpop.f32.mrb[0].mxu0
      %v1312 = vadd.f32 0.0, %v1311
      %v1313 = vpop.f32.mrb[0].mxu0
      %1314 = vmatprep.mubr.bf16.mxu0 %v832
      %1315 = vmatmul.mubr.bf16.gmra.mrb[0].mxu0 %v831
      %v1316 = vpop.f32.mrb[0].mxu0
      %v1317 = vadd.f32 0.0, %v1316
      %v1318 = vpop.f32.mrb[0].mxu0
      %v1319 = vpop.f32.mrb[0].mxu0
      %v1320 = vadd.f32 0.0, %v1319
      %v1321 = vpop.f32.mrb[0].mxu0
      %1322 = vmatprep.mubr.bf16.mxu0 %v837
      %1323 = vmatmul.mubr.bf16.gmra.mrb[0].mxu0 %v836
      %v1324 = vpop.f32.mrb[0].mxu0
      %v1325 = vadd.f32 0.0, %v1324
      %v1326 = vpop.f32.mrb[0].mxu0
      %v1327 = vpop.f32.mrb[0].mxu0
      %v1328 = vadd.f32 0.0, %v1327
      %v1329 = vpop.f32.mrb[0].mxu0
      %1330 = vdwg.mxu0
      %1331 = vmatprep.subr.bf16.mxu0 0
      %1332 = vmatpush1.bf16.msra.mxu0 %v1065
      %1333 = vmatprep.subr.bf16.mxu0 0
      %1334 = vmatpush1.bf16.msra.mxu0 %v1066
      %1335 = vmatprep.subr.bf16.mxu0 0
      %1336 = vmatpush1.bf16.msra.mxu0 %v1067
      %1337 = vmatprep.subr.bf16.mxu0 0
      %1338 = vmatpush1.bf16.msra.mxu0 %v1068
      %1339 = vmatprep.subr.bf16.mxu0 0
      %1340 = vmatpush1.bf16.msra.mxu0 %v1069
      %1341 = vmatprep.subr.bf16.mxu0 0
      %1342 = vmatpush1.bf16.msra.mxu0 %v1070
      %1343 = vmatprep.subr.bf16.mxu0 0
      %1344 = vmatpush1.bf16.msra.mxu0 %v1071
      %1345 = vmatprep.subr.bf16.mxu0 0
      %1346 = vmatpush1.bf16.msra.mxu0 %v1072
      %1347 = vmatprep.subr.bf16.mxu0 0
      %1348 = vmatpush1.bf16.msra.mxu0 %v1073
      %1349 = vmatprep.subr.bf16.mxu0 0
      %1350 = vmatpush1.bf16.msra.mxu0 %v1074
      %1351 = vmatprep.subr.bf16.mxu0 0
      %1352 = vmatpush1.bf16.msra.mxu0 %v1075
      %1353 = vmatprep.subr.bf16.mxu0 0
      %1354 = vmatpush1.bf16.msra.mxu0 %v1076
      %1355 = vmatprep.subr.bf16.mxu0 0
      %1356 = vmatpush1.bf16.msra.mxu0 %v1077
      %1357 = vmatprep.subr.bf16.mxu0 0
      %1358 = vmatpush1.bf16.msra.mxu0 %v1078
      %1359 = vmatprep.subr.bf16.mxu0 0
      %1360 = vmatpush1.bf16.msra.mxu0 %v1079
      %1361 = vmatprep.subr.bf16.mxu0 0
      %1362 = vmatpush1.bf16.msra.mxu0 %v1080
      %1363 = vmatprep.mubr.bf16.mxu0 %v764
      %1364 = vmatmul.mubr.bf16.gmra.mrb[0].mxu0 %v763
      %v1365 = vpop.f32.mrb[0].mxu0
      %v1366 = vadd.f32 %v1205, %v1365
      %v1367 = vpop.f32.mrb[0].mxu0
      %v1368 = vpop.f32.mrb[0].mxu0
      %v1369 = vadd.f32 %v1208, %v1368
      %v1370 = vpop.f32.mrb[0].mxu0
      %1371 = vmatprep.mubr.bf16.mxu0 %v769
      %1372 = vmatmul.mubr.bf16.gmra.mrb[0].mxu0 %v768
      %v1373 = vpop.f32.mrb[0].mxu0
      %v1374 = vadd.f32 %v1213, %v1373
      %v1375 = vpop.f32.mrb[0].mxu0
      %v1376 = vpop.f32.mrb[0].mxu0
      %v1377 = vadd.f32 %v1216, %v1376
      %v1378 = vpop.f32.mrb[0].mxu0
      %1379 = vmatprep.mubr.bf16.mxu0 %v774
      %1380 = vmatmul.mubr.bf16.gmra.mrb[0].mxu0 %v773
      %v1381 = vpop.f32.mrb[0].mxu0
      %v1382 = vadd.f32 %v1221, %v1381
      %v1383 = vpop.f32.mrb[0].mxu0
      %v1384 = vpop.f32.mrb[0].mxu0
      %v1385 = vadd.f32 %v1224, %v1384
      %v1386 = vpop.f32.mrb[0].mxu0
      %1387 = vmatprep.mubr.bf16.mxu0 %v779
      %1388 = vmatmul.mubr.bf16.gmra.mrb[0].mxu0 %v778
      %v1389 = vpop.f32.mrb[0].mxu0
      %v1390 = vadd.f32 %v1229, %v1389
      %v1391 = vpop.f32.mrb[0].mxu0
      %v1392 = vpop.f32.mrb[0].mxu0
      %v1393 = vadd.f32 %v1232, %v1392
      %v1394 = vpop.f32.mrb[0].mxu0
      %1395 = vmatprep.mubr.bf16.mxu0 %v784
      %1396 = vmatmul.mubr.bf16.gmra.mrb[0].mxu0 %v783
      %v1397 = vpop.f32.mrb[0].mxu0
      %v1398 = vadd.f32 %v1237, %v1397
      %v1399 = vpop.f32.mrb[0].mxu0
      %v1400 = vpop.f32.mrb[0].mxu0
      %v1401 = vadd.f32 %v1240, %v1400
      %v1402 = vpop.f32.mrb[0].mxu0
      %1403 = vmatprep.mubr.bf16.mxu0 %v789
      %1404 = vmatmul.mubr.bf16.gmra.mrb[0].mxu0 %v788
      %v1405 = vpop.f32.mrb[0].mxu0
      %v1406 = vadd.f32 %v1245, %v1405
      %v1407 = vpop.f32.mrb[0].mxu0
      %v1408 = vpop.f32.mrb[0].mxu0
      %v1409 = vadd.f32 %v1248, %v1408
      %v1410 = vpop.f32.mrb[0].mxu0
      %1411 = vmatprep.mubr.bf16.mxu0 %v794
      %1412 = vmatmul.mubr.bf16.gmra.mrb[0].mxu0 %v793
      %v1413 = vpop.f32.mrb[0].mxu0
      %v1414 = vadd.f32 %v1253, %v1413
      %v1415 = vpop.f32.mrb[0].mxu0
      %v1416 = vpop.f32.mrb[0].mxu0
      %v1417 = vadd.f32 %v1256, %v1416
      %v1418 = vpop.f32.mrb[0].mxu0
      %1419 = vmatprep.mubr.bf16.mxu0 %v799
      %1420 = vmatmul.mubr.bf16.gmra.mrb[0].mxu0 %v798
      %v1421 = vpop.f32.mrb[0].mxu0
      %v1422 = vadd.f32 %v1261, %v1421
      %v1423 = vpop.f32.mrb[0].mxu0
      %v1424 = vpop.f32.mrb[0].mxu0
      %v1425 = vadd.f32 %v1264, %v1424
      %v1426 = vpop.f32.mrb[0].mxu0
      %1427 = vmatprep.mubr.bf16.mxu0 %v804
      %1428 = vmatmul.mubr.bf16.gmra.mrb[0].mxu0 %v803
      %v1429 = vpop.f32.mrb[0].mxu0
      %v1430 = vadd.f32 %v1269, %v1429
      %v1431 = vpop.f32.mrb[0].mxu0
      %v1432 = vpop.f32.mrb[0].mxu0
      %v1433 = vadd.f32 %v1272, %v1432
      %v1434 = vpop.f32.mrb[0].mxu0
      %1435 = vmatprep.mubr.bf16.mxu0 %v809
      %1436 = vmatmul.mubr.bf16.gmra.mrb[0].mxu0 %v808
      %v1437 = vpop.f32.mrb[0].mxu0
      %v1438 = vadd.f32 %v1277, %v1437
      %v1439 = vpop.f32.mrb[0].mxu0
      %v1440 = vpop.f32.mrb[0].mxu0
      %v1441 = vadd.f32 %v1280, %v1440
      %v1442 = vpop.f32.mrb[0].mxu0
      %1443 = vmatprep.mubr.bf16.mxu0 %v814
      %1444 = vmatmul.mubr.bf16.gmra.mrb[0].mxu0 %v813
      %v1445 = vpop.f32.mrb[0].mxu0
      %v1446 = vadd.f32 %v1285, %v1445
      %v1447 = vpop.f32.mrb[0].mxu0
      %v1448 = vpop.f32.mrb[0].mxu0
      %v1449 = vadd.f32 %v1288, %v1448
      %v1450 = vpop.f32.mrb[0].mxu0
      %1451 = vmatprep.mubr.bf16.mxu0 %v819
      %1452 = vmatmul.mubr.bf16.gmra.mrb[0].mxu0 %v818
      %v1453 = vpop.f32.mrb[0].mxu0
      %v1454 = vadd.f32 %v1293, %v1453
      %v1455 = vpop.f32.mrb[0].mxu0
      %v1456 = vpop.f32.mrb[0].mxu0
      %v1457 = vadd.f32 %v1296, %v1456
      %v1458 = vpop.f32.mrb[0].mxu0
      %1459 = vmatprep.mubr.bf16.mxu0 %v824
      %1460 = vmatmul.mubr.bf16.gmra.mrb[0].mxu0 %v823
      %v1461 = vpop.f32.mrb[0].mxu0
      %v1462 = vadd.f32 %v1301, %v1461
      %v1463 = vpop.f32.mrb[0].mxu0
      %v1464 = vpop.f32.mrb[0].mxu0
      %v1465 = vadd.f32 %v1304, %v1464
      %v1466 = vpop.f32.mrb[0].mxu0
      %1467 = vmatprep.mubr.bf16.mxu0 %v829
      %1468 = vmatmul.mubr.bf16.gmra.mrb[0].mxu0 %v828
      %v1469 = vpop.f32.mrb[0].mxu0
      %v1470 = vadd.f32 %v1309, %v1469
      %v1471 = vpop.f32.mrb[0].mxu0
      %v1472 = vpop.f32.mrb[0].mxu0
      %v1473 = vadd.f32 %v1312, %v1472
      %v1474 = vpop.f32.mrb[0].mxu0
      %1475 = vmatprep.mubr.bf16.mxu0 %v834
      %1476 = vmatmul.mubr.bf16.gmra.mrb[0].mxu0 %v833
      %v1477 = vpop.f32.mrb[0].mxu0
      %v1478 = vadd.f32 %v1317, %v1477
      %v1479 = vpop.f32.mrb[0].mxu0
      %v1480 = vpop.f32.mrb[0].mxu0
      %v1481 = vadd.f32 %v1320, %v1480
      %v1482 = vpop.f32.mrb[0].mxu0
      %1483 = vmatprep.mubr.bf16.mxu0 %v839
      %1484 = vmatmul.mubr.bf16.gmra.mrb[0].mxu0 %v838
      %v1485 = vpop.f32.mrb[0].mxu0
      %v1486 = vadd.f32 %v1325, %v1485
      %v1487 = vpop.f32.mrb[0].mxu0
      %v1488 = vpop.f32.mrb[0].mxu0
      %v1489 = vadd.f32 %v1328, %v1488
      %v1490 = vpop.f32.mrb[0].mxu0
      %1491 = vdwg.mxu0
      %1492 = vmatprep.subr.bf16.mxu0 0
      %1493 = vmatpush1.bf16.msra.mxu0 %v1081
      %1494 = vmatprep.subr.bf16.mxu0 0
      %1495 = vmatpush1.bf16.msra.mxu0 %v1082
      %1496 = vmatprep.subr.bf16.mxu0 0
      %1497 = vmatpush1.bf16.msra.mxu0 %v1083
      %1498 = vmatprep.subr.bf16.mxu0 0
      %1499 = vmatpush1.bf16.msra.mxu0 %v1084
      %1500 = vmatprep.subr.bf16.mxu0 0
      %1501 = vmatpush1.bf16.msra.mxu0 0
      %1502 = vmatprep.subr.bf16.mxu0 0
      %1503 = vmatpush1.bf16.msra.mxu0 0
      %1504 = vmatprep.subr.bf16.mxu0 0
      %1505 = vmatpush1.bf16.msra.mxu0 0
      %1506 = vmatprep.subr.bf16.mxu0 0
      %1507 = vmatpush1.bf16.msra.mxu0 0
      %1508 = vmatprep.subr.bf16.mxu0 0
      %1509 = vmatpush1.bf16.msra.mxu0 0
      %1510 = vmatprep.subr.bf16.mxu0 0
      %1511 = vmatpush1.bf16.msra.mxu0 0
      %1512 = vmatprep.subr.bf16.mxu0 0
      %1513 = vmatpush1.bf16.msra.mxu0 0
      %1514 = vmatprep.subr.bf16.mxu0 0
      %1515 = vmatpush1.bf16.msra.mxu0 0
      %1516 = vmatprep.subr.bf16.mxu0 0
      %1517 = vmatpush1.bf16.msra.mxu0 0
      %1518 = vmatprep.subr.bf16.mxu0 0
      %1519 = vmatpush1.bf16.msra.mxu0 0
      %1520 = vmatprep.subr.bf16.mxu0 0
      %1521 = vmatpush1.bf16.msra.mxu0 0
      %1522 = vmatprep.subr.bf16.mxu0 0
      %1523 = vmatpush1.bf16.msra.mxu0 0
      %1524 = vmatprep.mubr.bf16.mxu0 0
      %1525 = vmatmul.mubr.bf16.gmra.mrb[0].mxu0 %v1123
      %v1526 = vpop.f32.mrb[0].mxu0
      %v1527 = vadd.f32 %v1366, %v1526
      %v1528 = vpop.f32.mrb[0].mxu0
      %v1529 = vpop.f32.mrb[0].mxu0
      %v1530 = vadd.f32 %v1369, %v1529
      %v1531 = vpop.f32.mrb[0].mxu0
      %1532 = vmatprep.mubr.bf16.mxu0 0
      %1533 = vmatmul.mubr.bf16.gmra.mrb[0].mxu0 %v1126
      %v1534 = vpop.f32.mrb[0].mxu0
      %v1535 = vadd.f32 %v1374, %v1534
      %v1536 = vpop.f32.mrb[0].mxu0
      %v1537 = vpop.f32.mrb[0].mxu0
      %v1538 = vadd.f32 %v1377, %v1537
      %v1539 = vpop.f32.mrb[0].mxu0
      %1540 = vmatprep.mubr.bf16.mxu0 0
      %1541 = vmatmul.mubr.bf16.gmra.mrb[0].mxu0 %v1129
      %v1542 = vpop.f32.mrb[0].mxu0
      %v1543 = vadd.f32 %v1382, %v1542
      %v1544 = vpop.f32.mrb[0].mxu0
      %v1545 = vpop.f32.mrb[0].mxu0
      %v1546 = vadd.f32 %v1385, %v1545
      %v1547 = vpop.f32.mrb[0].mxu0
      %1548 = vmatprep.mubr.bf16.mxu0 0
      %1549 = vmatmul.mubr.bf16.gmra.mrb[0].mxu0 %v1132
      %v1550 = vpop.f32.mrb[0].mxu0
      %v1551 = vadd.f32 %v1390, %v1550
      %v1552 = vpop.f32.mrb[0].mxu0
      %v1553 = vpop.f32.mrb[0].mxu0
      %v1554 = vadd.f32 %v1393, %v1553
      %v1555 = vpop.f32.mrb[0].mxu0
      %1556 = vmatprep.mubr.bf16.mxu0 0
      %1557 = vmatmul.mubr.bf16.gmra.mrb[0].mxu0 %v1135
      %v1558 = vpop.f32.mrb[0].mxu0
      %v1559 = vadd.f32 %v1398, %v1558
      %v1560 = vpop.f32.mrb[0].mxu0
      %v1561 = vpop.f32.mrb[0].mxu0
      %v1562 = vadd.f32 %v1401, %v1561
      %v1563 = vpop.f32.mrb[0].mxu0
      %1564 = vmatprep.mubr.bf16.mxu0 0
      %1565 = vmatmul.mubr.bf16.gmra.mrb[0].mxu0 %v1138
      %v1566 = vpop.f32.mrb[0].mxu0
      %v1567 = vadd.f32 %v1406, %v1566
      %v1568 = vpop.f32.mrb[0].mxu0
      %v1569 = vpop.f32.mrb[0].mxu0
      %v1570 = vadd.f32 %v1409, %v1569
      %v1571 = vpop.f32.mrb[0].mxu0
      %1572 = vmatprep.mubr.bf16.mxu0 0
      %1573 = vmatmul.mubr.bf16.gmra.mrb[0].mxu0 %v1141
      %v1574 = vpop.f32.mrb[0].mxu0
      %v1575 = vadd.f32 %v1414, %v1574
      %v1576 = vpop.f32.mrb[0].mxu0
      %v1577 = vpop.f32.mrb[0].mxu0
      %v1578 = vadd.f32 %v1417, %v1577
      %v1579 = vpop.f32.mrb[0].mxu0
      %1580 = vmatprep.mubr.bf16.mxu0 0
      %1581 = vmatmul.mubr.bf16.gmra.mrb[0].mxu0 %v1144
      %v1582 = vpop.f32.mrb[0].mxu0
      %v1583 = vadd.f32 %v1422, %v1582
      %v1584 = vpop.f32.mrb[0].mxu0
      %v1585 = vpop.f32.mrb[0].mxu0
      %v1586 = vadd.f32 %v1425, %v1585
      %v1587 = vpop.f32.mrb[0].mxu0
      %1588 = vmatprep.mubr.bf16.mxu0 0
      %1589 = vmatmul.mubr.bf16.gmra.mrb[0].mxu0 %v1147
      %v1590 = vpop.f32.mrb[0].mxu0
      %v1591 = vadd.f32 %v1430, %v1590
      %v1592 = vpop.f32.mrb[0].mxu0
      %v1593 = vpop.f32.mrb[0].mxu0
      %v1594 = vadd.f32 %v1433, %v1593
      %v1595 = vpop.f32.mrb[0].mxu0
      %1596 = vmatprep.mubr.bf16.mxu0 0
      %1597 = vmatmul.mubr.bf16.gmra.mrb[0].mxu0 %v1150
      %v1598 = vpop.f32.mrb[0].mxu0
      %v1599 = vadd.f32 %v1438, %v1598
      %v1600 = vpop.f32.mrb[0].mxu0
      %v1601 = vpop.f32.mrb[0].mxu0
      %v1602 = vadd.f32 %v1441, %v1601
      %v1603 = vpop.f32.mrb[0].mxu0
      %1604 = vmatprep.mubr.bf16.mxu0 0
      %1605 = vmatmul.mubr.bf16.gmra.mrb[0].mxu0 %v1153
      %v1606 = vpop.f32.mrb[0].mxu0
      %v1607 = vadd.f32 %v1446, %v1606
      %v1608 = vpop.f32.mrb[0].mxu0
      %v1609 = vpop.f32.mrb[0].mxu0
      %v1610 = vadd.f32 %v1449, %v1609
      %v1611 = vpop.f32.mrb[0].mxu0
      %1612 = vmatprep.mubr.bf16.mxu0 0
      %1613 = vmatmul.mubr.bf16.gmra.mrb[0].mxu0 %v1156
      %v1614 = vpop.f32.mrb[0].mxu0
      %v1615 = vadd.f32 %v1454, %v1614
      %v1616 = vpop.f32.mrb[0].mxu0
      %v1617 = vpop.f32.mrb[0].mxu0
      %v1618 = vadd.f32 %v1457, %v1617
      %v1619 = vpop.f32.mrb[0].mxu0
      %1620 = vmatprep.mubr.bf16.mxu0 0
      %1621 = vmatmul.mubr.bf16.gmra.mrb[0].mxu0 %v1159
      %v1622 = vpop.f32.mrb[0].mxu0
      %v1623 = vadd.f32 %v1462, %v1622
      %v1624 = vpop.f32.mrb[0].mxu0
      %v1625 = vpop.f32.mrb[0].mxu0
      %v1626 = vadd.f32 %v1465, %v1625
      %v1627 = vpop.f32.mrb[0].mxu0
      %1628 = vmatprep.mubr.bf16.mxu0 0
      %1629 = vmatmul.mubr.bf16.gmra.mrb[0].mxu0 %v1162
      %v1630 = vpop.f32.mrb[0].mxu0
      %v1631 = vadd.f32 %v1470, %v1630
      %v1632 = vpop.f32.mrb[0].mxu0
      %v1633 = vpop.f32.mrb[0].mxu0
      %v1634 = vadd.f32 %v1473, %v1633
      %v1635 = vpop.f32.mrb[0].mxu0
      %1636 = vmatprep.mubr.bf16.mxu0 0
      %1637 = vmatmul.mubr.bf16.gmra.mrb[0].mxu0 %v1165
      %v1638 = vpop.f32.mrb[0].mxu0
      %v1639 = vadd.f32 %v1478, %v1638
      %v1640 = vpop.f32.mrb[0].mxu0
      %v1641 = vpop.f32.mrb[0].mxu0
      %v1642 = vadd.f32 %v1481, %v1641
      %v1643 = vpop.f32.mrb[0].mxu0
      %1644 = vmatprep.mubr.bf16.mxu0 0
      %1645 = vmatmul.mubr.bf16.gmra.mrb[0].mxu0 %v1168
      %v1646 = vpop.f32.mrb[0].mxu0
      %v1647 = vadd.f32 %v1486, %v1646
      %v1648 = vpop.f32.mrb[0].mxu0
      %v1649 = vpop.f32.mrb[0].mxu0
      %v1650 = vadd.f32 %v1489, %v1649
      %v1651 = vpop.f32.mrb[0].mxu0
      %1652 = vdwg.mxu0
      %v1653 = vadd.f32 %v305, %v1527
      %v1654 = vadd.f32 %v306, %v1530
      %v1655 = vadd.f32 %v307, %v1535
      %v1656 = vadd.f32 %v308, %v1538
      %v1657 = vadd.f32 %v309, %v1543
      %v1658 = vadd.f32 %v310, %v1546
      %v1659 = vadd.f32 %v311, %v1551
      %v1660 = vadd.f32 %v312, %v1554
      %v1661 = vadd.f32 %v313, %v1559
      %v1662 = vadd.f32 %v314, %v1562
      %v1663 = vadd.f32 %v315, %v1567
      %v1664 = vadd.f32 %v316, %v1570
      %v1665 = vadd.f32 %v317, %v1575
      %v1666 = vadd.f32 %v318, %v1578
      %v1667 = vadd.f32 %v319, %v1583
      %v1668 = vadd.f32 %v320, %v1586
      %v1669 = vadd.f32 %v321, %v1591
      %v1670 = vadd.f32 %v322, %v1594
      %v1671 = vadd.f32 %v323, %v1599
      %v1672 = vadd.f32 %v324, %v1602
      %v1673 = vadd.f32 %v325, %v1607
      %v1674 = vadd.f32 %v326, %v1610
      %v1675 = vadd.f32 %v327, %v1615
      %v1676 = vadd.f32 %v328, %v1618
      %v1677 = vadd.f32 %v329, %v1623
      %v1678 = vadd.f32 %v330, %v1626
      %v1679 = vadd.f32 %v331, %v1631
      %v1680 = vadd.f32 %v332, %v1634
      %v1681 = vadd.f32 %v333, %v1639
      %v1682 = vadd.f32 %v334, %v1642
      %v1683 = vadd.f32 %v335, %v1647
      %v1684 = vadd.f32 %v336, %v1650
      %1685 = vst.msk [vmem:[#allocation2] sm:$0xff] %vm1121, %v1653
      %1686 = vst.msk [vmem:[#allocation2 + $0x8] sm:$0xff] %vm1121, %v1654
      %1687 = vst.msk [vmem:[#allocation2 + $0x10] sm:$0xff] %vm1121, %v1655
      %1688 = vst.msk [vmem:[#allocation2 + $0x18] sm:$0xff] %vm1121, %v1656
      %1689 = vst.msk [vmem:[#allocation2 + $0x20] sm:$0xff] %vm1121, %v1657
      %1690 = vst.msk [vmem:[#allocation2 + $0x28] sm:$0xff] %vm1121, %v1658
      %1691 = vst.msk [vmem:[#allocation2 + $0x30] sm:$0xff] %vm1121, %v1659
      %1692 = vst.msk [vmem:[#allocation2 + $0x38] sm:$0xff] %vm1121, %v1660
      %1693 = vst.msk [vmem:[#allocation2 + $0x40] sm:$0xff] %vm1121, %v1661
      %1694 = vst.msk [vmem:[#allocation2 + $0x48] sm:$0xff] %vm1121, %v1662
      %1695 = vst.msk [vmem:[#allocation2 + $0x50] sm:$0xff] %vm1121, %v1663
      %1696 = vst.msk [vmem:[#allocation2 + $0x58] sm:$0xff] %vm1121, %v1664
      %1697 = vst.msk [vmem:[#allocation2 + $0x60] sm:$0xff] %vm1121, %v1665
      %1698 = vst.msk [vmem:[#allocation2 + $0x68] sm:$0xff] %vm1121, %v1666
      %1699 = vst.msk [vmem:[#allocation2 + $0x70] sm:$0xff] %vm1121, %v1667
      %1700 = vst.msk [vmem:[#allocation2 + $0x78] sm:$0xff] %vm1121, %v1668
      %1701 = vst.msk [vmem:[#allocation2 + $0x80] sm:$0xff] %vm1121, %v1669
      %1702 = vst.msk [vmem:[#allocation2 + $0x88] sm:$0xff] %vm1121, %v1670
      %1703 = vst.msk [vmem:[#allocation2 + $0x90] sm:$0xff] %vm1121, %v1671
      %1704 = vst.msk [vmem:[#allocation2 + $0x98] sm:$0xff] %vm1121, %v1672
      %1705 = vst.msk [vmem:[#allocation2 + $0xa0] sm:$0xff] %vm1121, %v1673
      %1706 = vst.msk [vmem:[#allocation2 + $0xa8] sm:$0xff] %vm1121, %v1674
      %1707 = vst.msk [vmem:[#allocation2 + $0xb0] sm:$0xff] %vm1121, %v1675
      %1708 = vst.msk [vmem:[#allocation2 + $0xb8] sm:$0xff] %vm1121, %v1676
      %1709 = vst.msk [vmem:[#allocation2 + $0xc0] sm:$0xff] %vm1121, %v1677
      %1710 = vst.msk [vmem:[#allocation2 + $0xc8] sm:$0xff] %vm1121, %v1678
      %1711 = vst.msk [vmem:[#allocation2 + $0xd0] sm:$0xff] %vm1121, %v1679
      %1712 = vst.msk [vmem:[#allocation2 + $0xd8] sm:$0xff] %vm1121, %v1680
      %1713 = vst.msk [vmem:[#allocation2 + $0xe0] sm:$0xff] %vm1121, %v1681
      %1714 = vst.msk [vmem:[#allocation2 + $0xe8] sm:$0xff] %vm1121, %v1682
      %1715 = vst.msk [vmem:[#allocation2 + $0xf0] sm:$0xff] %vm1121, %v1683
      %1716 = vst.msk [vmem:[#allocation2 + $0xf8] sm:$0xff] %vm1121, %v1684
      // Predicated region
      $region37: #{bottleneck_forward.4} parent=31 // pred_check
        %p1717 = pneg %p268
      $region38: #{bottleneck_forward.4} parent=31 // pred_check_branch
        %1719 = sbr.rel (%p1717) target = $region40
      $region39: #{bottleneck_forward.4} parent=31 // pred_region
        %v1720 = vld [vmem:[#allocation2] sm:$0xff]
        %v1721 = vld [vmem:[#allocation2 + $0x8] sm:$0xff]
        %v1722 = vld [vmem:[#allocation2 + $0x10] sm:$0xff]
        %v1723 = vld [vmem:[#allocation2 + $0x18] sm:$0xff]
        %v1724 = vld [vmem:[#allocation2 + $0x20] sm:$0xff]
        %v1725 = vld [vmem:[#allocation2 + $0x28] sm:$0xff]
        %v1726 = vld [vmem:[#allocation2 + $0x30] sm:$0xff]
        %v1727 = vld [vmem:[#allocation2 + $0x38] sm:$0xff]
        %v1728 = vld [vmem:[#allocation2 + $0x40] sm:$0xff]
        %v1729 = vld [vmem:[#allocation2 + $0x48] sm:$0xff]
        %v1730 = vld [vmem:[#allocation2 + $0x50] sm:$0xff]
        %v1731 = vld [vmem:[#allocation2 + $0x58] sm:$0xff]
        %v1732 = vld [vmem:[#allocation2 + $0x60] sm:$0xff]
        %v1733 = vld [vmem:[#allocation2 + $0x68] sm:$0xff]
        %v1734 = vld [vmem:[#allocation2 + $0x70] sm:$0xff]
        %v1735 = vld [vmem:[#allocation2 + $0x78] sm:$0xff]
        %v1736 = vld [vmem:[#allocation2 + $0x80] sm:$0xff]
        %v1737 = vld [vmem:[#allocation2 + $0x88] sm:$0xff]
        %v1738 = vld [vmem:[#allocation2 + $0x90] sm:$0xff]
        %v1739 = vld [vmem:[#allocation2 + $0x98] sm:$0xff]
        %v1740 = vld [vmem:[#allocation2 + $0xa0] sm:$0xff]
        %v1741 = vld [vmem:[#allocation2 + $0xa8] sm:$0xff]
        %v1742 = vld [vmem:[#allocation2 + $0xb0] sm:$0xff]
        %v1743 = vld [vmem:[#allocation2 + $0xb8] sm:$0xff]
        %v1744 = vld [vmem:[#allocation2 + $0xc0] sm:$0xff]
        %v1745 = vld [vmem:[#allocation2 + $0xc8] sm:$0xff]
        %v1746 = vld [vmem:[#allocation2 + $0xd0] sm:$0xff]
        %v1747 = vld [vmem:[#allocation2 + $0xd8] sm:$0xff]
        %v1748 = vld [vmem:[#allocation2 + $0xe0] sm:$0xff]
        %v1749 = vld [vmem:[#allocation2 + $0xe8] sm:$0xff]
        %v1750 = vld [vmem:[#allocation2 + $0xf0] sm:$0xff]
        %v1751 = vld [vmem:[#allocation2 + $0xf8] sm:$0xff]
        %v1752 = vld [vmem:[%s257] sm:$0x1]
        %v1754 = vlaneseq
        %v1755 = vshrl.u32 %v1754, 7
        %v1756 = vsub.s32 0, %v1755
        %v1757 = vrot.slane %v1752, %v1756
        %v1759 = vadd.f32 %v1720, %v1757
        %v1760 = vadd.f32 %v1721, %v1757
        %v1761 = vadd.f32 %v1722, %v1757
        %v1762 = vadd.f32 %v1723, %v1757
        %v1763 = vadd.f32 %v1724, %v1757
        %v1764 = vadd.f32 %v1725, %v1757
        %v1765 = vadd.f32 %v1726, %v1757
        %v1766 = vadd.f32 %v1727, %v1757
        %v1767 = vadd.f32 %v1728, %v1757
        %v1768 = vadd.f32 %v1729, %v1757
        %v1769 = vadd.f32 %v1730, %v1757
        %v1770 = vadd.f32 %v1731, %v1757
        %v1771 = vadd.f32 %v1732, %v1757
        %v1772 = vadd.f32 %v1733, %v1757
        %v1773 = vadd.f32 %v1734, %v1757
        %v1774 = vadd.f32 %v1735, %v1757
        %v1775 = vadd.f32 %v1736, %v1757
        %v1776 = vadd.f32 %v1737, %v1757
        %v1777 = vadd.f32 %v1738, %v1757
        %v1778 = vadd.f32 %v1739, %v1757
        %v1779 = vadd.f32 %v1740, %v1757
        %v1780 = vadd.f32 %v1741, %v1757
        %v1781 = vadd.f32 %v1742, %v1757
        %v1782 = vadd.f32 %v1743, %v1757
        %v1783 = vadd.f32 %v1744, %v1757
        %v1784 = vadd.f32 %v1745, %v1757
        %v1785 = vadd.f32 %v1746, %v1757
        %v1786 = vadd.f32 %v1747, %v1757
        %v1787 = vadd.f32 %v1748, %v1757
        %v1788 = vadd.f32 %v1749, %v1757
        %v1789 = vadd.f32 %v1750, %v1757
        %v1790 = vadd.f32 %v1751, %v1757
        %v1791 = vmax.f32 %v1759, 0.0
        %v1792 = vmax.f32 %v1760, 0.0
        %v1793 = vmax.f32 %v1761, 0.0
        %v1794 = vmax.f32 %v1762, 0.0
        %v1795 = vmax.f32 %v1763, 0.0
        %v1796 = vmax.f32 %v1764, 0.0
        %v1797 = vmax.f32 %v1765, 0.0
        %v1798 = vmax.f32 %v1766, 0.0
        %v1799 = vmax.f32 %v1767, 0.0
        %v1800 = vmax.f32 %v1768, 0.0
        %v1801 = vmax.f32 %v1769, 0.0
        %v1802 = vmax.f32 %v1770, 0.0
        %v1803 = vmax.f32 %v1771, 0.0
        %v1804 = vmax.f32 %v1772, 0.0
        %v1805 = vmax.f32 %v1773, 0.0
        %v1806 = vmax.f32 %v1774, 0.0
        %v1807 = vmax.f32 %v1775, 0.0
        %v1808 = vmax.f32 %v1776, 0.0
        %v1809 = vmax.f32 %v1777, 0.0
        %v1810 = vmax.f32 %v1778, 0.0
        %v1811 = vmax.f32 %v1779, 0.0
        %v1812 = vmax.f32 %v1780, 0.0
        %v1813 = vmax.f32 %v1781, 0.0
        %v1814 = vmax.f32 %v1782, 0.0
        %v1815 = vmax.f32 %v1783, 0.0
        %v1816 = vmax.f32 %v1784, 0.0
        %v1817 = vmax.f32 %v1785, 0.0
        %v1818 = vmax.f32 %v1786, 0.0
        %v1819 = vmax.f32 %v1787, 0.0
        %v1820 = vmax.f32 %v1788, 0.0
        %v1821 = vmax.f32 %v1789, 0.0
        %v1822 = vmax.f32 %v1790, 0.0
        %v1823 = vpack.c.bf16 %v1792, %v1791
        %v1824 = vpack.c.bf16 %v1794, %v1793
        %v1825 = vpack.c.bf16 %v1796, %v1795
        %v1826 = vpack.c.bf16 %v1798, %v1797
        %v1827 = vpack.c.bf16 %v1800, %v1799
        %v1828 = vpack.c.bf16 %v1802, %v1801
        %v1829 = vpack.c.bf16 %v1804, %v1803
        %v1830 = vpack.c.bf16 %v1806, %v1805
        %v1831 = vpack.c.bf16 %v1808, %v1807
        %v1832 = vpack.c.bf16 %v1810, %v1809
        %v1833 = vpack.c.bf16 %v1812, %v1811
        %v1834 = vpack.c.bf16 %v1814, %v1813
        %v1835 = vpack.c.bf16 %v1816, %v1815
        %v1836 = vpack.c.bf16 %v1818, %v1817
        %v1837 = vpack.c.bf16 %v1820, %v1819
        %v1838 = vpack.c.bf16 %v1822, %v1821
        %v1855 = vunpack.c.l.b16 %v1823
        %v1856 = vunpack.c.h.b16 %v1823
        %v1857 = vunpack.c.l.b16 %v1824
        %v1858 = vunpack.c.h.b16 %v1824
        %v1859 = vunpack.c.l.b16 %v1825
        %v1860 = vunpack.c.h.b16 %v1825
        %v1861 = vunpack.c.l.b16 %v1826
        %v1862 = vunpack.c.h.b16 %v1826
        %v1863 = vunpack.c.l.b16 %v1827
        %v1864 = vunpack.c.h.b16 %v1827
        %v1865 = vunpack.c.l.b16 %v1828
        %v1866 = vunpack.c.h.b16 %v1828
        %v1867 = vunpack.c.l.b16 %v1829
        %v1868 = vunpack.c.h.b16 %v1829
        %v1869 = vunpack.c.l.b16 %v1830
        %v1870 = vunpack.c.h.b16 %v1830
        %v1871 = vunpack.c.l.b16 %v1831
        %v1872 = vunpack.c.h.b16 %v1831
        %v1873 = vunpack.c.l.b16 %v1832
        %v1874 = vunpack.c.h.b16 %v1832
        %v1875 = vunpack.c.l.b16 %v1833
        %v1876 = vunpack.c.h.b16 %v1833
        %v1877 = vunpack.c.l.b16 %v1834
        %v1878 = vunpack.c.h.b16 %v1834
        %v1879 = vunpack.c.l.b16 %v1835
        %v1880 = vunpack.c.h.b16 %v1835
        %v1881 = vunpack.c.l.b16 %v1836
        %v1882 = vunpack.c.h.b16 %v1836
        %v1883 = vunpack.c.l.b16 %v1837
        %v1884 = vunpack.c.h.b16 %v1837
        %v1885 = vunpack.c.l.b16 %v1838
        %v1886 = vunpack.c.h.b16 %v1838
        %v1887 = vpack.c.b16 %v1855, %v1855
        %v1888 = vpack.c.b16 %v1856, %v1856
        %v1889 = vpack.c.b16 %v1857, %v1857
        %v1890 = vpack.c.b16 %v1858, %v1858
        %v1891 = vpack.c.b16 %v1859, %v1859
        %v1892 = vpack.c.b16 %v1860, %v1860
        %v1893 = vpack.c.b16 %v1861, %v1861
        %v1894 = vpack.c.b16 %v1862, %v1862
        %v1895 = vpack.c.b16 %v1863, %v1863
        %v1896 = vpack.c.b16 %v1864, %v1864
        %v1897 = vpack.c.b16 %v1865, %v1865
        %v1898 = vpack.c.b16 %v1866, %v1866
        %v1899 = vpack.c.b16 %v1867, %v1867
        %v1900 = vpack.c.b16 %v1868, %v1868
        %v1901 = vpack.c.b16 %v1869, %v1869
        %v1902 = vpack.c.b16 %v1870, %v1870
        %v1903 = vpack.c.b16 %v1871, %v1871
        %v1904 = vpack.c.b16 %v1872, %v1872
        %v1905 = vpack.c.b16 %v1873, %v1873
        %v1906 = vpack.c.b16 %v1874, %v1874
        %v1907 = vpack.c.b16 %v1875, %v1875
        %v1908 = vpack.c.b16 %v1876, %v1876
        %v1909 = vpack.c.b16 %v1877, %v1877
        %v1910 = vpack.c.b16 %v1878, %v1878
        %v1911 = vpack.c.b16 %v1879, %v1879
        %v1912 = vpack.c.b16 %v1880, %v1880
        %v1913 = vpack.c.b16 %v1881, %v1881
        %v1914 = vpack.c.b16 %v1882, %v1882
        %v1915 = vpack.c.b16 %v1883, %v1883
        %v1916 = vpack.c.b16 %v1884, %v1884
        %v1917 = vpack.c.b16 %v1885, %v1885
        %v1918 = vpack.c.b16 %v1886, %v1886
        %vm1951 = vcmask 519168
        %1952 = vst.msk [vmem:[%s265] sm:$0xf] %vm1951, %v1887
        %1953 = vst.msk [vmem:[%s265 + $0x4] sm:$0xf] %vm1951, %v1888
        %1954 = vst.msk [vmem:[%s265 + $0x8] sm:$0xf] %vm1951, %v1889
        %1955 = vst.msk [vmem:[%s265 + $0xc] sm:$0xf] %vm1951, %v1890
        %1956 = vst.msk [vmem:[%s265 + $0x10] sm:$0xf] %vm1951, %v1891
        %1957 = vst.msk [vmem:[%s265 + $0x14] sm:$0xf] %vm1951, %v1892
        %1958 = vst.msk [vmem:[%s265 + $0x18] sm:$0xf] %vm1951, %v1893
        %1959 = vst.msk [vmem:[%s265 + $0x1c] sm:$0xf] %vm1951, %v1894
        %1960 = vst.msk [vmem:[%s265 + $0x20] sm:$0xf] %vm1951, %v1895
        %1961 = vst.msk [vmem:[%s265 + $0x24] sm:$0xf] %vm1951, %v1896
        %1962 = vst.msk [vmem:[%s265 + $0x28] sm:$0xf] %vm1951, %v1897
        %1963 = vst.msk [vmem:[%s265 + $0x2c] sm:$0xf] %vm1951, %v1898
        %1964 = vst.msk [vmem:[%s265 + $0x30] sm:$0xf] %vm1951, %v1899
        %1965 = vst.msk [vmem:[%s265 + $0x34] sm:$0xf] %vm1951, %v1900
        %1966 = vst.msk [vmem:[%s265 + $0x38] sm:$0xf] %vm1951, %v1901
        %1967 = vst.msk [vmem:[%s265 + $0x3c] sm:$0xf] %vm1951, %v1902
        %1968 = vst.msk [vmem:[%s265 + $0x40] sm:$0xf] %vm1951, %v1903
        %1969 = vst.msk [vmem:[%s265 + $0x44] sm:$0xf] %vm1951, %v1904
        %1970 = vst.msk [vmem:[%s265 + $0x48] sm:$0xf] %vm1951, %v1905
        %1971 = vst.msk [vmem:[%s265 + $0x4c] sm:$0xf] %vm1951, %v1906
        %1972 = vst.msk [vmem:[%s265 + $0x50] sm:$0xf] %vm1951, %v1907
        %1973 = vst.msk [vmem:[%s265 + $0x54] sm:$0xf] %vm1951, %v1908
        %1974 = vst.msk [vmem:[%s265 + $0x58] sm:$0xf] %vm1951, %v1909
        %1975 = vst.msk [vmem:[%s265 + $0x5c] sm:$0xf] %vm1951, %v1910
        %1976 = vst.msk [vmem:[%s265 + $0x60] sm:$0xf] %vm1951, %v1911
        %1977 = vst.msk [vmem:[%s265 + $0x64] sm:$0xf] %vm1951, %v1912
        %1978 = vst.msk [vmem:[%s265 + $0x68] sm:$0xf] %vm1951, %v1913
        %1979 = vst.msk [vmem:[%s265 + $0x6c] sm:$0xf] %vm1951, %v1914
        %1980 = vst.msk [vmem:[%s265 + $0x70] sm:$0xf] %vm1951, %v1915
        %1981 = vst.msk [vmem:[%s265 + $0x74] sm:$0xf] %vm1951, %v1916
        %1982 = vst.msk [vmem:[%s265 + $0x78] sm:$0xf] %vm1951, %v1917
        %1983 = vst.msk [vmem:[%s265 + $0x7c] sm:$0xf] %vm1951, %v1918
      $region40: #{bottleneck_forward.4} parent=31 // pred_fallthru
        _
      %s1984 = smul.u32 32, %s19
      %p1985 = scmp.lt.s32.totalorder %s1984, 63
      %s1986 = scalar_select %p1985, %s1984, 63
      %p1987 = scmp.lt.s32.totalorder %s20, 0
      %s1988 = scalar_select %p1987, %s20, 0
      %s1989 = sadd.s32 %s1988, %s1986
      %s1990 = smul.addr %s1989, 4
      %s1991 = scalar_lea.vmem %s3, %s1990
      // Predicated region
      $region41: #{bottleneck_forward.4} parent=31 // pred_check
        %p1992 = pneg %p135
      $region42: #{bottleneck_forward.4} parent=31 // pred_check_branch
        %1994 = sbr.rel (%p1992) target = $region44
      $region43: #{bottleneck_forward.4} parent=31 // pred_region
        %s1995 = smul.u32 32, %s19
      $region44: #{bottleneck_forward.4} parent=31 // pred_fallthru
        _
    $region32: #{bottleneck_forward.4} parent=5 // pred_fallthru
      _
    %p1996 = scmp.le.s32.totalorder 2, %s9
    // Predicated region
    $region45: #{bottleneck_forward.4} parent=5 // pred_check
      %p1997 = pneg %p1996
    $region46: #{bottleneck_forward.4} parent=5 // pred_check_branch
      %1999 = sbr.rel (%p1997) target = $region48
    $region47: #{bottleneck_forward.4} parent=5 // pred_region
      %s2000 = ssub.s32 %s9, 2
      // Predicated region
      $region49: #{bottleneck_forward.4} parent=47 // pred_check
        %p2001 = pneg %p141
      $region50: #{bottleneck_forward.4} parent=47 // pred_check_branch
        %2003 = sbr.rel (%p2001) target = $region52
      $region51: #{bottleneck_forward.4} parent=47 // pred_region
        %s2004 = smul.u32 32, %s22
        %p2005 = scmp.lt.s32.totalorder %s2004, 63
        %s2006 = scalar_select %p2005, %s2004, 63
        %p2007 = scmp.lt.s32.totalorder %s23, 0
        %s2008 = scalar_select %p2007, %s23, 0
        %s2009 = sadd.s32 %s2008, %s2006
        %s2010 = smul.addr %s2009, 4
        %s2011 = scalar_lea.vmem %s3, %s2010
      $region52: #{bottleneck_forward.4} parent=47 // pred_fallthru
        _
    $region48: #{bottleneck_forward.4} parent=5 // pred_fallthru
      _
  $region6: #{bottleneck_forward.4} parent=0 // loop_footer
    %s13 = sadd.s32 1, %s9
  $region7: #{bottleneck_forward.4} parent=0 // loop_footer_branch
    %8 = sbr.rel target = $region3
  $region8: #{bottleneck_forward.4} parent=0 // loop_exit
    _

// kernel: bottleneck_forward.5
$region0: #{bottleneck_forward.5}
  #allocation0 [shape = 'u32[]', space=smem, size = 0x4, offset = 0x4, fixed_abs, tag = 'smem constant byte address 0x4 - core index']
  #allocation1 [shape = 'u32[144,128]{1,0:T(1,128)}', space=vmem, size = 0x12000, scoped, tag = 'internal scratch']
  #allocation2 [shape = 'f32[256,256]{1,0:T(8,128)}', space=vmem, size = 0x40000, scoped, tag = 'scratch operand']
  %s0 = inlined_call_operand.vmem [shape: bf16[512,64], index: 0, kind: input, shape index: {}]
  %s1 = inlined_call_operand.vmem [shape: bf16[64,256], index: 1, kind: input, shape index: {}]
  %s2 = inlined_call_operand.vmem [shape: f32[1,256], index: 2, kind: input, shape index: {}]
  %s3 = inlined_call_operand.vmem [shape: f32[512,256], index: 3, kind: input, shape index: {}]
  %s4 = inlined_call_operand.hbm [shape: f32[512,256], index: 4, kind: output, shape index: {}]
  %s5 = sld [smem:[#allocation0]]
  $region57: #{bottleneck_forward.5} parent=0
    _
  %s7 = ssub.s32 1, %s5
  %s8 = scalar_select 0, %s7, %s5
  $region1: #{bottleneck_forward.5} parent=0
    #allocation3 [shape = 'u8[524288]{0}', space=vmem, size = 0x80000, scoped, tag = 'output window, operand 0']
    #allocation4 [shape = 's32[2]{0}', space=sflag, size = 0x8, scoped, tag = 'scoped memory for bottleneck_forward.5']
    %9 = vsyncpa [#allocation4], 0
    %s10 = scalar_lea.sflag [#allocation4], 1
    %11 = vsyncpa %s10, 0
    loop: start=0, step=1, limit=4
    $region2: #{bottleneck_forward.5} parent=1 // loop_pre_header
      _
    $region3: #{bottleneck_forward.5} parent=1 // loop_header
      %s13 = sphi 0, %s17
      %p14 = scmp.ge.s32.totalorder %s13, 4
      %s20 = sphi 0, %s39
      %s21 = sphi 0, %s35
      %s22 = sphi 0, %s31
      %s23 = sphi 0, %s20
      %s24 = sphi 0, %s21
      %s25 = sphi 0, %s22
      %s26 = sphi 0, %s23
      %s27 = sphi 0, %s24
      %s28 = sphi 0, %s25
      %s44 = sphi 0, %s46
      %s47 = sphi 0, %s44
      %s48 = sphi 0, %s47
      %s64 = sphi 0, %s48
      %s72 = sphi 0, %s74
      %s75 = sphi 0, %s72
      %s76 = sphi 0, %s75
      %s92 = sphi 0, %s76
      %s98 = sphi 0, %s100
      %s101 = sphi 0, %s98
      %s102 = sphi 0, %s101
      %s118 = sphi 0, %s102
      %s126 = sphi 0, %s128
      %s129 = sphi 0, %s126
      %s130 = sphi 0, %s129
      %s146 = sphi 0, %s130
      %s154 = sphi 0, %s156
      %s157 = sphi 0, %s154
      %s158 = sphi 0, %s157
      %s174 = sphi 0, %s158
    $region4: #{bottleneck_forward.5} parent=1 // loop_header_branch
      %16 = sbr.rel (%p14) target = $region8
    $region5: #{bottleneck_forward.5} parent=1 // loop_body
      %s18 = ssub.s32 %s13, 1
      %s19 = ssub.s32 %s13, 2
      %s29 = sadd.s32 1, %s22
      %p30 = scmp.ge.s32.totalorder %s29, 1
      %s31 = scalar_select %p30, 0, %s29
      %s32 = sadd.s32 1, %s21
      %s33 = scalar_select %p30, %s32, %s21
      %p34 = scmp.ge.s32.totalorder %s33, 1
      %s35 = scalar_select %p34, 0, %s33
      %s36 = sadd.s32 1, %s20
      %s37 = scalar_select %p34, %s36, %s20
      %p38 = scmp.ge.s32.totalorder %s37, 2
      %s39 = scalar_select %p38, 0, %s37
      %s40 = ssub.s32 %s20, %s39
      %s41 = ssub.s32 %s22, %s31
      %s42 = sor.u32 %s40, %s41
      %p43 = scmp.eq.s32.totalorder %s42, 0
      %s45 = sadd.s32 %s44, 1
      %s46 = scalar_select %p43, %s44, %s45
      %p49 = pneg %p43
      %p50 = scmp.eq.s32.totalorder %s13, 1
      %p51 = por %p49, %p50
      %p52 = scmp.ne.s32.totalorder %s44, %s47
      %p53 = scmp.eq.s32.totalorder %s13, 0
      %p54 = por %p52, %p53
      %p55 = scmp.ne.s32.totalorder %s44, %s47
      %p56 = scmp.eq.s32.totalorder %s18, 1
      %p57 = por %p55, %p56
      %p58 = scmp.ne.s32.totalorder %s47, %s48
      %p59 = scmp.eq.s32.totalorder %s18, 0
      %p60 = por %p58, %p59
      %p61 = scmp.ne.s32.totalorder %s47, %s48
      %p62 = scmp.eq.s32.totalorder %s19, 1
      %p63 = por %p61, %p62
      %p65 = scmp.ne.s32.totalorder %s48, %s64
      %p66 = scmp.eq.s32.totalorder %s19, 0
      %p67 = por %p65, %p66
      %s68 = ssub.s32 %s22, %s31
      %s69 = ssub.s32 %s21, %s35
      %s70 = sor.u32 %s68, %s69
      %p71 = scmp.eq.s32.totalorder %s70, 0
      %s73 = sadd.s32 %s72, 1
      %s74 = scalar_select %p71, %s72, %s73
      %p77 = pneg %p71
      %p78 = scmp.eq.s32.totalorder %s13, 1
      %p79 = por %p77, %p78
      %p80 = scmp.ne.s32.totalorder %s72, %s75
      %p81 = scmp.eq.s32.totalorder %s13, 0
      %p82 = por %p80, %p81
      %p83 = scmp.ne.s32.totalorder %s72, %s75
      %p84 = scmp.eq.s32.totalorder %s18, 1
      %p85 = por %p83, %p84
      %p86 = scmp.ne.s32.totalorder %s75, %s76
      %p87 = scmp.eq.s32.totalorder %s18, 0
      %p88 = por %p86, %p87
      %p89 = scmp.ne.s32.totalorder %s75, %s76
      %p90 = scmp.eq.s32.totalorder %s19, 1
      %p91 = por %p89, %p90
      %p93 = scmp.ne.s32.totalorder %s76, %s92
      %p94 = scmp.eq.s32.totalorder %s19, 0
      %p95 = por %p93, %p94
      %s96 = ssub.s32 %s21, %s35
      %p97 = scmp.eq.s32.totalorder %s96, 0
      %s99 = sadd.s32 %s98, 1
      %s100 = scalar_select %p97, %s98, %s99
      %p103 = pneg %p97
      %p104 = scmp.eq.s32.totalorder %s13, 1
      %p105 = por %p103, %p104
      %p106 = scmp.ne.s32.totalorder %s98, %s101
      %p107 = scmp.eq.s32.totalorder %s13, 0
      %p108 = por %p106, %p107
      %p109 = scmp.ne.s32.totalorder %s98, %s101
      %p110 = scmp.eq.s32.totalorder %s18, 1
      %p111 = por %p109, %p110
      %p112 = scmp.ne.s32.totalorder %s101, %s102
      %p113 = scmp.eq.s32.totalorder %s18, 0
      %p114 = por %p112, %p113
      %p115 = scmp.ne.s32.totalorder %s101, %s102
      %p116 = scmp.eq.s32.totalorder %s19, 1
      %p117 = por %p115, %p116
      %p119 = scmp.ne.s32.totalorder %s102, %s118
      %p120 = scmp.eq.s32.totalorder %s19, 0
      %p121 = por %p119, %p120
      %s122 = ssub.s32 %s20, %s39
      %s123 = ssub.s32 %s21, %s35
      %s124 = sor.u32 %s122, %s123
      %p125 = scmp.eq.s32.totalorder %s124, 0
      %s127 = sadd.s32 %s126, 1
      %s128 = scalar_select %p125, %s126, %s127
      %p131 = pneg %p125
      %p132 = scmp.eq.s32.totalorder %s13, 1
      %p133 = por %p131, %p132
      %p134 = scmp.ne.s32.totalorder %s126, %s129
      %p135 = scmp.eq.s32.totalorder %s13, 0
      %p136 = por %p134, %p135
      %p137 = scmp.ne.s32.totalorder %s126, %s129
      %p138 = scmp.eq.s32.totalorder %s18, 1
      %p139 = por %p137, %p138
      %p140 = scmp.ne.s32.totalorder %s129, %s130
      %p141 = scmp.eq.s32.totalorder %s18, 0
      %p142 = por %p140, %p141
      %p143 = scmp.ne.s32.totalorder %s129, %s130
      %p144 = scmp.eq.s32.totalorder %s19, 1
      %p145 = por %p143, %p144
      %p147 = scmp.ne.s32.totalorder %s130, %s146
      %p148 = scmp.eq.s32.totalorder %s19, 0
      %p149 = por %p147, %p148
      %s150 = ssub.s32 %s20, %s39
      %s151 = ssub.s32 %s21, %s35
      %s152 = sor.u32 %s150, %s151
      %p153 = scmp.eq.s32.totalorder %s152, 0
      %s155 = sadd.s32 %s154, 1
      %s156 = scalar_select %p153, %s154, %s155
      %p159 = pneg %p153
      %p160 = scmp.eq.s32.totalorder %s13, 1
      %p161 = por %p159, %p160
      %p162 = scmp.ne.s32.totalorder %s154, %s157
      %p163 = scmp.eq.s32.totalorder %s13, 0
      %p164 = por %p162, %p163
      %p165 = scmp.ne.s32.totalorder %s154, %s157
      %p166 = scmp.eq.s32.totalorder %s18, 1
      %p167 = por %p165, %p166
      %p168 = scmp.ne.s32.totalorder %s157, %s158
      %p169 = scmp.eq.s32.totalorder %s18, 0
      %p170 = por %p168, %p169
      %p171 = scmp.ne.s32.totalorder %s157, %s158
      %p172 = scmp.eq.s32.totalorder %s19, 1
      %p173 = por %p171, %p172
      %p175 = scmp.ne.s32.totalorder %s158, %s174
      %p176 = scmp.eq.s32.totalorder %s19, 0
      %p177 = por %p175, %p176
      %p178 = scmp.le.s32.totalorder 1, %s13
      %p179 = scmp.lt.s32.totalorder %s13, 3
      %p180 = pnand %p178, %p179
      %p181 = pneg %p180
      // Predicated region
      $region9: #{bottleneck_forward.5} parent=5 // pred_check
        _
      $region10: #{bottleneck_forward.5} parent=5 // pred_check_branch
        %183 = sbr.rel (%p180) target = $region12
      $region11: #{bottleneck_forward.5} parent=5 // pred_region
        %s184 = ssub.s32 %s13, 1
        // Predicated region
        $region13: #{bottleneck_forward.5} parent=11 // pred_check
          %p185 = pneg %p88
        $region14: #{bottleneck_forward.5} parent=11 // pred_check_branch
          %187 = sbr.rel (%p185) target = $region16
        $region15: #{bottleneck_forward.5} parent=11 // pred_region
          %s188 = smul.u32 8, %s25
          %s189 = smul.u32 2, %s24
          %p190 = scmp.lt.s32.totalorder %s188, 7
          %s191 = scalar_select %p190, %s188, 7
          %p192 = scmp.lt.s32.totalorder %s189, 1
          %s193 = scalar_select %p192, %s189, 1
          %s194 = smul.addr %s191, 2
          %s195 = sadd.s32 %s193, %s194
          %s196 = smul.addr %s195, 4
          %s197 = scalar_lea.vmem %s1, %s196
          %s198 = smul.u32 8, %s25
          %s199 = smul.u32 2, %s24
        $region16: #{bottleneck_forward.5} parent=11 // pred_fallthru
          _
        // Predicated region
        $region17: #{bottleneck_forward.5} parent=11 // pred_check
          %p200 = pneg %p114
        $region18: #{bottleneck_forward.5} parent=11 // pred_check_branch
          %202 = sbr.rel (%p200) target = $region20
        $region19: #{bottleneck_forward.5} parent=11 // pred_region
          %s203 = smul.u32 2, %s24
          %p204 = scmp.lt.s32.totalorder %s203, 1
          %s205 = scalar_select %p204, %s203, 1
          %s206 = scalar_lea.vmem %s2, %s205
          %s207 = smul.u32 2, %s24
        $region20: #{bottleneck_forward.5} parent=11 // pred_fallthru
          _
      $region12: #{bottleneck_forward.5} parent=5 // pred_fallthru
        _
      %p208 = scmp.lt.s32.totalorder %s13, 2
      // Predicated region
      $region21: #{bottleneck_forward.5} parent=5 // pred_check
        %p209 = pneg %p208
      $region22: #{bottleneck_forward.5} parent=5 // pred_check_branch
        %211 = sbr.rel (%p209) target = $region24
      $region23: #{bottleneck_forward.5} parent=5 // pred_region
        // Predicated region
        $region25: #{bottleneck_forward.5} parent=23 // pred_check
          %p212 = pneg %p54
        $region26: #{bottleneck_forward.5} parent=23 // pred_check_branch
          %214 = sbr.rel (%p212) target = $region28
        $region27: #{bottleneck_forward.5} parent=23 // pred_region
          %s215 = smul.u32 32, %s20
          %p216 = scmp.lt.s32.totalorder %s215, 63
          %s217 = scalar_select %p216, %s215, 63
          %p218 = scmp.lt.s32.totalorder %s22, 0
          %s219 = scalar_select %p218, %s22, 0
          %s220 = sadd.s32 %s219, %s217
          %s221 = smul.addr %s220, 4
          %s222 = scalar_lea.vmem %s0, %s221
          %s223 = smul.u32 32, %s20
        $region28: #{bottleneck_forward.5} parent=23 // pred_fallthru
          _
        // Predicated region
        $region29: #{bottleneck_forward.5} parent=23 // pred_check
          %p224 = pneg %p136
        $region30: #{bottleneck_forward.5} parent=23 // pred_check_branch
          %226 = sbr.rel (%p224) target = $region32
        $region31: #{bottleneck_forward.5} parent=23 // pred_region
          %s227 = smul.u32 32, %s20
          %s228 = smul.u32 2, %s21
          %p229 = scmp.lt.s32.totalorder %s227, 63
          %s230 = scalar_select %p229, %s227, 63
          %p231 = scmp.lt.s32.totalorder %s228, 1
          %s232 = scalar_select %p231, %s228, 1
          %s233 = smul.addr %s230, 2
          %s234 = sadd.s32 %s232, %s233
          %s235 = smul.addr %s234, 8
          %s236 = scalar_lea.vmem %s3, %s235
          %s237 = smul.u32 32, %s20
          %s238 = smul.u32 2, %s21
        $region32: #{bottleneck_forward.5} parent=23 // pred_fallthru
          _
      $region24: #{bottleneck_forward.5} parent=5 // pred_fallthru
        _
      %p239 = scmp.le.s32.totalorder 1, %s13
      %p240 = scmp.lt.s32.totalorder %s13, 3
      %p241 = pnand %p239, %p240
      %p242 = pneg %p241
      // Predicated region
      $region33: #{bottleneck_forward.5} parent=5 // pred_check
        _
      $region34: #{bottleneck_forward.5} parent=5 // pred_check_branch
        %244 = sbr.rel (%p241) target = $region36
      $region35: #{bottleneck_forward.5} parent=5 // pred_region
        %s245 = ssub.s32 %s13, 1
        %s246 = smul.u32 32, %s23
        %p247 = scmp.lt.s32.totalorder %s246, 63
        %s248 = scalar_select %p247, %s246, 63
        %p249 = scmp.lt.s32.totalorder %s25, 0
        %s250 = scalar_select %p249, %s25, 0
        %s251 = sadd.s32 %s250, %s248
        %s252 = smul.addr %s251, 4
        %s253 = scalar_lea.vmem %s0, %s252
        %p254 = pneg %p60
        %p255 = pneg %p57
        %s256 = smul.u32 8, %s25
        %s257 = smul.u32 2, %s24
        %p258 = scmp.lt.s32.totalorder %s256, 7
        %s259 = scalar_select %p258, %s256, 7
        %p260 = scmp.lt.s32.totalorder %s257, 1
        %s261 = scalar_select %p260, %s257, 1
        %s262 = smul.addr %s259, 2
        %s263 = sadd.s32 %s261, %s262
        %s264 = smul.addr %s263, 4
        %s265 = scalar_lea.vmem %s1, %s264
        %p266 = pneg %p88
        %p267 = pneg %p85
        %s268 = smul.u32 2, %s24
        %p269 = scmp.lt.s32.totalorder %s268, 1
        %s270 = scalar_select %p269, %s268, 1
        %s271 = scalar_lea.vmem %s2, %s270
        %p272 = pneg %p114
        %p273 = pneg %p111
        %s274 = smul.u32 32, %s23
        %s275 = smul.u32 2, %s24
        %p276 = scmp.lt.s32.totalorder %s274, 63
        %s277 = scalar_select %p276, %s274, 63
        %p278 = scmp.lt.s32.totalorder %s275, 1
        %s279 = scalar_select %p278, %s275, 1
        %s280 = smul.addr %s277, 2
        %s281 = sadd.s32 %s279, %s280
        %s282 = smul.addr %s281, 8
        %s283 = scalar_lea.vmem %s3, %s282
        %p284 = pneg %p142
        %p285 = pneg %p139
        %p286 = pneg %p170
        %p287 = pneg %p167
        %s288 = sand.u32 %s157, 1
        %s289 = scalar_lea.sflag [#allocation4], %s288
        %s290 = sand.u32 %s157, 1
        %s291 = smul.addr %s290, 512
        %s292 = scalar_lea.vmem [#allocation3], %s291
        %s293 = smul.u32 32, %s23
        %p294 = scmp.lt.s32.totalorder %s293, 63
        %s295 = scalar_select %p294, %s293, 63
        %p296 = scmp.lt.s32.totalorder %s25, 0
        %s297 = scalar_select %p296, %s25, 0
        %s298 = sadd.s32 %s297, %s295
        %s299 = smul.addr %s298, 4
        %s300 = scalar_lea.vmem %s0, %s299
        %s301 = smul.u32 32, %s23
        %s302 = smul.u32 8, %s25
        %s303 = smul.u32 2, %s24
        %p304 = scmp.lt.s32.totalorder %s302, 7
        %s305 = scalar_select %p304, %s302, 7
        %p306 = scmp.lt.s32.totalorder %s303, 1
        %s307 = scalar_select %p306, %s303, 1
        %s308 = smul.addr %s305, 2
        %s309 = sadd.s32 %s307, %s308
        %s310 = smul.addr %s309, 4
        %s311 = scalar_lea.vmem %s1, %s310
        %s312 = smul.u32 8, %s25
        %s313 = smul.u32 2, %s24
        %s314 = smul.u32 2, %s24
        %p315 = scmp.lt.s32.totalorder %s314, 1
        %s316 = scalar_select %p315, %s314, 1
        %s317 = scalar_lea.vmem %s2, %s316
        %s318 = smul.u32 2, %s24
        %s319 = smul.u32 32, %s23
        %s320 = smul.u32 2, %s24
        %p321 = scmp.lt.s32.totalorder %s319, 63
        %s322 = scalar_select %p321, %s319, 63
        %p323 = scmp.lt.s32.totalorder %s320, 1
        %s324 = scalar_select %p323, %s320, 1
        %s325 = smul.addr %s322, 2
        %s326 = sadd.s32 %s324, %s325
        %s327 = smul.addr %s326, 8
        %s328 = scalar_lea.vmem %s3, %s327
        %s329 = smul.u32 32, %s23
        %s330 = smul.u32 2, %s24
        %s331 = smul.u32 32, %s23
        %s332 = smul.u32 2, %s24
        %p334 = scmp.eq.s32.totalorder %s25, 0
        // Predicated region
        $region37: #{bottleneck_forward.5} parent=35 // pred_check
          %p335 = pneg %p334
        $region38: #{bottleneck_forward.5} parent=35 // pred_check_branch
          %337 = sbr.rel (%p335) target = $region40
        $region39: #{bottleneck_forward.5} parent=35 // pred_region
          %338 = vst [vmem:[#allocation2] sm:$0xff] 0.0
          %339 = vst [vmem:[#allocation2 + $0x8] sm:$0xff] 0.0
          %340 = vst [vmem:[#allocation2 + $0x10] sm:$0xff] 0.0
          %341 = vst [vmem:[#allocation2 + $0x18] sm:$0xff] 0.0
          %342 = vst [vmem:[#allocation2 + $0x20] sm:$0xff] 0.0
          %343 = vst [vmem:[#allocation2 + $0x28] sm:$0xff] 0.0
          %344 = vst [vmem:[#allocation2 + $0x30] sm:$0xff] 0.0
          %345 = vst [vmem:[#allocation2 + $0x38] sm:$0xff] 0.0
          %346 = vst [vmem:[#allocation2 + $0x40] sm:$0xff] 0.0
          %347 = vst [vmem:[#allocation2 + $0x48] sm:$0xff] 0.0
          %348 = vst [vmem:[#allocation2 + $0x50] sm:$0xff] 0.0
          %349 = vst [vmem:[#allocation2 + $0x58] sm:$0xff] 0.0
          %350 = vst [vmem:[#allocation2 + $0x60] sm:$0xff] 0.0
          %351 = vst [vmem:[#allocation2 + $0x68] sm:$0xff] 0.0
          %352 = vst [vmem:[#allocation2 + $0x70] sm:$0xff] 0.0
          %353 = vst [vmem:[#allocation2 + $0x78] sm:$0xff] 0.0
          %354 = vst [vmem:[#allocation2 + $0x80] sm:$0xff] 0.0
          %355 = vst [vmem:[#allocation2 + $0x88] sm:$0xff] 0.0
          %356 = vst [vmem:[#allocation2 + $0x90] sm:$0xff] 0.0
          %357 = vst [vmem:[#allocation2 + $0x98] sm:$0xff] 0.0
          %358 = vst [vmem:[#allocation2 + $0xa0] sm:$0xff] 0.0
          %359 = vst [vmem:[#allocation2 + $0xa8] sm:$0xff] 0.0
          %360 = vst [vmem:[#allocation2 + $0xb0] sm:$0xff] 0.0
          %361 = vst [vmem:[#allocation2 + $0xb8] sm:$0xff] 0.0
          %362 = vst [vmem:[#allocation2 + $0xc0] sm:$0xff] 0.0
          %363 = vst [vmem:[#allocation2 + $0xc8] sm:$0xff] 0.0
          %364 = vst [vmem:[#allocation2 + $0xd0] sm:$0xff] 0.0
          %365 = vst [vmem:[#allocation2 + $0xd8] sm:$0xff] 0.0
          %366 = vst [vmem:[#allocation2 + $0xe0] sm:$0xff] 0.0
          %367 = vst [vmem:[#allocation2 + $0xe8] sm:$0xff] 0.0
          %368 = vst [vmem:[#allocation2 + $0xf0] sm:$0xff] 0.0
          %369 = vst [vmem:[#allocation2 + $0xf8] sm:$0xff] 0.0
          %370 = vst [vmem:[#allocation2 + $0x100] sm:$0xff] 0.0
          %371 = vst [vmem:[#allocation2 + $0x108] sm:$0xff] 0.0
          %372 = vst [vmem:[#allocation2 + $0x110] sm:$0xff] 0.0
          %373 = vst [vmem:[#allocation2 + $0x118] sm:$0xff] 0.0
          %374 = vst [vmem:[#allocation2 + $0x120] sm:$0xff] 0.0
          %375 = vst [vmem:[#allocation2 + $0x128] sm:$0xff] 0.0
          %376 = vst [vmem:[#allocation2 + $0x130] sm:$0xff] 0.0
          %377 = vst [vmem:[#allocation2 + $0x138] sm:$0xff] 0.0
          %378 = vst [vmem:[#allocation2 + $0x140] sm:$0xff] 0.0
          %379 = vst [vmem:[#allocation2 + $0x148] sm:$0xff] 0.0
          %380 = vst [vmem:[#allocation2 + $0x150] sm:$0xff] 0.0
          %381 = vst [vmem:[#allocation2 + $0x158] sm:$0xff] 0.0
          %382 = vst [vmem:[#allocation2 + $0x160] sm:$0xff] 0.0
          %383 = vst [vmem:[#allocation2 + $0x168] sm:$0xff] 0.0
          %384 = vst [vmem:[#allocation2 + $0x170] sm:$0xff] 0.0
          %385 = vst [vmem:[#allocation2 + $0x178] sm:$0xff] 0.0
          %386 = vst [vmem:[#allocation2 + $0x180] sm:$0xff] 0.0
          %387 = vst [vmem:[#allocation2 + $0x188] sm:$0xff] 0.0
          %388 = vst [vmem:[#allocation2 + $0x190] sm:$0xff] 0.0
          %389 = vst [vmem:[#allocation2 + $0x198] sm:$0xff] 0.0
          %390 = vst [vmem:[#allocation2 + $0x1a0] sm:$0xff] 0.0
          %391 = vst [vmem:[#allocation2 + $0x1a8] sm:$0xff] 0.0
          %392 = vst [vmem:[#allocation2 + $0x1b0] sm:$0xff] 0.0
          %393 = vst [vmem:[#allocation2 + $0x1b8] sm:$0xff] 0.0
          %394 = vst [vmem:[#allocation2 + $0x1c0] sm:$0xff] 0.0
          %395 = vst [vmem:[#allocation2 + $0x1c8] sm:$0xff] 0.0
          %396 = vst [vmem:[#allocation2 + $0x1d0] sm:$0xff] 0.0
          %397 = vst [vmem:[#allocation2 + $0x1d8] sm:$0xff] 0.0
          %398 = vst [vmem:[#allocation2 + $0x1e0] sm:$0xff] 0.0
          %399 = vst [vmem:[#allocation2 + $0x1e8] sm:$0xff] 0.0
          %400 = vst [vmem:[#allocation2 + $0x1f0] sm:$0xff] 0.0
          %401 = vst [vmem:[#allocation2 + $0x1f8] sm:$0xff] 0.0
        $region40: #{bottleneck_forward.5} parent=35 // pred_fallthru
          _
        %v402 = vld [vmem:[#allocation2] sm:$0xff]
        %v403 = vld [vmem:[#allocation2 + $0x8] sm:$0xff]
        %v404 = vld [vmem:[#allocation2 + $0x10] sm:$0xff]
        %v405 = vld [vmem:[#allocation2 + $0x18] sm:$0xff]
        %v406 = vld [vmem:[#allocation2 + $0x20] sm:$0xff]
        %v407 = vld [vmem:[#allocation2 + $0x28] sm:$0xff]
        %v408 = vld [vmem:[#allocation2 + $0x30] sm:$0xff]
        %v409 = vld [vmem:[#allocation2 + $0x38] sm:$0xff]
        %v410 = vld [vmem:[#allocation2 + $0x40] sm:$0xff]
        %v411 = vld [vmem:[#allocation2 + $0x48] sm:$0xff]
        %v412 = vld [vmem:[#allocation2 + $0x50] sm:$0xff]
        %v413 = vld [vmem:[#allocation2 + $0x58] sm:$0xff]
        %v414 = vld [vmem:[#allocation2 + $0x60] sm:$0xff]
        %v415 = vld [vmem:[#allocation2 + $0x68] sm:$0xff]
        %v416 = vld [vmem:[#allocation2 + $0x70] sm:$0xff]
        %v417 = vld [vmem:[#allocation2 + $0x78] sm:$0xff]
        %v418 = vld [vmem:[#allocation2 + $0x80] sm:$0xff]
        %v419 = vld [vmem:[#allocation2 + $0x88] sm:$0xff]
        %v420 = vld [vmem:[#allocation2 + $0x90] sm:$0xff]
        %v421 = vld [vmem:[#allocation2 + $0x98] sm:$0xff]
        %v422 = vld [vmem:[#allocation2 + $0xa0] sm:$0xff]
        %v423 = vld [vmem:[#allocation2 + $0xa8] sm:$0xff]
        %v424 = vld [vmem:[#allocation2 + $0xb0] sm:$0xff]
        %v425 = vld [vmem:[#allocation2 + $0xb8] sm:$0xff]
        %v426 = vld [vmem:[#allocation2 + $0xc0] sm:$0xff]
        %v427 = vld [vmem:[#allocation2 + $0xc8] sm:$0xff]
        %v428 = vld [vmem:[#allocation2 + $0xd0] sm:$0xff]
        %v429 = vld [vmem:[#allocation2 + $0xd8] sm:$0xff]
        %v430 = vld [vmem:[#allocation2 + $0xe0] sm:$0xff]
        %v431 = vld [vmem:[#allocation2 + $0xe8] sm:$0xff]
        %v432 = vld [vmem:[#allocation2 + $0xf0] sm:$0xff]
        %v433 = vld [vmem:[#allocation2 + $0xf8] sm:$0xff]
        %v434 = vld [vmem:[#allocation2 + $0x100] sm:$0xff]
        %v435 = vld [vmem:[#allocation2 + $0x108] sm:$0xff]
        %v436 = vld [vmem:[#allocation2 + $0x110] sm:$0xff]
        %v437 = vld [vmem:[#allocation2 + $0x118] sm:$0xff]
        %v438 = vld [vmem:[#allocation2 + $0x120] sm:$0xff]
        %v439 = vld [vmem:[#allocation2 + $0x128] sm:$0xff]
        %v440 = vld [vmem:[#allocation2 + $0x130] sm:$0xff]
        %v441 = vld [vmem:[#allocation2 + $0x138] sm:$0xff]
        %v442 = vld [vmem:[#allocation2 + $0x140] sm:$0xff]
        %v443 = vld [vmem:[#allocation2 + $0x148] sm:$0xff]
        %v444 = vld [vmem:[#allocation2 + $0x150] sm:$0xff]
        %v445 = vld [vmem:[#allocation2 + $0x158] sm:$0xff]
        %v446 = vld [vmem:[#allocation2 + $0x160] sm:$0xff]
        %v447 = vld [vmem:[#allocation2 + $0x168] sm:$0xff]
        %v448 = vld [vmem:[#allocation2 + $0x170] sm:$0xff]
        %v449 = vld [vmem:[#allocation2 + $0x178] sm:$0xff]
        %v450 = vld [vmem:[#allocation2 + $0x180] sm:$0xff]
        %v451 = vld [vmem:[#allocation2 + $0x188] sm:$0xff]
        %v452 = vld [vmem:[#allocation2 + $0x190] sm:$0xff]
        %v453 = vld [vmem:[#allocation2 + $0x198] sm:$0xff]
        %v454 = vld [vmem:[#allocation2 + $0x1a0] sm:$0xff]
        %v455 = vld [vmem:[#allocation2 + $0x1a8] sm:$0xff]
        %v456 = vld [vmem:[#allocation2 + $0x1b0] sm:$0xff]
        %v457 = vld [vmem:[#allocation2 + $0x1b8] sm:$0xff]
        %v458 = vld [vmem:[#allocation2 + $0x1c0] sm:$0xff]
        %v459 = vld [vmem:[#allocation2 + $0x1c8] sm:$0xff]
        %v460 = vld [vmem:[#allocation2 + $0x1d0] sm:$0xff]
        %v461 = vld [vmem:[#allocation2 + $0x1d8] sm:$0xff]
        %v462 = vld [vmem:[#allocation2 + $0x1e0] sm:$0xff]
        %v463 = vld [vmem:[#allocation2 + $0x1e8] sm:$0xff]
        %v464 = vld [vmem:[#allocation2 + $0x1f0] sm:$0xff]
        %v465 = vld [vmem:[#allocation2 + $0x1f8] sm:$0xff]
        %v466 = vld [vmem:[%s300] sm:$0xf]
        %v467 = vld [vmem:[%s300 + $0x4] sm:$0xf]
        %v468 = vld [vmem:[%s300 + $0x8] sm:$0xf]
        %v469 = vld [vmem:[%s300 + $0xc] sm:$0xf]
        %v470 = vld [vmem:[%s300 + $0x10] sm:$0xf]
        %v471 = vld [vmem:[%s300 + $0x14] sm:$0xf]
        %v472 = vld [vmem:[%s300 + $0x18] sm:$0xf]
        %v473 = vld [vmem:[%s300 + $0x1c] sm:$0xf]
        %v474 = vld [vmem:[%s300 + $0x20] sm:$0xf]
        %v475 = vld [vmem:[%s300 + $0x24] sm:$0xf]
        %v476 = vld [vmem:[%s300 + $0x28] sm:$0xf]
        %v477 = vld [vmem:[%s300 + $0x2c] sm:$0xf]
        %v478 = vld [vmem:[%s300 + $0x30] sm:$0xf]
        %v479 = vld [vmem:[%s300 + $0x34] sm:$0xf]
        %v480 = vld [vmem:[%s300 + $0x38] sm:$0xf]
        %v481 = vld [vmem:[%s300 + $0x3c] sm:$0xf]
        %v482 = vld [vmem:[%s300 + $0x40] sm:$0xf]
        %v483 = vld [vmem:[%s300 + $0x44] sm:$0xf]
        %v484 = vld [vmem:[%s300 + $0x48] sm:$0xf]
        %v485 = vld [vmem:[%s300 + $0x4c] sm:$0xf]
        %v486 = vld [vmem:[%s300 + $0x50] sm:$0xf]
        %v487 = vld [vmem:[%s300 + $0x54] sm:$0xf]
        %v488 = vld [vmem:[%s300 + $0x58] sm:$0xf]
        %v489 = vld [vmem:[%s300 + $0x5c] sm:$0xf]
        %v490 = vld [vmem:[%s300 + $0x60] sm:$0xf]
        %v491 = vld [vmem:[%s300 + $0x64] sm:$0xf]
        %v492 = vld [vmem:[%s300 + $0x68] sm:$0xf]
        %v493 = vld [vmem:[%s300 + $0x6c] sm:$0xf]
        %v494 = vld [vmem:[%s300 + $0x70] sm:$0xf]
        %v495 = vld [vmem:[%s300 + $0x74] sm:$0xf]
        %v496 = vld [vmem:[%s300 + $0x78] sm:$0xf]
        %v497 = vld [vmem:[%s300 + $0x7c] sm:$0xf]
        %v498 = vld [vmem:[%s311] sm:$0xff]
        %v499 = vld [vmem:[%s311 + $0x8] sm:$0xff]
        %v500 = vld [vmem:[%s311 + $0x10] sm:$0xff]
        %v501 = vld [vmem:[%s311 + $0x18] sm:$0xff]
        %v502 = vld [vmem:[%s311 + $0x20] sm:$0xff]
        %v503 = vld [vmem:[%s311 + $0x28] sm:$0xff]
        %v504 = vld [vmem:[%s311 + $0x30] sm:$0xff]
        %v505 = vld [vmem:[%s311 + $0x38] sm:$0xff]
        %v538 = vunpack.c.l.b16 %v466
        %v539 = vunpack.c.l.b16 %v467
        %v540 = vunpack.c.l.b16 %v468
        %v541 = vunpack.c.l.b16 %v469
        %v542 = vunpack.c.l.b16 %v470
        %v543 = vunpack.c.l.b16 %v471
        %v544 = vunpack.c.l.b16 %v472
        %v545 = vunpack.c.l.b16 %v473
        %v546 = vunpack.c.l.b16 %v474
        %v547 = vunpack.c.l.b16 %v475
        %v548 = vunpack.c.l.b16 %v476
        %v549 = vunpack.c.l.b16 %v477
        %v550 = vunpack.c.l.b16 %v478
        %v551 = vunpack.c.l.b16 %v479
        %v552 = vunpack.c.l.b16 %v480
        %v553 = vunpack.c.l.b16 %v481
        %v554 = vunpack.c.l.b16 %v482
        %v555 = vunpack.c.l.b16 %v483
        %v556 = vunpack.c.l.b16 %v484
        %v557 = vunpack.c.l.b16 %v485
        %v558 = vunpack.c.l.b16 %v486
        %v559 = vunpack.c.l.b16 %v487
        %v560 = vunpack.c.l.b16 %v488
        %v561 = vunpack.c.l.b16 %v489
        %v562 = vunpack.c.l.b16 %v490
        %v563 = vunpack.c.l.b16 %v491
        %v564 = vunpack.c.l.b16 %v492
        %v565 = vunpack.c.l.b16 %v493
        %v566 = vunpack.c.l.b16 %v494
        %v567 = vunpack.c.l.b16 %v495
        %v568 = vunpack.c.l.b16 %v496
        %v569 = vunpack.c.l.b16 %v497
        %v570 = vpack.c.b16 %v539, %v538
        %v571 = vpack.c.b16 %v541, %v540
        %v572 = vpack.c.b16 %v543, %v542
        %v573 = vpack.c.b16 %v545, %v544
        %v574 = vpack.c.b16 %v547, %v546
        %v575 = vpack.c.b16 %v549, %v548
        %v576 = vpack.c.b16 %v551, %v550
        %v577 = vpack.c.b16 %v553, %v552
        %v578 = vpack.c.b16 %v555, %v554
        %v579 = vpack.c.b16 %v557, %v556
        %v580 = vpack.c.b16 %v559, %v558
        %v581 = vpack.c.b16 %v561, %v560
        %v582 = vpack.c.b16 %v563, %v562
        %v583 = vpack.c.b16 %v565, %v564
        %v584 = vpack.c.b16 %v567, %v566
        %v585 = vpack.c.b16 %v569, %v568
        %v594 = vunpack.c.l.b16 %v498
        %v595 = vunpack.c.h.b16 %v498
        %v596 = vunpack.c.l.b16 %v499
        %v597 = vunpack.c.h.b16 %v499
        %v598 = vunpack.c.l.b16 %v500
        %v599 = vunpack.c.h.b16 %v500
        %v600 = vunpack.c.l.b16 %v501
        %v601 = vunpack.c.h.b16 %v501
        %v602 = vunpack.c.l.b16 %v502
        %v603 = vunpack.c.h.b16 %v502
        %v604 = vunpack.c.l.b16 %v503
        %v605 = vunpack.c.h.b16 %v503
        %v606 = vunpack.c.l.b16 %v504
        %v607 = vunpack.c.h.b16 %v504
        %v608 = vunpack.c.l.b16 %v505
        %v609 = vunpack.c.h.b16 %v505
        %v610 = vpack.c.b16 %v596, %v594
        %v611 = vpack.c.b16 %v597, %v595
        %v612 = vpack.c.b16 %v600, %v598
        %v613 = vpack.c.b16 %v601, %v599
        %v614 = vpack.c.b16 %v604, %v602
        %v615 = vpack.c.b16 %v605, %v603
        %v616 = vpack.c.b16 %v608, %v606
        %v617 = vpack.c.b16 %v609, %v607
        %vm626 = vcmask 523264
        %v628 = vsel %vm626, %v570, 0
        %v631 = vsel %vm626, %v571, 0
        %v634 = vsel %vm626, %v572, 0
        %v637 = vsel %vm626, %v573, 0
        %v640 = vsel %vm626, %v574, 0
        %v643 = vsel %vm626, %v575, 0
        %v646 = vsel %vm626, %v576, 0
        %v649 = vsel %vm626, %v577, 0
        %v652 = vsel %vm626, %v578, 0
        %v655 = vsel %vm626, %v579, 0
        %v658 = vsel %vm626, %v580, 0
        %v661 = vsel %vm626, %v581, 0
        %v664 = vsel %vm626, %v582, 0
        %v667 = vsel %vm626, %v583, 0
        %v670 = vsel %vm626, %v584, 0
        %v673 = vsel %vm626, %v585, 0
        %675 = vmatprep.subr.bf16.mxu0 %v611
        %676 = vmatpush1.bf16.msra.mxu0 %v610
        %677 = vmatprep.subr.bf16.mxu0 %v613
        %678 = vmatpush1.bf16.msra.mxu0 %v612
        %679 = vmatprep.subr.bf16.mxu0 %v615
        %680 = vmatpush1.bf16.msra.mxu0 %v614
        %681 = vmatprep.subr.bf16.mxu0 %v617
        %682 = vmatpush1.bf16.msra.mxu0 %v616
        %683 = vmatprep.subr.bf16.mxu0 0
        %684 = vmatpush1.bf16.msra.mxu0 0
        %685 = vmatprep.subr.bf16.mxu0 0
        %686 = vmatpush1.bf16.msra.mxu0 0
        %687 = vmatprep.subr.bf16.mxu0 0
        %688 = vmatpush1.bf16.msra.mxu0 0
        %689 = vmatprep.subr.bf16.mxu0 0
        %690 = vmatpush1.bf16.msra.mxu0 0
        %691 = vmatprep.subr.bf16.mxu0 0
        %692 = vmatpush1.bf16.msra.mxu0 0
        %693 = vmatprep.subr.bf16.mxu0 0
        %694 = vmatpush1.bf16.msra.mxu0 0
        %695 = vmatprep.subr.bf16.mxu0 0
        %696 = vmatpush1.bf16.msra.mxu0 0
        %697 = vmatprep.subr.bf16.mxu0 0
        %698 = vmatpush1.bf16.msra.mxu0 0
        %699 = vmatprep.subr.bf16.mxu0 0
        %700 = vmatpush1.bf16.msra.mxu0 0
        %701 = vmatprep.subr.bf16.mxu0 0
        %702 = vmatpush1.bf16.msra.mxu0 0
        %703 = vmatprep.subr.bf16.mxu0 0
        %704 = vmatpush1.bf16.msra.mxu0 0
        %705 = vmatprep.subr.bf16.mxu0 0
        %706 = vmatpush1.bf16.msra.mxu0 0
        %707 = vmatprep.mubr.bf16.mxu0 0
        %708 = vmatmul.mubr.bf16.gmra.mrb[0].mxu0 %v628
        %v709 = vpop.f32.mrb[0].mxu0
        %v710 = vadd.f32 0.0, %v709
        %v711 = vpop.f32.mrb[0].mxu0
        %v712 = vadd.f32 0.0, %v711
        %v713 = vpop.f32.mrb[0].mxu0
        %v714 = vadd.f32 0.0, %v713
        %v715 = vpop.f32.mrb[0].mxu0
        %v716 = vadd.f32 0.0, %v715
        %717 = vmatprep.mubr.bf16.mxu0 0
        %718 = vmatmul.mubr.bf16.gmra.mrb[0].mxu0 %v631
        %v719 = vpop.f32.mrb[0].mxu0
        %v720 = vadd.f32 0.0, %v719
        %v721 = vpop.f32.mrb[0].mxu0
        %v722 = vadd.f32 0.0, %v721
        %v723 = vpop.f32.mrb[0].mxu0
        %v724 = vadd.f32 0.0, %v723
        %v725 = vpop.f32.mrb[0].mxu0
        %v726 = vadd.f32 0.0, %v725
        %727 = vmatprep.mubr.bf16.mxu0 0
        %728 = vmatmul.mubr.bf16.gmra.mrb[0].mxu0 %v634
        %v729 = vpop.f32.mrb[0].mxu0
        %v730 = vadd.f32 0.0, %v729
        %v731 = vpop.f32.mrb[0].mxu0
        %v732 = vadd.f32 0.0, %v731
        %v733 = vpop.f32.mrb[0].mxu0
        %v734 = vadd.f32 0.0, %v733
        %v735 = vpop.f32.mrb[0].mxu0
        %v736 = vadd.f32 0.0, %v735
        %737 = vmatprep.mubr.bf16.mxu0 0
        %738 = vmatmul.mubr.bf16.gmra.mrb[0].mxu0 %v637
        %v739 = vpop.f32.mrb[0].mxu0
        %v740 = vadd.f32 0.0, %v739
        %v741 = vpop.f32.mrb[0].mxu0
        %v742 = vadd.f32 0.0, %v741
        %v743 = vpop.f32.mrb[0].mxu0
        %v744 = vadd.f32 0.0, %v743
        %v745 = vpop.f32.mrb[0].mxu0
        %v746 = vadd.f32 0.0, %v745
        %747 = vmatprep.mubr.bf16.mxu0 0
        %748 = vmatmul.mubr.bf16.gmra.mrb[0].mxu0 %v640
        %v749 = vpop.f32.mrb[0].mxu0
        %v750 = vadd.f32 0.0, %v749
        %v751 = vpop.f32.mrb[0].mxu0
        %v752 = vadd.f32 0.0, %v751
        %v753 = vpop.f32.mrb[0].mxu0
        %v754 = vadd.f32 0.0, %v753
        %v755 = vpop.f32.mrb[0].mxu0
        %v756 = vadd.f32 0.0, %v755
        %757 = vmatprep.mubr.bf16.mxu0 0
        %758 = vmatmul.mubr.bf16.gmra.mrb[0].mxu0 %v643
        %v759 = vpop.f32.mrb[0].mxu0
        %v760 = vadd.f32 0.0, %v759
        %v761 = vpop.f32.mrb[0].mxu0
        %v762 = vadd.f32 0.0, %v761
        %v763 = vpop.f32.mrb[0].mxu0
        %v764 = vadd.f32 0.0, %v763
        %v765 = vpop.f32.mrb[0].mxu0
        %v766 = vadd.f32 0.0, %v765
        %767 = vmatprep.mubr.bf16.mxu0 0
        %768 = vmatmul.mubr.bf16.gmra.mrb[0].mxu0 %v646
        %v769 = vpop.f32.mrb[0].mxu0
        %v770 = vadd.f32 0.0, %v769
        %v771 = vpop.f32.mrb[0].mxu0
        %v772 = vadd.f32 0.0, %v771
        %v773 = vpop.f32.mrb[0].mxu0
        %v774 = vadd.f32 0.0, %v773
        %v775 = vpop.f32.mrb[0].mxu0
        %v776 = vadd.f32 0.0, %v775
        %777 = vmatprep.mubr.bf16.mxu0 0
        %778 = vmatmul.mubr.bf16.gmra.mrb[0].mxu0 %v649
        %v779 = vpop.f32.mrb[0].mxu0
        %v780 = vadd.f32 0.0, %v779
        %v781 = vpop.f32.mrb[0].mxu0
        %v782 = vadd.f32 0.0, %v781
        %v783 = vpop.f32.mrb[0].mxu0
        %v784 = vadd.f32 0.0, %v783
        %v785 = vpop.f32.mrb[0].mxu0
        %v786 = vadd.f32 0.0, %v785
        %787 = vmatprep.mubr.bf16.mxu0 0
        %788 = vmatmul.mubr.bf16.gmra.mrb[0].mxu0 %v652
        %v789 = vpop.f32.mrb[0].mxu0
        %v790 = vadd.f32 0.0, %v789
        %v791 = vpop.f32.mrb[0].mxu0
        %v792 = vadd.f32 0.0, %v791
        %v793 = vpop.f32.mrb[0].mxu0
        %v794 = vadd.f32 0.0, %v793
        %v795 = vpop.f32.mrb[0].mxu0
        %v796 = vadd.f32 0.0, %v795
        %797 = vmatprep.mubr.bf16.mxu0 0
        %798 = vmatmul.mubr.bf16.gmra.mrb[0].mxu0 %v655
        %v799 = vpop.f32.mrb[0].mxu0
        %v800 = vadd.f32 0.0, %v799
        %v801 = vpop.f32.mrb[0].mxu0
        %v802 = vadd.f32 0.0, %v801
        %v803 = vpop.f32.mrb[0].mxu0
        %v804 = vadd.f32 0.0, %v803
        %v805 = vpop.f32.mrb[0].mxu0
        %v806 = vadd.f32 0.0, %v805
        %807 = vmatprep.mubr.bf16.mxu0 0
        %808 = vmatmul.mubr.bf16.gmra.mrb[0].mxu0 %v658
        %v809 = vpop.f32.mrb[0].mxu0
        %v810 = vadd.f32 0.0, %v809
        %v811 = vpop.f32.mrb[0].mxu0
        %v812 = vadd.f32 0.0, %v811
        %v813 = vpop.f32.mrb[0].mxu0
        %v814 = vadd.f32 0.0, %v813
        %v815 = vpop.f32.mrb[0].mxu0
        %v816 = vadd.f32 0.0, %v815
        %817 = vmatprep.mubr.bf16.mxu0 0
        %818 = vmatmul.mubr.bf16.gmra.mrb[0].mxu0 %v661
        %v819 = vpop.f32.mrb[0].mxu0
        %v820 = vadd.f32 0.0, %v819
        %v821 = vpop.f32.mrb[0].mxu0
        %v822 = vadd.f32 0.0, %v821
        %v823 = vpop.f32.mrb[0].mxu0
        %v824 = vadd.f32 0.0, %v823
        %v825 = vpop.f32.mrb[0].mxu0
        %v826 = vadd.f32 0.0, %v825
        %827 = vmatprep.mubr.bf16.mxu0 0
        %828 = vmatmul.mubr.bf16.gmra.mrb[0].mxu0 %v664
        %v829 = vpop.f32.mrb[0].mxu0
        %v830 = vadd.f32 0.0, %v829
        %v831 = vpop.f32.mrb[0].mxu0
        %v832 = vadd.f32 0.0, %v831
        %v833 = vpop.f32.mrb[0].mxu0
        %v834 = vadd.f32 0.0, %v833
        %v835 = vpop.f32.mrb[0].mxu0
        %v836 = vadd.f32 0.0, %v835
        %837 = vmatprep.mubr.bf16.mxu0 0
        %838 = vmatmul.mubr.bf16.gmra.mrb[0].mxu0 %v667
        %v839 = vpop.f32.mrb[0].mxu0
        %v840 = vadd.f32 0.0, %v839
        %v841 = vpop.f32.mrb[0].mxu0
        %v842 = vadd.f32 0.0, %v841
        %v843 = vpop.f32.mrb[0].mxu0
        %v844 = vadd.f32 0.0, %v843
        %v845 = vpop.f32.mrb[0].mxu0
        %v846 = vadd.f32 0.0, %v845
        %847 = vmatprep.mubr.bf16.mxu0 0
        %848 = vmatmul.mubr.bf16.gmra.mrb[0].mxu0 %v670
        %v849 = vpop.f32.mrb[0].mxu0
        %v850 = vadd.f32 0.0, %v849
        %v851 = vpop.f32.mrb[0].mxu0
        %v852 = vadd.f32 0.0, %v851
        %v853 = vpop.f32.mrb[0].mxu0
        %v854 = vadd.f32 0.0, %v853
        %v855 = vpop.f32.mrb[0].mxu0
        %v856 = vadd.f32 0.0, %v855
        %857 = vmatprep.mubr.bf16.mxu0 0
        %858 = vmatmul.mubr.bf16.gmra.mrb[0].mxu0 %v673
        %v859 = vpop.f32.mrb[0].mxu0
        %v860 = vadd.f32 0.0, %v859
        %v861 = vpop.f32.mrb[0].mxu0
        %v862 = vadd.f32 0.0, %v861
        %v863 = vpop.f32.mrb[0].mxu0
        %v864 = vadd.f32 0.0, %v863
        %v865 = vpop.f32.mrb[0].mxu0
        %v866 = vadd.f32 0.0, %v865
        %867 = vdwg.mxu0
        %v868 = vadd.f32 %v402, %v710
        %v869 = vadd.f32 %v403, %v712
        %v870 = vadd.f32 %v404, %v714
        %v871 = vadd.f32 %v405, %v716
        %v872 = vadd.f32 %v406, %v720
        %v873 = vadd.f32 %v407, %v722
        %v874 = vadd.f32 %v408, %v724
        %v875 = vadd.f32 %v409, %v726
        %v876 = vadd.f32 %v410, %v730
        %v877 = vadd.f32 %v411, %v732
        %v878 = vadd.f32 %v412, %v734
        %v879 = vadd.f32 %v413, %v736
        %v880 = vadd.f32 %v414, %v740
        %v881 = vadd.f32 %v415, %v742
        %v882 = vadd.f32 %v416, %v744
        %v883 = vadd.f32 %v417, %v746
        %v884 = vadd.f32 %v418, %v750
        %v885 = vadd.f32 %v419, %v752
        %v886 = vadd.f32 %v420, %v754
        %v887 = vadd.f32 %v421, %v756
        %v888 = vadd.f32 %v422, %v760
        %v889 = vadd.f32 %v423, %v762
        %v890 = vadd.f32 %v424, %v764
        %v891 = vadd.f32 %v425, %v766
        %v892 = vadd.f32 %v426, %v770
        %v893 = vadd.f32 %v427, %v772
        %v894 = vadd.f32 %v428, %v774
        %v895 = vadd.f32 %v429, %v776
        %v896 = vadd.f32 %v430, %v780
        %v897 = vadd.f32 %v431, %v782
        %v898 = vadd.f32 %v432, %v784
        %v899 = vadd.f32 %v433, %v786
        %v900 = vadd.f32 %v434, %v790
        %v901 = vadd.f32 %v435, %v792
        %v902 = vadd.f32 %v436, %v794
        %v903 = vadd.f32 %v437, %v796
        %v904 = vadd.f32 %v438, %v800
        %v905 = vadd.f32 %v439, %v802
        %v906 = vadd.f32 %v440, %v804
        %v907 = vadd.f32 %v441, %v806
        %v908 = vadd.f32 %v442, %v810
        %v909 = vadd.f32 %v443, %v812
        %v910 = vadd.f32 %v444, %v814
        %v911 = vadd.f32 %v445, %v816
        %v912 = vadd.f32 %v446, %v820
        %v913 = vadd.f32 %v447, %v822
        %v914 = vadd.f32 %v448, %v824
        %v915 = vadd.f32 %v449, %v826
        %v916 = vadd.f32 %v450, %v830
        %v917 = vadd.f32 %v451, %v832
        %v918 = vadd.f32 %v452, %v834
        %v919 = vadd.f32 %v453, %v836
        %v920 = vadd.f32 %v454, %v840
        %v921 = vadd.f32 %v455, %v842
        %v922 = vadd.f32 %v456, %v844
        %v923 = vadd.f32 %v457, %v846
        %v924 = vadd.f32 %v458, %v850
        %v925 = vadd.f32 %v459, %v852
        %v926 = vadd.f32 %v460, %v854
        %v927 = vadd.f32 %v461, %v856
        %v928 = vadd.f32 %v462, %v860
        %v929 = vadd.f32 %v463, %v862
        %v930 = vadd.f32 %v464, %v864
        %v931 = vadd.f32 %v465, %v866
        %932 = vst [vmem:[#allocation2] sm:$0xff] %v868
        %933 = vst [vmem:[#allocation2 + $0x8] sm:$0xff] %v869
        %934 = vst [vmem:[#allocation2 + $0x10] sm:$0xff] %v870
        %935 = vst [vmem:[#allocation2 + $0x18] sm:$0xff] %v871
        %936 = vst [vmem:[#allocation2 + $0x20] sm:$0xff] %v872
        %937 = vst [vmem:[#allocation2 + $0x28] sm:$0xff] %v873
        %938 = vst [vmem:[#allocation2 + $0x30] sm:$0xff] %v874
        %939 = vst [vmem:[#allocation2 + $0x38] sm:$0xff] %v875
        %940 = vst [vmem:[#allocation2 + $0x40] sm:$0xff] %v876
        %941 = vst [vmem:[#allocation2 + $0x48] sm:$0xff] %v877
        %942 = vst [vmem:[#allocation2 + $0x50] sm:$0xff] %v878
        %943 = vst [vmem:[#allocation2 + $0x58] sm:$0xff] %v879
        %944 = vst [vmem:[#allocation2 + $0x60] sm:$0xff] %v880
        %945 = vst [vmem:[#allocation2 + $0x68] sm:$0xff] %v881
        %946 = vst [vmem:[#allocation2 + $0x70] sm:$0xff] %v882
        %947 = vst [vmem:[#allocation2 + $0x78] sm:$0xff] %v883
        %948 = vst [vmem:[#allocation2 + $0x80] sm:$0xff] %v884
        %949 = vst [vmem:[#allocation2 + $0x88] sm:$0xff] %v885
        %950 = vst [vmem:[#allocation2 + $0x90] sm:$0xff] %v886
        %951 = vst [vmem:[#allocation2 + $0x98] sm:$0xff] %v887
        %952 = vst [vmem:[#allocation2 + $0xa0] sm:$0xff] %v888
        %953 = vst [vmem:[#allocation2 + $0xa8] sm:$0xff] %v889
        %954 = vst [vmem:[#allocation2 + $0xb0] sm:$0xff] %v890
        %955 = vst [vmem:[#allocation2 + $0xb8] sm:$0xff] %v891
        %956 = vst [vmem:[#allocation2 + $0xc0] sm:$0xff] %v892
        %957 = vst [vmem:[#allocation2 + $0xc8] sm:$0xff] %v893
        %958 = vst [vmem:[#allocation2 + $0xd0] sm:$0xff] %v894
        %959 = vst [vmem:[#allocation2 + $0xd8] sm:$0xff] %v895
        %960 = vst [vmem:[#allocation2 + $0xe0] sm:$0xff] %v896
        %961 = vst [vmem:[#allocation2 + $0xe8] sm:$0xff] %v897
        %962 = vst [vmem:[#allocation2 + $0xf0] sm:$0xff] %v898
        %963 = vst [vmem:[#allocation2 + $0xf8] sm:$0xff] %v899
        %964 = vst [vmem:[#allocation2 + $0x100] sm:$0xff] %v900
        %965 = vst [vmem:[#allocation2 + $0x108] sm:$0xff] %v901
        %966 = vst [vmem:[#allocation2 + $0x110] sm:$0xff] %v902
        %967 = vst [vmem:[#allocation2 + $0x118] sm:$0xff] %v903
        %968 = vst [vmem:[#allocation2 + $0x120] sm:$0xff] %v904
        %969 = vst [vmem:[#allocation2 + $0x128] sm:$0xff] %v905
        %970 = vst [vmem:[#allocation2 + $0x130] sm:$0xff] %v906
        %971 = vst [vmem:[#allocation2 + $0x138] sm:$0xff] %v907
        %972 = vst [vmem:[#allocation2 + $0x140] sm:$0xff] %v908
        %973 = vst [vmem:[#allocation2 + $0x148] sm:$0xff] %v909
        %974 = vst [vmem:[#allocation2 + $0x150] sm:$0xff] %v910
        %975 = vst [vmem:[#allocation2 + $0x158] sm:$0xff] %v911
        %976 = vst [vmem:[#allocation2 + $0x160] sm:$0xff] %v912
        %977 = vst [vmem:[#allocation2 + $0x168] sm:$0xff] %v913
        %978 = vst [vmem:[#allocation2 + $0x170] sm:$0xff] %v914
        %979 = vst [vmem:[#allocation2 + $0x178] sm:$0xff] %v915
        %980 = vst [vmem:[#allocation2 + $0x180] sm:$0xff] %v916
        %981 = vst [vmem:[#allocation2 + $0x188] sm:$0xff] %v917
        %982 = vst [vmem:[#allocation2 + $0x190] sm:$0xff] %v918
        %983 = vst [vmem:[#allocation2 + $0x198] sm:$0xff] %v919
        %984 = vst [vmem:[#allocation2 + $0x1a0] sm:$0xff] %v920
        %985 = vst [vmem:[#allocation2 + $0x1a8] sm:$0xff] %v921
        %986 = vst [vmem:[#allocation2 + $0x1b0] sm:$0xff] %v922
        %987 = vst [vmem:[#allocation2 + $0x1b8] sm:$0xff] %v923
        %988 = vst [vmem:[#allocation2 + $0x1c0] sm:$0xff] %v924
        %989 = vst [vmem:[#allocation2 + $0x1c8] sm:$0xff] %v925
        %990 = vst [vmem:[#allocation2 + $0x1d0] sm:$0xff] %v926
        %991 = vst [vmem:[#allocation2 + $0x1d8] sm:$0xff] %v927
        %992 = vst [vmem:[#allocation2 + $0x1e0] sm:$0xff] %v928
        %993 = vst [vmem:[#allocation2 + $0x1e8] sm:$0xff] %v929
        %994 = vst [vmem:[#allocation2 + $0x1f0] sm:$0xff] %v930
        %995 = vst [vmem:[#allocation2 + $0x1f8] sm:$0xff] %v931
        // Predicated region
        $region41: #{bottleneck_forward.5} parent=35 // pred_check
          %p996 = pneg %p334
        $region42: #{bottleneck_forward.5} parent=35 // pred_check_branch
          %998 = sbr.rel (%p996) target = $region44
        $region43: #{bottleneck_forward.5} parent=35 // pred_region
          %v999 = vld [vmem:[#allocation2] sm:$0xff]
          %v1000 = vld [vmem:[#allocation2 + $0x8] sm:$0xff]
          %v1001 = vld [vmem:[#allocation2 + $0x10] sm:$0xff]
          %v1002 = vld [vmem:[#allocation2 + $0x18] sm:$0xff]
          %v1003 = vld [vmem:[#allocation2 + $0x20] sm:$0xff]
          %v1004 = vld [vmem:[#allocation2 + $0x28] sm:$0xff]
          %v1005 = vld [vmem:[#allocation2 + $0x30] sm:$0xff]
          %v1006 = vld [vmem:[#allocation2 + $0x38] sm:$0xff]
          %v1007 = vld [vmem:[#allocation2 + $0x40] sm:$0xff]
          %v1008 = vld [vmem:[#allocation2 + $0x48] sm:$0xff]
          %v1009 = vld [vmem:[#allocation2 + $0x50] sm:$0xff]
          %v1010 = vld [vmem:[#allocation2 + $0x58] sm:$0xff]
          %v1011 = vld [vmem:[#allocation2 + $0x60] sm:$0xff]
          %v1012 = vld [vmem:[#allocation2 + $0x68] sm:$0xff]
          %v1013 = vld [vmem:[#allocation2 + $0x70] sm:$0xff]
          %v1014 = vld [vmem:[#allocation2 + $0x78] sm:$0xff]
          %v1015 = vld [vmem:[#allocation2 + $0x80] sm:$0xff]
          %v1016 = vld [vmem:[#allocation2 + $0x88] sm:$0xff]
          %v1017 = vld [vmem:[#allocation2 + $0x90] sm:$0xff]
          %v1018 = vld [vmem:[#allocation2 + $0x98] sm:$0xff]
          %v1019 = vld [vmem:[#allocation2 + $0xa0] sm:$0xff]
          %v1020 = vld [vmem:[#allocation2 + $0xa8] sm:$0xff]
          %v1021 = vld [vmem:[#allocation2 + $0xb0] sm:$0xff]
          %v1022 = vld [vmem:[#allocation2 + $0xb8] sm:$0xff]
          %v1023 = vld [vmem:[#allocation2 + $0xc0] sm:$0xff]
          %v1024 = vld [vmem:[#allocation2 + $0xc8] sm:$0xff]
          %v1025 = vld [vmem:[#allocation2 + $0xd0] sm:$0xff]
          %v1026 = vld [vmem:[#allocation2 + $0xd8] sm:$0xff]
          %v1027 = vld [vmem:[#allocation2 + $0xe0] sm:$0xff]
          %v1028 = vld [vmem:[#allocation2 + $0xe8] sm:$0xff]
          %v1029 = vld [vmem:[#allocation2 + $0xf0] sm:$0xff]
          %v1030 = vld [vmem:[#allocation2 + $0xf8] sm:$0xff]
          %v1031 = vld [vmem:[#allocation2 + $0x100] sm:$0xff]
          %v1032 = vld [vmem:[#allocation2 + $0x108] sm:$0xff]
          %v1033 = vld [vmem:[#allocation2 + $0x110] sm:$0xff]
          %v1034 = vld [vmem:[#allocation2 + $0x118] sm:$0xff]
          %v1035 = vld [vmem:[#allocation2 + $0x120] sm:$0xff]
          %v1036 = vld [vmem:[#allocation2 + $0x128] sm:$0xff]
          %v1037 = vld [vmem:[#allocation2 + $0x130] sm:$0xff]
          %v1038 = vld [vmem:[#allocation2 + $0x138] sm:$0xff]
          %v1039 = vld [vmem:[#allocation2 + $0x140] sm:$0xff]
          %v1040 = vld [vmem:[#allocation2 + $0x148] sm:$0xff]
          %v1041 = vld [vmem:[#allocation2 + $0x150] sm:$0xff]
          %v1042 = vld [vmem:[#allocation2 + $0x158] sm:$0xff]
          %v1043 = vld [vmem:[#allocation2 + $0x160] sm:$0xff]
          %v1044 = vld [vmem:[#allocation2 + $0x168] sm:$0xff]
          %v1045 = vld [vmem:[#allocation2 + $0x170] sm:$0xff]
          %v1046 = vld [vmem:[#allocation2 + $0x178] sm:$0xff]
          %v1047 = vld [vmem:[#allocation2 + $0x180] sm:$0xff]
          %v1048 = vld [vmem:[#allocation2 + $0x188] sm:$0xff]
          %v1049 = vld [vmem:[#allocation2 + $0x190] sm:$0xff]
          %v1050 = vld [vmem:[#allocation2 + $0x198] sm:$0xff]
          %v1051 = vld [vmem:[#allocation2 + $0x1a0] sm:$0xff]
          %v1052 = vld [vmem:[#allocation2 + $0x1a8] sm:$0xff]
          %v1053 = vld [vmem:[#allocation2 + $0x1b0] sm:$0xff]
          %v1054 = vld [vmem:[#allocation2 + $0x1b8] sm:$0xff]
          %v1055 = vld [vmem:[#allocation2 + $0x1c0] sm:$0xff]
          %v1056 = vld [vmem:[#allocation2 + $0x1c8] sm:$0xff]
          %v1057 = vld [vmem:[#allocation2 + $0x1d0] sm:$0xff]
          %v1058 = vld [vmem:[#allocation2 + $0x1d8] sm:$0xff]
          %v1059 = vld [vmem:[#allocation2 + $0x1e0] sm:$0xff]
          %v1060 = vld [vmem:[#allocation2 + $0x1e8] sm:$0xff]
          %v1061 = vld [vmem:[#allocation2 + $0x1f0] sm:$0xff]
          %v1062 = vld [vmem:[#allocation2 + $0x1f8] sm:$0xff]
          %v1063 = vld [vmem:[%s317] sm:$0x3]
          %v1065 = vlaneseq
          %v1066 = vshrl.u32 %v1065, 7
          %v1067 = vsub.s32 0, %v1066
          %v1068 = vrot.slane %v1063, %v1067
          %v1069 = vlaneseq
          %v1070 = vshrl.u32 %v1069, 7
          %v1071 = vsub.s32 1, %v1070
          %v1072 = vrot.slane %v1063, %v1071
          %v1075 = vadd.f32 %v999, %v1068
          %v1076 = vadd.f32 %v1000, %v1072
          %v1077 = vadd.f32 %v1001, %v1068
          %v1078 = vadd.f32 %v1002, %v1072
          %v1079 = vadd.f32 %v1003, %v1068
          %v1080 = vadd.f32 %v1004, %v1072
          %v1081 = vadd.f32 %v1005, %v1068
          %v1082 = vadd.f32 %v1006, %v1072
          %v1083 = vadd.f32 %v1007, %v1068
          %v1084 = vadd.f32 %v1008, %v1072
          %v1085 = vadd.f32 %v1009, %v1068
          %v1086 = vadd.f32 %v1010, %v1072
          %v1087 = vadd.f32 %v1011, %v1068
          %v1088 = vadd.f32 %v1012, %v1072
          %v1089 = vadd.f32 %v1013, %v1068
          %v1090 = vadd.f32 %v1014, %v1072
          %v1091 = vadd.f32 %v1015, %v1068
          %v1092 = vadd.f32 %v1016, %v1072
          %v1093 = vadd.f32 %v1017, %v1068
          %v1094 = vadd.f32 %v1018, %v1072
          %v1095 = vadd.f32 %v1019, %v1068
          %v1096 = vadd.f32 %v1020, %v1072
          %v1097 = vadd.f32 %v1021, %v1068
          %v1098 = vadd.f32 %v1022, %v1072
          %v1099 = vadd.f32 %v1023, %v1068
          %v1100 = vadd.f32 %v1024, %v1072
          %v1101 = vadd.f32 %v1025, %v1068
          %v1102 = vadd.f32 %v1026, %v1072
          %v1103 = vadd.f32 %v1027, %v1068
          %v1104 = vadd.f32 %v1028, %v1072
          %v1105 = vadd.f32 %v1029, %v1068
          %v1106 = vadd.f32 %v1030, %v1072
          %v1107 = vadd.f32 %v1031, %v1068
          %v1108 = vadd.f32 %v1032, %v1072
          %v1109 = vadd.f32 %v1033, %v1068
          %v1110 = vadd.f32 %v1034, %v1072
          %v1111 = vadd.f32 %v1035, %v1068
          %v1112 = vadd.f32 %v1036, %v1072
          %v1113 = vadd.f32 %v1037, %v1068
          %v1114 = vadd.f32 %v1038, %v1072
          %v1115 = vadd.f32 %v1039, %v1068
          %v1116 = vadd.f32 %v1040, %v1072
          %v1117 = vadd.f32 %v1041, %v1068
          %v1118 = vadd.f32 %v1042, %v1072
          %v1119 = vadd.f32 %v1043, %v1068
          %v1120 = vadd.f32 %v1044, %v1072
          %v1121 = vadd.f32 %v1045, %v1068
          %v1122 = vadd.f32 %v1046, %v1072
          %v1123 = vadd.f32 %v1047, %v1068
          %v1124 = vadd.f32 %v1048, %v1072
          %v1125 = vadd.f32 %v1049, %v1068
          %v1126 = vadd.f32 %v1050, %v1072
          %v1127 = vadd.f32 %v1051, %v1068
          %v1128 = vadd.f32 %v1052, %v1072
          %v1129 = vadd.f32 %v1053, %v1068
          %v1130 = vadd.f32 %v1054, %v1072
          %v1131 = vadd.f32 %v1055, %v1068
          %v1132 = vadd.f32 %v1056, %v1072
          %v1133 = vadd.f32 %v1057, %v1068
          %v1134 = vadd.f32 %v1058, %v1072
          %v1135 = vadd.f32 %v1059, %v1068
          %v1136 = vadd.f32 %v1060, %v1072
          %v1137 = vadd.f32 %v1061, %v1068
          %v1138 = vadd.f32 %v1062, %v1072
          %v1139 = vld [vmem:[%s328] sm:$0xff]
          %v1140 = vld [vmem:[%s328 + $0x8] sm:$0xff]
          %v1141 = vld [vmem:[%s328 + $0x10] sm:$0xff]
          %v1142 = vld [vmem:[%s328 + $0x18] sm:$0xff]
          %v1143 = vld [vmem:[%s328 + $0x20] sm:$0xff]
          %v1144 = vld [vmem:[%s328 + $0x28] sm:$0xff]
          %v1145 = vld [vmem:[%s328 + $0x30] sm:$0xff]
          %v1146 = vld [vmem:[%s328 + $0x38] sm:$0xff]
          %v1147 = vld [vmem:[%s328 + $0x40] sm:$0xff]
          %v1148 = vld [vmem:[%s328 + $0x48] sm:$0xff]
          %v1149 = vld [vmem:[%s328 + $0x50] sm:$0xff]
          %v1150 = vld [vmem:[%s328 + $0x58] sm:$0xff]
          %v1151 = vld [vmem:[%s328 + $0x60] sm:$0xff]
          %v1152 = vld [vmem:[%s328 + $0x68] sm:$0xff]
          %v1153 = vld [vmem:[%s328 + $0x70] sm:$0xff]
          %v1154 = vld [vmem:[%s328 + $0x78] sm:$0xff]
          %v1155 = vld [vmem:[%s328 + $0x80] sm:$0xff]
          %v1156 = vld [vmem:[%s328 + $0x88] sm:$0xff]
          %v1157 = vld [vmem:[%s328 + $0x90] sm:$0xff]
          %v1158 = vld [vmem:[%s328 + $0x98] sm:$0xff]
          %v1159 = vld [vmem:[%s328 + $0xa0] sm:$0xff]
          %v1160 = vld [vmem:[%s328 + $0xa8] sm:$0xff]
          %v1161 = vld [vmem:[%s328 + $0xb0] sm:$0xff]
          %v1162 = vld [vmem:[%s328 + $0xb8] sm:$0xff]
          %v1163 = vld [vmem:[%s328 + $0xc0] sm:$0xff]
          %v1164 = vld [vmem:[%s328 + $0xc8] sm:$0xff]
          %v1165 = vld [vmem:[%s328 + $0xd0] sm:$0xff]
          %v1166 = vld [vmem:[%s328 + $0xd8] sm:$0xff]
          %v1167 = vld [vmem:[%s328 + $0xe0] sm:$0xff]
          %v1168 = vld [vmem:[%s328 + $0xe8] sm:$0xff]
          %v1169 = vld [vmem:[%s328 + $0xf0] sm:$0xff]
          %v1170 = vld [vmem:[%s328 + $0xf8] sm:$0xff]
          %v1171 = vld [vmem:[%s328 + $0x100] sm:$0xff]
          %v1172 = vld [vmem:[%s328 + $0x108] sm:$0xff]
          %v1173 = vld [vmem:[%s328 + $0x110] sm:$0xff]
          %v1174 = vld [vmem:[%s328 + $0x118] sm:$0xff]
          %v1175 = vld [vmem:[%s328 + $0x120] sm:$0xff]
          %v1176 = vld [vmem:[%s328 + $0x128] sm:$0xff]
          %v1177 = vld [vmem:[%s328 + $0x130] sm:$0xff]
          %v1178 = vld [vmem:[%s328 + $0x138] sm:$0xff]
          %v1179 = vld [vmem:[%s328 + $0x140] sm:$0xff]
          %v1180 = vld [vmem:[%s328 + $0x148] sm:$0xff]
          %v1181 = vld [vmem:[%s328 + $0x150] sm:$0xff]
          %v1182 = vld [vmem:[%s328 + $0x158] sm:$0xff]
          %v1183 = vld [vmem:[%s328 + $0x160] sm:$0xff]
          %v1184 = vld [vmem:[%s328 + $0x168] sm:$0xff]
          %v1185 = vld [vmem:[%s328 + $0x170] sm:$0xff]
          %v1186 = vld [vmem:[%s328 + $0x178] sm:$0xff]
          %v1187 = vld [vmem:[%s328 + $0x180] sm:$0xff]
          %v1188 = vld [vmem:[%s328 + $0x188] sm:$0xff]
          %v1189 = vld [vmem:[%s328 + $0x190] sm:$0xff]
          %v1190 = vld [vmem:[%s328 + $0x198] sm:$0xff]
          %v1191 = vld [vmem:[%s328 + $0x1a0] sm:$0xff]
          %v1192 = vld [vmem:[%s328 + $0x1a8] sm:$0xff]
          %v1193 = vld [vmem:[%s328 + $0x1b0] sm:$0xff]
          %v1194 = vld [vmem:[%s328 + $0x1b8] sm:$0xff]
          %v1195 = vld [vmem:[%s328 + $0x1c0] sm:$0xff]
          %v1196 = vld [vmem:[%s328 + $0x1c8] sm:$0xff]
          %v1197 = vld [vmem:[%s328 + $0x1d0] sm:$0xff]
          %v1198 = vld [vmem:[%s328 + $0x1d8] sm:$0xff]
          %v1199 = vld [vmem:[%s328 + $0x1e0] sm:$0xff]
          %v1200 = vld [vmem:[%s328 + $0x1e8] sm:$0xff]
          %v1201 = vld [vmem:[%s328 + $0x1f0] sm:$0xff]
          %v1202 = vld [vmem:[%s328 + $0x1f8] sm:$0xff]
          %v1203 = vadd.f32 %v1075, %v1139
          %v1204 = vadd.f32 %v1076, %v1140
          %v1205 = vadd.f32 %v1077, %v1141
          %v1206 = vadd.f32 %v1078, %v1142
          %v1207 = vadd.f32 %v1079, %v1143
          %v1208 = vadd.f32 %v1080, %v1144
          %v1209 = vadd.f32 %v1081, %v1145
          %v1210 = vadd.f32 %v1082, %v1146
          %v1211 = vadd.f32 %v1083, %v1147
          %v1212 = vadd.f32 %v1084, %v1148
          %v1213 = vadd.f32 %v1085, %v1149
          %v1214 = vadd.f32 %v1086, %v1150
          %v1215 = vadd.f32 %v1087, %v1151
          %v1216 = vadd.f32 %v1088, %v1152
          %v1217 = vadd.f32 %v1089, %v1153
          %v1218 = vadd.f32 %v1090, %v1154
          %v1219 = vadd.f32 %v1091, %v1155
          %v1220 = vadd.f32 %v1092, %v1156
          %v1221 = vadd.f32 %v1093, %v1157
          %v1222 = vadd.f32 %v1094, %v1158
          %v1223 = vadd.f32 %v1095, %v1159
          %v1224 = vadd.f32 %v1096, %v1160
          %v1225 = vadd.f32 %v1097, %v1161
          %v1226 = vadd.f32 %v1098, %v1162
          %v1227 = vadd.f32 %v1099, %v1163
          %v1228 = vadd.f32 %v1100, %v1164
          %v1229 = vadd.f32 %v1101, %v1165
          %v1230 = vadd.f32 %v1102, %v1166
          %v1231 = vadd.f32 %v1103, %v1167
          %v1232 = vadd.f32 %v1104, %v1168
          %v1233 = vadd.f32 %v1105, %v1169
          %v1234 = vadd.f32 %v1106, %v1170
          %v1235 = vadd.f32 %v1107, %v1171
          %v1236 = vadd.f32 %v1108, %v1172
          %v1237 = vadd.f32 %v1109, %v1173
          %v1238 = vadd.f32 %v1110, %v1174
          %v1239 = vadd.f32 %v1111, %v1175
          %v1240 = vadd.f32 %v1112, %v1176
          %v1241 = vadd.f32 %v1113, %v1177
          %v1242 = vadd.f32 %v1114, %v1178
          %v1243 = vadd.f32 %v1115, %v1179
          %v1244 = vadd.f32 %v1116, %v1180
          %v1245 = vadd.f32 %v1117, %v1181
          %v1246 = vadd.f32 %v1118, %v1182
          %v1247 = vadd.f32 %v1119, %v1183
          %v1248 = vadd.f32 %v1120, %v1184
          %v1249 = vadd.f32 %v1121, %v1185
          %v1250 = vadd.f32 %v1122, %v1186
          %v1251 = vadd.f32 %v1123, %v1187
          %v1252 = vadd.f32 %v1124, %v1188
          %v1253 = vadd.f32 %v1125, %v1189
          %v1254 = vadd.f32 %v1126, %v1190
          %v1255 = vadd.f32 %v1127, %v1191
          %v1256 = vadd.f32 %v1128, %v1192
          %v1257 = vadd.f32 %v1129, %v1193
          %v1258 = vadd.f32 %v1130, %v1194
          %v1259 = vadd.f32 %v1131, %v1195
          %v1260 = vadd.f32 %v1132, %v1196
          %v1261 = vadd.f32 %v1133, %v1197
          %v1262 = vadd.f32 %v1134, %v1198
          %v1263 = vadd.f32 %v1135, %v1199
          %v1264 = vadd.f32 %v1136, %v1200
          %v1265 = vadd.f32 %v1137, %v1201
          %v1266 = vadd.f32 %v1138, %v1202
          %v1267 = vmax.f32 %v1203, 0.0
          %v1268 = vmax.f32 %v1204, 0.0
          %v1269 = vmax.f32 %v1205, 0.0
          %v1270 = vmax.f32 %v1206, 0.0
          %v1271 = vmax.f32 %v1207, 0.0
          %v1272 = vmax.f32 %v1208, 0.0
          %v1273 = vmax.f32 %v1209, 0.0
          %v1274 = vmax.f32 %v1210, 0.0
          %v1275 = vmax.f32 %v1211, 0.0
          %v1276 = vmax.f32 %v1212, 0.0
          %v1277 = vmax.f32 %v1213, 0.0
          %v1278 = vmax.f32 %v1214, 0.0
          %v1279 = vmax.f32 %v1215, 0.0
          %v1280 = vmax.f32 %v1216, 0.0
          %v1281 = vmax.f32 %v1217, 0.0
          %v1282 = vmax.f32 %v1218, 0.0
          %v1283 = vmax.f32 %v1219, 0.0
          %v1284 = vmax.f32 %v1220, 0.0
          %v1285 = vmax.f32 %v1221, 0.0
          %v1286 = vmax.f32 %v1222, 0.0
          %v1287 = vmax.f32 %v1223, 0.0
          %v1288 = vmax.f32 %v1224, 0.0
          %v1289 = vmax.f32 %v1225, 0.0
          %v1290 = vmax.f32 %v1226, 0.0
          %v1291 = vmax.f32 %v1227, 0.0
          %v1292 = vmax.f32 %v1228, 0.0
          %v1293 = vmax.f32 %v1229, 0.0
          %v1294 = vmax.f32 %v1230, 0.0
          %v1295 = vmax.f32 %v1231, 0.0
          %v1296 = vmax.f32 %v1232, 0.0
          %v1297 = vmax.f32 %v1233, 0.0
          %v1298 = vmax.f32 %v1234, 0.0
          %v1299 = vmax.f32 %v1235, 0.0
          %v1300 = vmax.f32 %v1236, 0.0
          %v1301 = vmax.f32 %v1237, 0.0
          %v1302 = vmax.f32 %v1238, 0.0
          %v1303 = vmax.f32 %v1239, 0.0
          %v1304 = vmax.f32 %v1240, 0.0
          %v1305 = vmax.f32 %v1241, 0.0
          %v1306 = vmax.f32 %v1242, 0.0
          %v1307 = vmax.f32 %v1243, 0.0
          %v1308 = vmax.f32 %v1244, 0.0
          %v1309 = vmax.f32 %v1245, 0.0
          %v1310 = vmax.f32 %v1246, 0.0
          %v1311 = vmax.f32 %v1247, 0.0
          %v1312 = vmax.f32 %v1248, 0.0
          %v1313 = vmax.f32 %v1249, 0.0
          %v1314 = vmax.f32 %v1250, 0.0
          %v1315 = vmax.f32 %v1251, 0.0
          %v1316 = vmax.f32 %v1252, 0.0
          %v1317 = vmax.f32 %v1253, 0.0
          %v1318 = vmax.f32 %v1254, 0.0
          %v1319 = vmax.f32 %v1255, 0.0
          %v1320 = vmax.f32 %v1256, 0.0
          %v1321 = vmax.f32 %v1257, 0.0
          %v1322 = vmax.f32 %v1258, 0.0
          %v1323 = vmax.f32 %v1259, 0.0
          %v1324 = vmax.f32 %v1260, 0.0
          %v1325 = vmax.f32 %v1261, 0.0
          %v1326 = vmax.f32 %v1262, 0.0
          %v1327 = vmax.f32 %v1263, 0.0
          %v1328 = vmax.f32 %v1264, 0.0
          %v1329 = vmax.f32 %v1265, 0.0
          %v1330 = vmax.f32 %v1266, 0.0
          %1331 = vst [vmem:[%s292] sm:$0xff] %v1267
          %1332 = vst [vmem:[%s292 + $0x8] sm:$0xff] %v1268
          %1333 = vst [vmem:[%s292 + $0x10] sm:$0xff] %v1269
          %1334 = vst [vmem:[%s292 + $0x18] sm:$0xff] %v1270
          %1335 = vst [vmem:[%s292 + $0x20] sm:$0xff] %v1271
          %1336 = vst [vmem:[%s292 + $0x28] sm:$0xff] %v1272
          %1337 = vst [vmem:[%s292 + $0x30] sm:$0xff] %v1273
          %1338 = vst [vmem:[%s292 + $0x38] sm:$0xff] %v1274
          %1339 = vst [vmem:[%s292 + $0x40] sm:$0xff] %v1275
          %1340 = vst [vmem:[%s292 + $0x48] sm:$0xff] %v1276
          %1341 = vst [vmem:[%s292 + $0x50] sm:$0xff] %v1277
          %1342 = vst [vmem:[%s292 + $0x58] sm:$0xff] %v1278
          %1343 = vst [vmem:[%s292 + $0x60] sm:$0xff] %v1279
          %1344 = vst [vmem:[%s292 + $0x68] sm:$0xff] %v1280
          %1345 = vst [vmem:[%s292 + $0x70] sm:$0xff] %v1281
          %1346 = vst [vmem:[%s292 + $0x78] sm:$0xff] %v1282
          %1347 = vst [vmem:[%s292 + $0x80] sm:$0xff] %v1283
          %1348 = vst [vmem:[%s292 + $0x88] sm:$0xff] %v1284
          %1349 = vst [vmem:[%s292 + $0x90] sm:$0xff] %v1285
          %1350 = vst [vmem:[%s292 + $0x98] sm:$0xff] %v1286
          %1351 = vst [vmem:[%s292 + $0xa0] sm:$0xff] %v1287
          %1352 = vst [vmem:[%s292 + $0xa8] sm:$0xff] %v1288
          %1353 = vst [vmem:[%s292 + $0xb0] sm:$0xff] %v1289
          %1354 = vst [vmem:[%s292 + $0xb8] sm:$0xff] %v1290
          %1355 = vst [vmem:[%s292 + $0xc0] sm:$0xff] %v1291
          %1356 = vst [vmem:[%s292 + $0xc8] sm:$0xff] %v1292
          %1357 = vst [vmem:[%s292 + $0xd0] sm:$0xff] %v1293
          %1358 = vst [vmem:[%s292 + $0xd8] sm:$0xff] %v1294
          %1359 = vst [vmem:[%s292 + $0xe0] sm:$0xff] %v1295
          %1360 = vst [vmem:[%s292 + $0xe8] sm:$0xff] %v1296
          %1361 = vst [vmem:[%s292 + $0xf0] sm:$0xff] %v1297
          %1362 = vst [vmem:[%s292 + $0xf8] sm:$0xff] %v1298
          %1363 = vst [vmem:[%s292 + $0x100] sm:$0xff] %v1299
          %1364 = vst [vmem:[%s292 + $0x108] sm:$0xff] %v1300
          %1365 = vst [vmem:[%s292 + $0x110] sm:$0xff] %v1301
          %1366 = vst [vmem:[%s292 + $0x118] sm:$0xff] %v1302
          %1367 = vst [vmem:[%s292 + $0x120] sm:$0xff] %v1303
          %1368 = vst [vmem:[%s292 + $0x128] sm:$0xff] %v1304
          %1369 = vst [vmem:[%s292 + $0x130] sm:$0xff] %v1305
          %1370 = vst [vmem:[%s292 + $0x138] sm:$0xff] %v1306
          %1371 = vst [vmem:[%s292 + $0x140] sm:$0xff] %v1307
          %1372 = vst [vmem:[%s292 + $0x148] sm:$0xff] %v1308
          %1373 = vst [vmem:[%s292 + $0x150] sm:$0xff] %v1309
          %1374 = vst [vmem:[%s292 + $0x158] sm:$0xff] %v1310
          %1375 = vst [vmem:[%s292 + $0x160] sm:$0xff] %v1311
          %1376 = vst [vmem:[%s292 + $0x168] sm:$0xff] %v1312
          %1377 = vst [vmem:[%s292 + $0x170] sm:$0xff] %v1313
          %1378 = vst [vmem:[%s292 + $0x178] sm:$0xff] %v1314
          %1379 = vst [vmem:[%s292 + $0x180] sm:$0xff] %v1315
          %1380 = vst [vmem:[%s292 + $0x188] sm:$0xff] %v1316
          %1381 = vst [vmem:[%s292 + $0x190] sm:$0xff] %v1317
          %1382 = vst [vmem:[%s292 + $0x198] sm:$0xff] %v1318
          %1383 = vst [vmem:[%s292 + $0x1a0] sm:$0xff] %v1319
          %1384 = vst [vmem:[%s292 + $0x1a8] sm:$0xff] %v1320
          %1385 = vst [vmem:[%s292 + $0x1b0] sm:$0xff] %v1321
          %1386 = vst [vmem:[%s292 + $0x1b8] sm:$0xff] %v1322
          %1387 = vst [vmem:[%s292 + $0x1c0] sm:$0xff] %v1323
          %1388 = vst [vmem:[%s292 + $0x1c8] sm:$0xff] %v1324
          %1389 = vst [vmem:[%s292 + $0x1d0] sm:$0xff] %v1325
          %1390 = vst [vmem:[%s292 + $0x1d8] sm:$0xff] %v1326
          %1391 = vst [vmem:[%s292 + $0x1e0] sm:$0xff] %v1327
          %1392 = vst [vmem:[%s292 + $0x1e8] sm:$0xff] %v1328
          %1393 = vst [vmem:[%s292 + $0x1f0] sm:$0xff] %v1329
          %1394 = vst [vmem:[%s292 + $0x1f8] sm:$0xff] %v1330
        $region44: #{bottleneck_forward.5} parent=35 // pred_fallthru
          _
        %s1395 = sand.u32 %s157, 1
        %s1396 = scalar_lea.sflag [#allocation4], %s1395
        %s1397 = sand.u32 %s157, 1
        %s1398 = smul.addr %s1397, 512
        %s1399 = scalar_lea.vmem [#allocation3], %s1398
        // Predicated region
        $region45: #{bottleneck_forward.5} parent=35 // pred_check
          %p1400 = pneg %p167
        $region46: #{bottleneck_forward.5} parent=35 // pred_check_branch
          %1402 = sbr.rel (%p1400) target = $region48
        $region47: #{bottleneck_forward.5} parent=35 // pred_region
          %s1403 = smul.u32 32, %s23
          %s1404 = smul.u32 2, %s24
          %s1406 = ssub.s32 8192, 8192
          %1407 = vsyncadd %s1396, %s1406
          %s1408 = smul.addr %s1403, 2
          %s1409 = sadd.s32 %s1404, %s1408
          %s1410 = smul.addr %s1409, 128
          %s1411 = scalar_lea.hbm %s4, %s1410
          %s1412 = sshll.u32 %s1399, 4
          %s1413 = int_to_ptr.vmem [resolvable:$true] %s1412
          %1418 = dma.vmem_to_hbm [thread:$0]  %s1413, 8192, %s1411, %s1396, 256, 256, 16
        $region48: #{bottleneck_forward.5} parent=35 // pred_fallthru
          _
      $region36: #{bottleneck_forward.5} parent=5 // pred_fallthru
        _
      %p1419 = scmp.le.s32.totalorder 2, %s13
      // Predicated region
      $region49: #{bottleneck_forward.5} parent=5 // pred_check
        %p1420 = pneg %p1419
      $region50: #{bottleneck_forward.5} parent=5 // pred_check_branch
        %1422 = sbr.rel (%p1420) target = $region52
      $region51: #{bottleneck_forward.5} parent=5 // pred_region
        %s1423 = ssub.s32 %s13, 2
        // Predicated region
        $region53: #{bottleneck_forward.5} parent=51 // pred_check
          %p1424 = pneg %p173
        $region54: #{bottleneck_forward.5} parent=51 // pred_check_branch
          %1426 = sbr.rel (%p1424) target = $region56
        $region55: #{bottleneck_forward.5} parent=51 // pred_region
          %s1427 = sand.u32 %s158, 1
          %s1428 = scalar_lea.sflag [#allocation4], %s1427
          %s1429 = sand.u32 %s158, 1
          %s1430 = smul.addr %s1429, 512
          %s1431 = scalar_lea.vmem [#allocation3], %s1430
          %1432 = dma.done %s1428, 8192
        $region56: #{bottleneck_forward.5} parent=51 // pred_fallthru
          _
      $region52: #{bottleneck_forward.5} parent=5 // pred_fallthru
        _
    $region6: #{bottleneck_forward.5} parent=1 // loop_footer
      %s17 = sadd.s32 1, %s13
    $region7: #{bottleneck_forward.5} parent=1 // loop_footer_branch
      %12 = sbr.rel target = $region3
    $region8: #{bottleneck_forward.5} parent=1 // loop_exit
      _
    %1433 = vsyncpa [#allocation4], 1
    %s1434 = scalar_lea.sflag [#allocation4], 1
    %1435 = vsyncpa %s1434, 1

</llo_original>
